<compile_context>
chip_gen: v6e
topology: v6e:2x2x1
jax: 0.10.0
libtpu: 0.0.40
codegen_flags: <defaults>
</compile_context>

<pallas_src>
import jax
import jax.numpy as jnp
import numpy as np
from jax.experimental import pallas as pl
from jax.experimental.pallas import tpu as pltpu


# ---------------------------------------------------------------------------
# Wrapper-side weight/layout prep (pure glue, runs in XLA outside the kernel)
# ---------------------------------------------------------------------------
def _conv_unroll_matrix(w, hi, wi):
    """(Co,Ci,3,3) conv weight -> (Ci*hi*wi, Co*ho*wo) dense matrix.

    Row order = CHW flatten of the input, column order = CHW flatten of the
    output, so `x_flat @ M` is exactly the VALID 3x3 convolution.  Built by
    scatter (no matmul), so the weight values are placed exactly.
    """
    co, ci, kh, kw = w.shape
    ho, wo = hi - kh + 1, wi - kw + 1
    grids = np.meshgrid(np.arange(co), np.arange(ci), np.arange(kh),
                        np.arange(kw), np.arange(ho), np.arange(wo),
                        indexing="ij")
    o, c, d, k, h, v = [g.reshape(-1) for g in grids]
    rows = c * (hi * wi) + (h + d) * wi + (v + k)          # input feature idx
    cols = o * (ho * wo) + h * wo + v                      # output feature idx
    vals = w.astype(jnp.float32)[o, c, d, k]
    m = jnp.zeros((ci * hi * wi, co * ho * wo), jnp.float32)
    return m.at[rows, cols].set(vals)


def _pool_select_mats(c, h, w):
    """Four (c*h*w, c*(h//2)*(w//2)) 0/1 matrices; max over the four products
    of `a @ S_k` is a 2x2 stride-2 floor-mode max pool in CHW flatten order."""
    hp, wp = h // 2, w // 2
    mats = np.zeros((4, c * h * w, c * hp * wp), np.float32)
    t = 0
    for dh in range(2):
        for dw in range(2):
            for ci in range(c):
                for p in range(hp):
                    for q in range(wp):
                        src = ci * h * w + (2 * p + dh) * w + (2 * q + dw)
                        dst = ci * hp * wp + p * wp + q
                        mats[t, src, dst] = 1.0
            t += 1
    return jnp.asarray(mats)


def _round_up(n, m):
    return ((n + m - 1) // m) * m


def _const_index_map(ndim):
    def im(i):
        return (0,) * ndim
    return im


def _full_spec(a):
    return pl.BlockSpec(a.shape, _const_index_map(a.ndim))


# ---------------------------------------------------------------------------
# Kernel: one fused forward pass over a batch tile
# ---------------------------------------------------------------------------
def net_kernel(x_ref, m1_ref, b1_ref, s1_ref, m2_ref, b2_ref, s2_ref,
               w3_ref, b3_ref, w4_ref, b4_ref, out_ref):
    def pool(a, sel_ref):
        p = jnp.dot(a, sel_ref[0], preferred_element_type=jnp.float32)
        for t in range(1, 4):
            p = jnp.maximum(
                p, jnp.dot(a, sel_ref[t], preferred_element_type=jnp.float32))
        return p

    x = x_ref[...]                                                   # (Bt, 256)

    # conv1 + bias + relu : one MXU matmul against the unrolled conv matrix
    a1 = jnp.maximum(
        jnp.dot(x, m1_ref[...], preferred_element_type=jnp.float32)
        + b1_ref[...], 0.0)                                          # (Bt, 980)
    p1 = pool(a1, s1_ref)                                            # (Bt, 245)

    # conv2 + bias + relu
    a2 = jnp.maximum(
        jnp.dot(p1, m2_ref[...], preferred_element_type=jnp.float32)
        + b2_ref[...], 0.0)                                          # (Bt, 250)
    p2 = pool(a2, s2_ref)                                            # (Bt, 40)  CHW order

    # fc1 (single fused dot) + relu
    h1 = jnp.maximum(
        jnp.dot(p2, w3_ref[...], preferred_element_type=jnp.float32)
        + b3_ref[...], 0.0)                                          # (Bt, 20)

    # fc2 + softmax
    logits = (jnp.dot(h1, w4_ref[...], preferred_element_type=jnp.float32)
              + b4_ref[...])                                         # (Bt, 8)
    mx = jnp.max(logits, axis=-1, keepdims=True)
    e = jnp.exp(logits - mx)
    denom = jnp.sum(e, axis=-1, keepdims=True)
    out_ref[...] = e * pl.reciprocal(denom, approx=False)


# ---------------------------------------------------------------------------
# Wrapper
# ---------------------------------------------------------------------------
def net_forward(x, params):
    """x: (B, 1, 16, 16) float32 NCHW.  Returns softmax probs (B, 8)."""
    w1, b1, w2, b2, fc1_w, fc1_b, fc2_w, fc2_b = params
    B = x.shape[0]
    f32 = jnp.float32

    # ---- layout / weight prep (glue only; no activation compute here) ----
    m1 = _conv_unroll_matrix(w1, 16, 16)                      # (256, 980)
    b1f = jnp.repeat(b1.astype(f32), 14 * 14)[None, :]        # (1, 980)
    s1 = _pool_select_mats(5, 14, 14)                         # (4, 980, 245)
    m2 = _conv_unroll_matrix(w2, 7, 7)                        # (245, 250)
    b2f = jnp.repeat(b2.astype(f32), 5 * 5)[None, :]          # (1, 250)
    s2 = _pool_select_mats(10, 5, 5)                          # (4, 250, 40)
    w3 = fc1_w.T.astype(f32)                                  # (40, 20)  CHW order
    b3 = fc1_b.astype(f32)[None, :]                           # (1, 20)
    w4 = fc2_w.T.astype(f32)                                  # (20, 8)
    b4 = fc2_b.astype(f32)[None, :]                           # (1, 8)
    weights = (m1, b1f, s1, m2, b2f, s2, w3, b3, w4, b4)

    # ---- batch tiling: >=8 sublane rows, cap tile at 128 MXU rows ----
    b_tile = min(128, _round_up(B, 8))
    b_pad = _round_up(B, b_tile)
    x2 = x.reshape(B, -1).astype(f32)                         # CHW flatten (B, 256)
    if b_pad != B:
        x2 = jnp.pad(x2, ((0, b_pad - B), (0, 0)))

    out = pl.pallas_call(
        net_kernel,
        out_shape=jax.ShapeDtypeStruct((b_pad, 8), f32),
        grid=(b_pad // b_tile,),
        in_specs=[pl.BlockSpec((b_tile, 256), lambda i: (i, 0))]
                 + [_full_spec(a) for a in weights],
        out_specs=pl.BlockSpec((b_tile, 8), lambda i: (i, 0)),
        compiler_params=pltpu.CompilerParams(
            dimension_semantics=("parallel",),          # megacore on v7x
            vmem_limit_bytes=32 * 1024 * 1024),          # fits v5e/v6e/v7x
    )(x2, *weights)
    return out[:B]


# ---------------------------------------------------------------------------
# Pure-numpy float64 reference (correctness check only)
# ---------------------------------------------------------------------------
def _ref_forward_np(x, params):
    w1, b1, w2, b2, fc1_w, fc1_b, fc2_w, fc2_b = [
        np.asarray(p, np.float64) for p in params]
    x = np.asarray(x, np.float64)

    def conv3x3_relu(a, w, b):
        B, _, H, W = a.shape
        Ho, Wo = H - 2, W - 2
        out = np.zeros((B, w.shape[0], Ho, Wo))
        for d in range(3):
            for k in range(3):
                out += np.einsum("bchw,oc->bohw",
                                 a[:, :, d:d + Ho, k:k + Wo], w[:, :, d, k])
        return np.maximum(out + b.reshape(1, -1, 1, 1), 0.0)

    def pool2x2(a):
        B, C, H, W = a.shape
        Hp, Wp = H // 2, W // 2
        a = a[:, :, :2 * Hp, :2 * Wp].reshape(B, C, Hp, 2, Wp, 2)
        return a.max(axis=(3, 5))

    y = pool2x2(conv3x3_relu(x, w1, b1))
    y = pool2x2(conv3x3_relu(y, w2, b2))
    flat = y.reshape(y.shape[0], -1)                          # CHW flatten
    h = np.maximum(flat @ fc1_w.T + fc1_b, 0.0)
    logits = h @ fc2_w.T + fc2_b
    e = np.exp(logits - logits.max(axis=1, keepdims=True))
    return (e / e.sum(axis=1, keepdims=True)).astype(np.float32)


if __name__ == "__main__":
    key = jax.random.PRNGKey(0)
    ks = jax.random.split(key, 9)

    # Deterministic synthetic parameters (shapes from Net.__init__)
    w1 = jax.random.normal(ks[0], (5, 1, 3, 3), jnp.float32) * 0.2
    b1 = jax.random.normal(ks[1], (5,), jnp.float32) * 0.1
    w2 = jax.random.normal(ks[2], (10, 5, 3, 3), jnp.float32) * 0.2
    b2 = jax.random.normal(ks[3], (10,), jnp.float32) * 0.1
    fc1_w = jax.random.normal(ks[4], (20, 40), jnp.float32) * 0.1
    fc1_b = jax.random.normal(ks[5], (20,), jnp.float32) * 0.1
    fc2_w = jax.random.normal(ks[6], (8, 20), jnp.float32) * 0.1
    fc2_b = jax.random.normal(ks[7], (8,), jnp.float32) * 0.1
    params = (w1, b1, w2, b2, fc1_w, fc1_b, fc2_w, fc2_b)

    x = jax.random.normal(ks[8], (2, 1, 16, 16), jnp.float32)  # NCHW input

    out = jax.block_until_ready(jax.jit(net_forward)(x, params))
    assert out.shape == (2, 8)

    ref = _ref_forward_np(np.asarray(x), [np.asarray(p) for p in params])
    np.testing.assert_allclose(np.asarray(out), ref, rtol=1e-4, atol=2e-5)
    np.testing.assert_allclose(np.asarray(out).sum(axis=1), np.ones(2),
                               rtol=1e-5, atol=1e-5)

    print("KERNEL_OK")
</pallas_src>

<mosaic_0001>
module attributes {stable_mosaic.version = 11 : i64} {
  func.func @net_kernel(%arg0: i32, %arg1: memref<8x256xf32, #tpu.memory_space<vmem>>, %arg2: memref<256x980xf32, #tpu.memory_space<vmem>>, %arg3: memref<1x980xf32, #tpu.memory_space<vmem>>, %arg4: memref<4x980x245xf32, #tpu.memory_space<vmem>>, %arg5: memref<245x250xf32, #tpu.memory_space<vmem>>, %arg6: memref<1x250xf32, #tpu.memory_space<vmem>>, %arg7: memref<4x250x40xf32, #tpu.memory_space<vmem>>, %arg8: memref<40x20xf32, #tpu.memory_space<vmem>>, %arg9: memref<1x20xf32, #tpu.memory_space<vmem>>, %arg10: memref<20x8xf32, #tpu.memory_space<vmem>>, %arg11: memref<1x8xf32, #tpu.memory_space<vmem>>, %arg12: memref<8x8xf32, #tpu.memory_space<vmem>>) attributes {dimension_semantics = [#tpu.dimension_semantics<parallel>], iteration_bounds = array<i64: 1>, scalar_prefetch = 0 : i64, scratch_operands = 0 : i64, tpu.core_type = #tpu.core_type<tc>, window_params = [{transform_indices = @transform_0, window_bounds = array<i64: 8, 256>}, {pipeline_mode = #tpu.pipeline_mode<synchronous>, transform_indices = @transform_1, window_bounds = array<i64: 256, 980>}, {pipeline_mode = #tpu.pipeline_mode<synchronous>, transform_indices = @transform_2, window_bounds = array<i64: 1, 980>}, {pipeline_mode = #tpu.pipeline_mode<synchronous>, transform_indices = @transform_3, window_bounds = array<i64: 4, 980, 245>}, {pipeline_mode = #tpu.pipeline_mode<synchronous>, transform_indices = @transform_4, window_bounds = array<i64: 245, 250>}, {pipeline_mode = #tpu.pipeline_mode<synchronous>, transform_indices = @transform_5, window_bounds = array<i64: 1, 250>}, {pipeline_mode = #tpu.pipeline_mode<synchronous>, transform_indices = @transform_6, window_bounds = array<i64: 4, 250, 40>}, {pipeline_mode = #tpu.pipeline_mode<synchronous>, transform_indices = @transform_7, window_bounds = array<i64: 40, 20>}, {pipeline_mode = #tpu.pipeline_mode<synchronous>, transform_indices = @transform_8, window_bounds = array<i64: 1, 20>}, {pipeline_mode = #tpu.pipeline_mode<synchronous>, transform_indices = @transform_9, window_bounds = array<i64: 20, 8>}, {pipeline_mode = #tpu.pipeline_mode<synchronous>, transform_indices = @transform_10, window_bounds = array<i64: 1, 8>}, {transform_indices = @transform_11, window_bounds = array<i64: 8, 8>}]} {
    %c0 = arith.constant 0 : index
    %c0_0 = arith.constant 0 : index
    %0 = vector.load %arg1[%c0, %c0_0] : memref<8x256xf32, #tpu.memory_space<vmem>>, vector<8x256xf32>
    %c0_1 = arith.constant 0 : index
    %c0_2 = arith.constant 0 : index
    %1 = vector.load %arg2[%c0_1, %c0_2] : memref<256x980xf32, #tpu.memory_space<vmem>>, vector<256x980xf32>
    %cst = arith.constant dense<0.000000e+00> : vector<8x980xf32>
    %2 = tpu.matmul %0, %1, %cst {dimension_numbers = #tpu.dot_dimension_numbers<[1], [0], [0], [1], [0, 0, 1, 1], [], []>} : vector<8x256xf32>, vector<256x980xf32>, vector<8x980xf32> -> vector<8x980xf32>
    %c0_3 = arith.constant 0 : index
    %c0_4 = arith.constant 0 : index
    %3 = vector.load %arg3[%c0_3, %c0_4] : memref<1x980xf32, #tpu.memory_space<vmem>>, vector<1x980xf32>
    %4 = vector.broadcast %3 : vector<1x980xf32> to vector<8x980xf32>
    %5 = arith.addf %2, %4 : vector<8x980xf32>
    %cst_5 = arith.constant 0.000000e+00 : f32
    %6 = vector.broadcast %cst_5 : f32 to vector<8x980xf32>
    %7 = arith.maximumf %5, %6 : vector<8x980xf32>
    %c0_6 = arith.constant 0 : index
    %c0_7 = arith.constant 0 : index
    %c0_8 = arith.constant 0 : index
    %8 = vector.load %arg4[%c0_6, %c0_7, %c0_8] : memref<4x980x245xf32, #tpu.memory_space<vmem>>, vector<1x980x245xf32>
    %9 = vector.shape_cast %8 : vector<1x980x245xf32> to vector<980x245xf32>
    %cst_9 = arith.constant dense<0.000000e+00> : vector<8x245xf32>
    %10 = tpu.matmul %7, %9, %cst_9 {dimension_numbers = #tpu.dot_dimension_numbers<[1], [0], [0], [1], [0, 0, 1, 1], [], []>} : vector<8x980xf32>, vector<980x245xf32>, vector<8x245xf32> -> vector<8x245xf32>
    %c1 = arith.constant 1 : index
    %c0_10 = arith.constant 0 : index
    %c0_11 = arith.constant 0 : index
    %11 = vector.load %arg4[%c1, %c0_10, %c0_11] : memref<4x980x245xf32, #tpu.memory_space<vmem>>, vector<1x980x245xf32>
    %12 = vector.shape_cast %11 : vector<1x980x245xf32> to vector<980x245xf32>
    %cst_12 = arith.constant dense<0.000000e+00> : vector<8x245xf32>
    %13 = tpu.matmul %7, %12, %cst_12 {dimension_numbers = #tpu.dot_dimension_numbers<[1], [0], [0], [1], [0, 0, 1, 1], [], []>} : vector<8x980xf32>, vector<980x245xf32>, vector<8x245xf32> -> vector<8x245xf32>
    %14 = arith.maximumf %10, %13 : vector<8x245xf32>
    %c2 = arith.constant 2 : index
    %c0_13 = arith.constant 0 : index
    %c0_14 = arith.constant 0 : index
    %15 = vector.load %arg4[%c2, %c0_13, %c0_14] : memref<4x980x245xf32, #tpu.memory_space<vmem>>, vector<1x980x245xf32>
    %16 = vector.shape_cast %15 : vector<1x980x245xf32> to vector<980x245xf32>
    %cst_15 = arith.constant dense<0.000000e+00> : vector<8x245xf32>
    %17 = tpu.matmul %7, %16, %cst_15 {dimension_numbers = #tpu.dot_dimension_numbers<[1], [0], [0], [1], [0, 0, 1, 1], [], []>} : vector<8x980xf32>, vector<980x245xf32>, vector<8x245xf32> -> vector<8x245xf32>
    %18 = arith.maximumf %14, %17 : vector<8x245xf32>
    %c3 = arith.constant 3 : index
    %c0_16 = arith.constant 0 : index
    %c0_17 = arith.constant 0 : index
    %19 = vector.load %arg4[%c3, %c0_16, %c0_17] : memref<4x980x245xf32, #tpu.memory_space<vmem>>, vector<1x980x245xf32>
    %20 = vector.shape_cast %19 : vector<1x980x245xf32> to vector<980x245xf32>
    %cst_18 = arith.constant dense<0.000000e+00> : vector<8x245xf32>
    %21 = tpu.matmul %7, %20, %cst_18 {dimension_numbers = #tpu.dot_dimension_numbers<[1], [0], [0], [1], [0, 0, 1, 1], [], []>} : vector<8x980xf32>, vector<980x245xf32>, vector<8x245xf32> -> vector<8x245xf32>
    %22 = arith.maximumf %18, %21 : vector<8x245xf32>
    %c0_19 = arith.constant 0 : index
    %c0_20 = arith.constant 0 : index
    %23 = vector.load %arg5[%c0_19, %c0_20] : memref<245x250xf32, #tpu.memory_space<vmem>>, vector<245x250xf32>
    %cst_21 = arith.constant dense<0.000000e+00> : vector<8x250xf32>
    %24 = tpu.matmul %22, %23, %cst_21 {dimension_numbers = #tpu.dot_dimension_numbers<[1], [0], [0], [1], [0, 0, 1, 1], [], []>} : vector<8x245xf32>, vector<245x250xf32>, vector<8x250xf32> -> vector<8x250xf32>
    %c0_22 = arith.constant 0 : index
    %c0_23 = arith.constant 0 : index
    %25 = vector.load %arg6[%c0_22, %c0_23] : memref<1x250xf32, #tpu.memory_space<vmem>>, vector<1x250xf32>
    %26 = vector.broadcast %25 : vector<1x250xf32> to vector<8x250xf32>
    %27 = arith.addf %24, %26 : vector<8x250xf32>
    %cst_24 = arith.constant 0.000000e+00 : f32
    %28 = vector.broadcast %cst_24 : f32 to vector<8x250xf32>
    %29 = arith.maximumf %27, %28 : vector<8x250xf32>
    %c0_25 = arith.constant 0 : index
    %c0_26 = arith.constant 0 : index
    %c0_27 = arith.constant 0 : index
    %30 = vector.load %arg7[%c0_25, %c0_26, %c0_27] : memref<4x250x40xf32, #tpu.memory_space<vmem>>, vector<1x250x40xf32>
    %31 = vector.shape_cast %30 : vector<1x250x40xf32> to vector<250x40xf32>
    %cst_28 = arith.constant dense<0.000000e+00> : vector<8x40xf32>
    %32 = tpu.matmul %29, %31, %cst_28 {dimension_numbers = #tpu.dot_dimension_numbers<[1], [0], [0], [1], [0, 0, 1, 1], [], []>} : vector<8x250xf32>, vector<250x40xf32>, vector<8x40xf32> -> vector<8x40xf32>
    %c1_29 = arith.constant 1 : index
    %c0_30 = arith.constant 0 : index
    %c0_31 = arith.constant 0 : index
    %33 = vector.load %arg7[%c1_29, %c0_30, %c0_31] : memref<4x250x40xf32, #tpu.memory_space<vmem>>, vector<1x250x40xf32>
    %34 = vector.shape_cast %33 : vector<1x250x40xf32> to vector<250x40xf32>
    %cst_32 = arith.constant dense<0.000000e+00> : vector<8x40xf32>
    %35 = tpu.matmul %29, %34, %cst_32 {dimension_numbers = #tpu.dot_dimension_numbers<[1], [0], [0], [1], [0, 0, 1, 1], [], []>} : vector<8x250xf32>, vector<250x40xf32>, vector<8x40xf32> -> vector<8x40xf32>
    %36 = arith.maximumf %32, %35 : vector<8x40xf32>
    %c2_33 = arith.constant 2 : index
    %c0_34 = arith.constant 0 : index
    %c0_35 = arith.constant 0 : index
    %37 = vector.load %arg7[%c2_33, %c0_34, %c0_35] : memref<4x250x40xf32, #tpu.memory_space<vmem>>, vector<1x250x40xf32>
    %38 = vector.shape_cast %37 : vector<1x250x40xf32> to vector<250x40xf32>
    %cst_36 = arith.constant dense<0.000000e+00> : vector<8x40xf32>
    %39 = tpu.matmul %29, %38, %cst_36 {dimension_numbers = #tpu.dot_dimension_numbers<[1], [0], [0], [1], [0, 0, 1, 1], [], []>} : vector<8x250xf32>, vector<250x40xf32>, vector<8x40xf32> -> vector<8x40xf32>
    %40 = arith.maximumf %36, %39 : vector<8x40xf32>
    %c3_37 = arith.constant 3 : index
    %c0_38 = arith.constant 0 : index
    %c0_39 = arith.constant 0 : index
    %41 = vector.load %arg7[%c3_37, %c0_38, %c0_39] : memref<4x250x40xf32, #tpu.memory_space<vmem>>, vector<1x250x40xf32>
    %42 = vector.shape_cast %41 : vector<1x250x40xf32> to vector<250x40xf32>
    %cst_40 = arith.constant dense<0.000000e+00> : vector<8x40xf32>
    %43 = tpu.matmul %29, %42, %cst_40 {dimension_numbers = #tpu.dot_dimension_numbers<[1], [0], [0], [1], [0, 0, 1, 1], [], []>} : vector<8x250xf32>, vector<250x40xf32>, vector<8x40xf32> -> vector<8x40xf32>
    %44 = arith.maximumf %40, %43 : vector<8x40xf32>
    %c0_41 = arith.constant 0 : index
    %c0_42 = arith.constant 0 : index
    %45 = vector.load %arg8[%c0_41, %c0_42] : memref<40x20xf32, #tpu.memory_space<vmem>>, vector<40x20xf32>
    %cst_43 = arith.constant dense<0.000000e+00> : vector<8x20xf32>
    %46 = tpu.matmul %44, %45, %cst_43 {dimension_numbers = #tpu.dot_dimension_numbers<[1], [0], [0], [1], [0, 0, 1, 1], [], []>} : vector<8x40xf32>, vector<40x20xf32>, vector<8x20xf32> -> vector<8x20xf32>
    %c0_44 = arith.constant 0 : index
    %c0_45 = arith.constant 0 : index
    %47 = vector.load %arg9[%c0_44, %c0_45] : memref<1x20xf32, #tpu.memory_space<vmem>>, vector<1x20xf32>
    %48 = vector.broadcast %47 : vector<1x20xf32> to vector<8x20xf32>
    %49 = arith.addf %46, %48 : vector<8x20xf32>
    %cst_46 = arith.constant 0.000000e+00 : f32
    %50 = vector.broadcast %cst_46 : f32 to vector<8x20xf32>
    %51 = arith.maximumf %49, %50 : vector<8x20xf32>
    %c0_47 = arith.constant 0 : index
    %c0_48 = arith.constant 0 : index
    %52 = vector.load %arg10[%c0_47, %c0_48] : memref<20x8xf32, #tpu.memory_space<vmem>>, vector<20x8xf32>
    %cst_49 = arith.constant dense<0.000000e+00> : vector<8x8xf32>
    %53 = tpu.matmul %51, %52, %cst_49 {dimension_numbers = #tpu.dot_dimension_numbers<[1], [0], [0], [1], [0, 0, 1, 1], [], []>} : vector<8x20xf32>, vector<20x8xf32>, vector<8x8xf32> -> vector<8x8xf32>
    %c0_50 = arith.constant 0 : index
    %c0_51 = arith.constant 0 : index
    %54 = vector.load %arg11[%c0_50, %c0_51] : memref<1x8xf32, #tpu.memory_space<vmem>>, vector<1x8xf32>
    %55 = vector.broadcast %54 : vector<1x8xf32> to vector<8x8xf32>
    %56 = arith.addf %53, %55 : vector<8x8xf32>
    %cst_52 = arith.constant dense<0xFF800000> : vector<8xf32>
    %57 = vector.multi_reduction <maximumf>, %56, %cst_52 [1] : vector<8x8xf32> to vector<8xf32>
    %58 = vector.shape_cast %57 : vector<8xf32> to vector<8x1xf32>
    %59 = vector.broadcast %58 : vector<8x1xf32> to vector<8x8xf32>
    %60 = arith.subf %56, %59 : vector<8x8xf32>
    %61 = math.exp %60 : vector<8x8xf32>
    %cst_53 = arith.constant dense<0.000000e+00> : vector<8xf32>
    %62 = vector.multi_reduction <add>, %61, %cst_53 [1] : vector<8x8xf32> to vector<8xf32>
    %63 = vector.shape_cast %62 : vector<8xf32> to vector<8x1xf32>
    %64 = tpu.reciprocal %63 : vector<8x1xf32> -> vector<8x1xf32>
    %65 = vector.broadcast %64 : vector<8x1xf32> to vector<8x8xf32>
    %66 = arith.mulf %61, %65 : vector<8x8xf32>
    %c0_54 = arith.constant 0 : index
    %c0_55 = arith.constant 0 : index
    %67 = vector.load %arg12[%c0_54, %c0_55] : memref<8x8xf32, #tpu.memory_space<vmem>>, vector<8x8xf32>
    tpu.vector_store %arg12[%c0_54, %c0_55], %66 {strides = array<i32>} : memref<8x8xf32, #tpu.memory_space<vmem>>, vector<8x8xf32>,
    return
  }
  func.func @transform_0(%arg0: i32) -> (i32, i32) {
    %c0_i32 = arith.constant 0 : i32
    %c0_i32_0 = arith.constant 0 : i32
    return %arg0, %c0_i32 : i32, i32
  }
  func.func @transform_1(%arg0: i32) -> (i32, i32) {
    %c0_i32 = arith.constant 0 : i32
    %c0_i32_0 = arith.constant 0 : i32
    %c0_i32_1 = arith.constant 0 : i32
    return %c0_i32, %c0_i32_0 : i32, i32
  }
  func.func @transform_2(%arg0: i32) -> (i32, i32) {
    %c0_i32 = arith.constant 0 : i32
    %c0_i32_0 = arith.constant 0 : i32
    %c0_i32_1 = arith.constant 0 : i32
    return %c0_i32, %c0_i32_0 : i32, i32
  }
  func.func @transform_3(%arg0: i32) -> (i32, i32, i32) {
    %c0_i32 = arith.constant 0 : i32
    %c0_i32_0 = arith.constant 0 : i32
    %c0_i32_1 = arith.constant 0 : i32
    %c0_i32_2 = arith.constant 0 : i32
    return %c0_i32, %c0_i32_0, %c0_i32_1 : i32, i32, i32
  }
  func.func @transform_4(%arg0: i32) -> (i32, i32) {
    %c0_i32 = arith.constant 0 : i32
    %c0_i32_0 = arith.constant 0 : i32
    %c0_i32_1 = arith.constant 0 : i32
    return %c0_i32, %c0_i32_0 : i32, i32
  }
  func.func @transform_5(%arg0: i32) -> (i32, i32) {
    %c0_i32 = arith.constant 0 : i32
    %c0_i32_0 = arith.constant 0 : i32
    %c0_i32_1 = arith.constant 0 : i32
    return %c0_i32, %c0_i32_0 : i32, i32
  }
  func.func @transform_6(%arg0: i32) -> (i32, i32, i32) {
    %c0_i32 = arith.constant 0 : i32
    %c0_i32_0 = arith.constant 0 : i32
    %c0_i32_1 = arith.constant 0 : i32
    %c0_i32_2 = arith.constant 0 : i32
    return %c0_i32, %c0_i32_0, %c0_i32_1 : i32, i32, i32
  }
  func.func @transform_7(%arg0: i32) -> (i32, i32) {
    %c0_i32 = arith.constant 0 : i32
    %c0_i32_0 = arith.constant 0 : i32
    %c0_i32_1 = arith.constant 0 : i32
    return %c0_i32, %c0_i32_0 : i32, i32
  }
  func.func @transform_8(%arg0: i32) -> (i32, i32) {
    %c0_i32 = arith.constant 0 : i32
    %c0_i32_0 = arith.constant 0 : i32
    %c0_i32_1 = arith.constant 0 : i32
    return %c0_i32, %c0_i32_0 : i32, i32
  }
  func.func @transform_9(%arg0: i32) -> (i32, i32) {
    %c0_i32 = arith.constant 0 : i32
    %c0_i32_0 = arith.constant 0 : i32
    %c0_i32_1 = arith.constant 0 : i32
    return %c0_i32, %c0_i32_0 : i32, i32
  }
  func.func @transform_10(%arg0: i32) -> (i32, i32) {
    %c0_i32 = arith.constant 0 : i32
    %c0_i32_0 = arith.constant 0 : i32
    %c0_i32_1 = arith.constant 0 : i32
    return %c0_i32, %c0_i32_0 : i32, i32
  }
  func.func @transform_11(%arg0: i32) -> (i32, i32) {
    %c0_i32 = arith.constant 0 : i32
    %c0_i32_0 = arith.constant 0 : i32
    return %arg0, %c0_i32 : i32, i32
  }
}

</mosaic_0001>

<llo_original>
// kernel: net_forward.1
$region0: #{net_forward.1}
  #allocation0 [shape = 'u32[]', space=smem, size = 0x4, offset = 0x4, fixed_abs, tag = 'smem constant byte address 0x4 - core index']
  #allocation1 [shape = 'u32[144,128]{1,0:T(1,128)}', space=vmem, size = 0x12000, scoped, tag = 'internal scratch']
  %s0 = inlined_call_operand.vmem [shape: f32[8,256], index: 0, kind: input, shape index: {}]
  %s1 = inlined_call_operand.vmem [shape: f32[256,980], index: 1, kind: input, shape index: {}]
  %s2 = inlined_call_operand.vmem [shape: f32[1,980], index: 2, kind: input, shape index: {}]
  %s3 = inlined_call_operand.vmem [shape: f32[4,980,245], index: 3, kind: input, shape index: {}]
  %s4 = inlined_call_operand.vmem [shape: f32[245,250], index: 4, kind: input, shape index: {}]
  %s5 = inlined_call_operand.vmem [shape: f32[1,250], index: 5, kind: input, shape index: {}]
  %s6 = inlined_call_operand.vmem [shape: f32[4,250,40], index: 6, kind: input, shape index: {}]
  %s7 = inlined_call_operand.vmem [shape: f32[40,20], index: 7, kind: input, shape index: {}]
  %s8 = inlined_call_operand.vmem [shape: f32[1,20], index: 8, kind: input, shape index: {}]
  %s9 = inlined_call_operand.vmem [shape: f32[20,8], index: 9, kind: input, shape index: {}]
  %s10 = inlined_call_operand.vmem [shape: f32[1,8], index: 10, kind: input, shape index: {}]
  %s11 = inlined_call_operand.vmem [shape: f32[8,8], index: 11, kind: output, shape index: {}]
  %s12 = sld [smem:[#allocation0]]
  $region54: #{net_forward.1} parent=0
    _
  %s14 = ssub.s32 1, %s12
  %s15 = scalar_select 0, %s14, %s12
  // Predicated region
  $region2: #{net_forward.1} parent=0 // pred_check
    _
  $region3: #{net_forward.1} parent=0 // pred_check_branch
    %17 = sbr.rel (0) target = $region5
  $region4: #{net_forward.1} parent=0 // pred_region
    _
  $region5: #{net_forward.1} parent=0 // pred_fallthru
    _
  // Predicated region
  $region6: #{net_forward.1} parent=0 // pred_check
    _
  $region7: #{net_forward.1} parent=0 // pred_check_branch
    %19 = sbr.rel (0) target = $region9
  $region8: #{net_forward.1} parent=0 // pred_region
    _
  $region9: #{net_forward.1} parent=0 // pred_fallthru
    _
  // Predicated region
  $region10: #{net_forward.1} parent=0 // pred_check
    _
  $region11: #{net_forward.1} parent=0 // pred_check_branch
    %21 = sbr.rel (0) target = $region13
  $region12: #{net_forward.1} parent=0 // pred_region
    _
  $region13: #{net_forward.1} parent=0 // pred_fallthru
    _
  // Predicated region
  $region14: #{net_forward.1} parent=0 // pred_check
    _
  $region15: #{net_forward.1} parent=0 // pred_check_branch
    %23 = sbr.rel (0) target = $region17
  $region16: #{net_forward.1} parent=0 // pred_region
    _
  $region17: #{net_forward.1} parent=0 // pred_fallthru
    _
  // Predicated region
  $region18: #{net_forward.1} parent=0 // pred_check
    _
  $region19: #{net_forward.1} parent=0 // pred_check_branch
    %25 = sbr.rel (0) target = $region21
  $region20: #{net_forward.1} parent=0 // pred_region
    _
  $region21: #{net_forward.1} parent=0 // pred_fallthru
    _
  // Predicated region
  $region22: #{net_forward.1} parent=0 // pred_check
    _
  $region23: #{net_forward.1} parent=0 // pred_check_branch
    %27 = sbr.rel (0) target = $region25
  $region24: #{net_forward.1} parent=0 // pred_region
    _
  $region25: #{net_forward.1} parent=0 // pred_fallthru
    _
  // Predicated region
  $region26: #{net_forward.1} parent=0 // pred_check
    _
  $region27: #{net_forward.1} parent=0 // pred_check_branch
    %29 = sbr.rel (0) target = $region29
  $region28: #{net_forward.1} parent=0 // pred_region
    _
  $region29: #{net_forward.1} parent=0 // pred_fallthru
    _
  // Predicated region
  $region30: #{net_forward.1} parent=0 // pred_check
    _
  $region31: #{net_forward.1} parent=0 // pred_check_branch
    %31 = sbr.rel (0) target = $region33
  $region32: #{net_forward.1} parent=0 // pred_region
    _
  $region33: #{net_forward.1} parent=0 // pred_fallthru
    _
  // Predicated region
  $region34: #{net_forward.1} parent=0 // pred_check
    _
  $region35: #{net_forward.1} parent=0 // pred_check_branch
    %33 = sbr.rel (0) target = $region37
  $region36: #{net_forward.1} parent=0 // pred_region
    _
  $region37: #{net_forward.1} parent=0 // pred_fallthru
    _
  // Predicated region
  $region38: #{net_forward.1} parent=0 // pred_check
    _
  $region39: #{net_forward.1} parent=0 // pred_check_branch
    %35 = sbr.rel (0) target = $region41
  $region40: #{net_forward.1} parent=0 // pred_region
    _
  $region41: #{net_forward.1} parent=0 // pred_fallthru
    _
  // Predicated region
  $region42: #{net_forward.1} parent=0 // pred_check
    _
  $region43: #{net_forward.1} parent=0 // pred_check_branch
    %37 = sbr.rel (0) target = $region45
  $region44: #{net_forward.1} parent=0 // pred_region
    _
  $region45: #{net_forward.1} parent=0 // pred_fallthru
    _
  %v38 = vld [vmem:[%s0] sm:$0xff]
  %v39 = vld [vmem:[%s0 + $0x8] sm:$0xff]
  %v40 = vld [vmem:[%s1] sm:$0xff]
  %v41 = vld [vmem:[%s1 + $0x8] sm:$0xff]
  %v42 = vld [vmem:[%s1 + $0x10] sm:$0xff]
  %v43 = vld [vmem:[%s1 + $0x18] sm:$0xff]
  %v44 = vld [vmem:[%s1 + $0x20] sm:$0xff]
  %v45 = vld [vmem:[%s1 + $0x28] sm:$0xff]
  %v46 = vld [vmem:[%s1 + $0x30] sm:$0xff]
  %v47 = vld [vmem:[%s1 + $0x38] sm:$0xff]
  %v48 = vld [vmem:[%s1 + $0x40] sm:$0xff]
  %v49 = vld [vmem:[%s1 + $0x48] sm:$0xff]
  %v50 = vld [vmem:[%s1 + $0x50] sm:$0xff]
  %v51 = vld [vmem:[%s1 + $0x58] sm:$0xff]
  %v52 = vld [vmem:[%s1 + $0x60] sm:$0xff]
  %v53 = vld [vmem:[%s1 + $0x68] sm:$0xff]
  %v54 = vld [vmem:[%s1 + $0x70] sm:$0xff]
  %v55 = vld [vmem:[%s1 + $0x78] sm:$0xff]
  %v56 = vld [vmem:[%s1 + $0x80] sm:$0xff]
  %v57 = vld [vmem:[%s1 + $0x88] sm:$0xff]
  %v58 = vld [vmem:[%s1 + $0x90] sm:$0xff]
  %v59 = vld [vmem:[%s1 + $0x98] sm:$0xff]
  %v60 = vld [vmem:[%s1 + $0xa0] sm:$0xff]
  %v61 = vld [vmem:[%s1 + $0xa8] sm:$0xff]
  %v62 = vld [vmem:[%s1 + $0xb0] sm:$0xff]
  %v63 = vld [vmem:[%s1 + $0xb8] sm:$0xff]
  %v64 = vld [vmem:[%s1 + $0xc0] sm:$0xff]
  %v65 = vld [vmem:[%s1 + $0xc8] sm:$0xff]
  %v66 = vld [vmem:[%s1 + $0xd0] sm:$0xff]
  %v67 = vld [vmem:[%s1 + $0xd8] sm:$0xff]
  %v68 = vld [vmem:[%s1 + $0xe0] sm:$0xff]
  %v69 = vld [vmem:[%s1 + $0xe8] sm:$0xff]
  %v70 = vld [vmem:[%s1 + $0xf0] sm:$0xff]
  %v71 = vld [vmem:[%s1 + $0xf8] sm:$0xff]
  %v72 = vld [vmem:[%s1 + $0x100] sm:$0xff]
  %v73 = vld [vmem:[%s1 + $0x108] sm:$0xff]
  %v74 = vld [vmem:[%s1 + $0x110] sm:$0xff]
  %v75 = vld [vmem:[%s1 + $0x118] sm:$0xff]
  %v76 = vld [vmem:[%s1 + $0x120] sm:$0xff]
  %v77 = vld [vmem:[%s1 + $0x128] sm:$0xff]
  %v78 = vld [vmem:[%s1 + $0x130] sm:$0xff]
  %v79 = vld [vmem:[%s1 + $0x138] sm:$0xff]
  %v80 = vld [vmem:[%s1 + $0x140] sm:$0xff]
  %v81 = vld [vmem:[%s1 + $0x148] sm:$0xff]
  %v82 = vld [vmem:[%s1 + $0x150] sm:$0xff]
  %v83 = vld [vmem:[%s1 + $0x158] sm:$0xff]
  %v84 = vld [vmem:[%s1 + $0x160] sm:$0xff]
  %v85 = vld [vmem:[%s1 + $0x168] sm:$0xff]
  %v86 = vld [vmem:[%s1 + $0x170] sm:$0xff]
  %v87 = vld [vmem:[%s1 + $0x178] sm:$0xff]
  %v88 = vld [vmem:[%s1 + $0x180] sm:$0xff]
  %v89 = vld [vmem:[%s1 + $0x188] sm:$0xff]
  %v90 = vld [vmem:[%s1 + $0x190] sm:$0xff]
  %v91 = vld [vmem:[%s1 + $0x198] sm:$0xff]
  %v92 = vld [vmem:[%s1 + $0x1a0] sm:$0xff]
  %v93 = vld [vmem:[%s1 + $0x1a8] sm:$0xff]
  %v94 = vld [vmem:[%s1 + $0x1b0] sm:$0xff]
  %v95 = vld [vmem:[%s1 + $0x1b8] sm:$0xff]
  %v96 = vld [vmem:[%s1 + $0x1c0] sm:$0xff]
  %v97 = vld [vmem:[%s1 + $0x1c8] sm:$0xff]
  %v98 = vld [vmem:[%s1 + $0x1d0] sm:$0xff]
  %v99 = vld [vmem:[%s1 + $0x1d8] sm:$0xff]
  %v100 = vld [vmem:[%s1 + $0x1e0] sm:$0xff]
  %v101 = vld [vmem:[%s1 + $0x1e8] sm:$0xff]
  %v102 = vld [vmem:[%s1 + $0x1f0] sm:$0xff]
  %v103 = vld [vmem:[%s1 + $0x1f8] sm:$0xff]
  %v104 = vld [vmem:[%s1 + $0x200] sm:$0xff]
  %v105 = vld [vmem:[%s1 + $0x208] sm:$0xff]
  %v106 = vld [vmem:[%s1 + $0x210] sm:$0xff]
  %v107 = vld [vmem:[%s1 + $0x218] sm:$0xff]
  %v108 = vld [vmem:[%s1 + $0x220] sm:$0xff]
  %v109 = vld [vmem:[%s1 + $0x228] sm:$0xff]
  %v110 = vld [vmem:[%s1 + $0x230] sm:$0xff]
  %v111 = vld [vmem:[%s1 + $0x238] sm:$0xff]
  %v112 = vld [vmem:[%s1 + $0x240] sm:$0xff]
  %v113 = vld [vmem:[%s1 + $0x248] sm:$0xff]
  %v114 = vld [vmem:[%s1 + $0x250] sm:$0xff]
  %v115 = vld [vmem:[%s1 + $0x258] sm:$0xff]
  %v116 = vld [vmem:[%s1 + $0x260] sm:$0xff]
  %v117 = vld [vmem:[%s1 + $0x268] sm:$0xff]
  %v118 = vld [vmem:[%s1 + $0x270] sm:$0xff]
  %v119 = vld [vmem:[%s1 + $0x278] sm:$0xff]
  %v120 = vld [vmem:[%s1 + $0x280] sm:$0xff]
  %v121 = vld [vmem:[%s1 + $0x288] sm:$0xff]
  %v122 = vld [vmem:[%s1 + $0x290] sm:$0xff]
  %v123 = vld [vmem:[%s1 + $0x298] sm:$0xff]
  %v124 = vld [vmem:[%s1 + $0x2a0] sm:$0xff]
  %v125 = vld [vmem:[%s1 + $0x2a8] sm:$0xff]
  %v126 = vld [vmem:[%s1 + $0x2b0] sm:$0xff]
  %v127 = vld [vmem:[%s1 + $0x2b8] sm:$0xff]
  %v128 = vld [vmem:[%s1 + $0x2c0] sm:$0xff]
  %v129 = vld [vmem:[%s1 + $0x2c8] sm:$0xff]
  %v130 = vld [vmem:[%s1 + $0x2d0] sm:$0xff]
  %v131 = vld [vmem:[%s1 + $0x2d8] sm:$0xff]
  %v132 = vld [vmem:[%s1 + $0x2e0] sm:$0xff]
  %v133 = vld [vmem:[%s1 + $0x2e8] sm:$0xff]
  %v134 = vld [vmem:[%s1 + $0x2f0] sm:$0xff]
  %v135 = vld [vmem:[%s1 + $0x2f8] sm:$0xff]
  %v136 = vld [vmem:[%s1 + $0x300] sm:$0xff]
  %v137 = vld [vmem:[%s1 + $0x308] sm:$0xff]
  %v138 = vld [vmem:[%s1 + $0x310] sm:$0xff]
  %v139 = vld [vmem:[%s1 + $0x318] sm:$0xff]
  %v140 = vld [vmem:[%s1 + $0x320] sm:$0xff]
  %v141 = vld [vmem:[%s1 + $0x328] sm:$0xff]
  %v142 = vld [vmem:[%s1 + $0x330] sm:$0xff]
  %v143 = vld [vmem:[%s1 + $0x338] sm:$0xff]
  %v144 = vld [vmem:[%s1 + $0x340] sm:$0xff]
  %v145 = vld [vmem:[%s1 + $0x348] sm:$0xff]
  %v146 = vld [vmem:[%s1 + $0x350] sm:$0xff]
  %v147 = vld [vmem:[%s1 + $0x358] sm:$0xff]
  %v148 = vld [vmem:[%s1 + $0x360] sm:$0xff]
  %v149 = vld [vmem:[%s1 + $0x368] sm:$0xff]
  %v150 = vld [vmem:[%s1 + $0x370] sm:$0xff]
  %v151 = vld [vmem:[%s1 + $0x378] sm:$0xff]
  %v152 = vld [vmem:[%s1 + $0x380] sm:$0xff]
  %v153 = vld [vmem:[%s1 + $0x388] sm:$0xff]
  %v154 = vld [vmem:[%s1 + $0x390] sm:$0xff]
  %v155 = vld [vmem:[%s1 + $0x398] sm:$0xff]
  %v156 = vld [vmem:[%s1 + $0x3a0] sm:$0xff]
  %v157 = vld [vmem:[%s1 + $0x3a8] sm:$0xff]
  %v158 = vld [vmem:[%s1 + $0x3b0] sm:$0xff]
  %v159 = vld [vmem:[%s1 + $0x3b8] sm:$0xff]
  %v160 = vld [vmem:[%s1 + $0x3c0] sm:$0xff]
  %v161 = vld [vmem:[%s1 + $0x3c8] sm:$0xff]
  %v162 = vld [vmem:[%s1 + $0x3d0] sm:$0xff]
  %v163 = vld [vmem:[%s1 + $0x3d8] sm:$0xff]
  %v164 = vld [vmem:[%s1 + $0x3e0] sm:$0xff]
  %v165 = vld [vmem:[%s1 + $0x3e8] sm:$0xff]
  %v166 = vld [vmem:[%s1 + $0x3f0] sm:$0xff]
  %v167 = vld [vmem:[%s1 + $0x3f8] sm:$0xff]
  %v168 = vld [vmem:[%s1 + $0x400] sm:$0xff]
  %v169 = vld [vmem:[%s1 + $0x408] sm:$0xff]
  %v170 = vld [vmem:[%s1 + $0x410] sm:$0xff]
  %v171 = vld [vmem:[%s1 + $0x418] sm:$0xff]
  %v172 = vld [vmem:[%s1 + $0x420] sm:$0xff]
  %v173 = vld [vmem:[%s1 + $0x428] sm:$0xff]
  %v174 = vld [vmem:[%s1 + $0x430] sm:$0xff]
  %v175 = vld [vmem:[%s1 + $0x438] sm:$0xff]
  %v176 = vld [vmem:[%s1 + $0x440] sm:$0xff]
  %v177 = vld [vmem:[%s1 + $0x448] sm:$0xff]
  %v178 = vld [vmem:[%s1 + $0x450] sm:$0xff]
  %v179 = vld [vmem:[%s1 + $0x458] sm:$0xff]
  %v180 = vld [vmem:[%s1 + $0x460] sm:$0xff]
  %v181 = vld [vmem:[%s1 + $0x468] sm:$0xff]
  %v182 = vld [vmem:[%s1 + $0x470] sm:$0xff]
  %v183 = vld [vmem:[%s1 + $0x478] sm:$0xff]
  %v184 = vld [vmem:[%s1 + $0x480] sm:$0xff]
  %v185 = vld [vmem:[%s1 + $0x488] sm:$0xff]
  %v186 = vld [vmem:[%s1 + $0x490] sm:$0xff]
  %v187 = vld [vmem:[%s1 + $0x498] sm:$0xff]
  %v188 = vld [vmem:[%s1 + $0x4a0] sm:$0xff]
  %v189 = vld [vmem:[%s1 + $0x4a8] sm:$0xff]
  %v190 = vld [vmem:[%s1 + $0x4b0] sm:$0xff]
  %v191 = vld [vmem:[%s1 + $0x4b8] sm:$0xff]
  %v192 = vld [vmem:[%s1 + $0x4c0] sm:$0xff]
  %v193 = vld [vmem:[%s1 + $0x4c8] sm:$0xff]
  %v194 = vld [vmem:[%s1 + $0x4d0] sm:$0xff]
  %v195 = vld [vmem:[%s1 + $0x4d8] sm:$0xff]
  %v196 = vld [vmem:[%s1 + $0x4e0] sm:$0xff]
  %v197 = vld [vmem:[%s1 + $0x4e8] sm:$0xff]
  %v198 = vld [vmem:[%s1 + $0x4f0] sm:$0xff]
  %v199 = vld [vmem:[%s1 + $0x4f8] sm:$0xff]
  %v200 = vld [vmem:[%s1 + $0x500] sm:$0xff]
  %v201 = vld [vmem:[%s1 + $0x508] sm:$0xff]
  %v202 = vld [vmem:[%s1 + $0x510] sm:$0xff]
  %v203 = vld [vmem:[%s1 + $0x518] sm:$0xff]
  %v204 = vld [vmem:[%s1 + $0x520] sm:$0xff]
  %v205 = vld [vmem:[%s1 + $0x528] sm:$0xff]
  %v206 = vld [vmem:[%s1 + $0x530] sm:$0xff]
  %v207 = vld [vmem:[%s1 + $0x538] sm:$0xff]
  %v208 = vld [vmem:[%s1 + $0x540] sm:$0xff]
  %v209 = vld [vmem:[%s1 + $0x548] sm:$0xff]
  %v210 = vld [vmem:[%s1 + $0x550] sm:$0xff]
  %v211 = vld [vmem:[%s1 + $0x558] sm:$0xff]
  %v212 = vld [vmem:[%s1 + $0x560] sm:$0xff]
  %v213 = vld [vmem:[%s1 + $0x568] sm:$0xff]
  %v214 = vld [vmem:[%s1 + $0x570] sm:$0xff]
  %v215 = vld [vmem:[%s1 + $0x578] sm:$0xff]
  %v216 = vld [vmem:[%s1 + $0x580] sm:$0xff]
  %v217 = vld [vmem:[%s1 + $0x588] sm:$0xff]
  %v218 = vld [vmem:[%s1 + $0x590] sm:$0xff]
  %v219 = vld [vmem:[%s1 + $0x598] sm:$0xff]
  %v220 = vld [vmem:[%s1 + $0x5a0] sm:$0xff]
  %v221 = vld [vmem:[%s1 + $0x5a8] sm:$0xff]
  %v222 = vld [vmem:[%s1 + $0x5b0] sm:$0xff]
  %v223 = vld [vmem:[%s1 + $0x5b8] sm:$0xff]
  %v224 = vld [vmem:[%s1 + $0x5c0] sm:$0xff]
  %v225 = vld [vmem:[%s1 + $0x5c8] sm:$0xff]
  %v226 = vld [vmem:[%s1 + $0x5d0] sm:$0xff]
  %v227 = vld [vmem:[%s1 + $0x5d8] sm:$0xff]
  %v228 = vld [vmem:[%s1 + $0x5e0] sm:$0xff]
  %v229 = vld [vmem:[%s1 + $0x5e8] sm:$0xff]
  %v230 = vld [vmem:[%s1 + $0x5f0] sm:$0xff]
  %v231 = vld [vmem:[%s1 + $0x5f8] sm:$0xff]
  %v232 = vld [vmem:[%s1 + $0x600] sm:$0xff]
  %v233 = vld [vmem:[%s1 + $0x608] sm:$0xff]
  %v234 = vld [vmem:[%s1 + $0x610] sm:$0xff]
  %v235 = vld [vmem:[%s1 + $0x618] sm:$0xff]
  %v236 = vld [vmem:[%s1 + $0x620] sm:$0xff]
  %v237 = vld [vmem:[%s1 + $0x628] sm:$0xff]
  %v238 = vld [vmem:[%s1 + $0x630] sm:$0xff]
  %v239 = vld [vmem:[%s1 + $0x638] sm:$0xff]
  %v240 = vld [vmem:[%s1 + $0x640] sm:$0xff]
  %v241 = vld [vmem:[%s1 + $0x648] sm:$0xff]
  %v242 = vld [vmem:[%s1 + $0x650] sm:$0xff]
  %v243 = vld [vmem:[%s1 + $0x658] sm:$0xff]
  %v244 = vld [vmem:[%s1 + $0x660] sm:$0xff]
  %v245 = vld [vmem:[%s1 + $0x668] sm:$0xff]
  %v246 = vld [vmem:[%s1 + $0x670] sm:$0xff]
  %v247 = vld [vmem:[%s1 + $0x678] sm:$0xff]
  %v248 = vld [vmem:[%s1 + $0x680] sm:$0xff]
  %v249 = vld [vmem:[%s1 + $0x688] sm:$0xff]
  %v250 = vld [vmem:[%s1 + $0x690] sm:$0xff]
  %v251 = vld [vmem:[%s1 + $0x698] sm:$0xff]
  %v252 = vld [vmem:[%s1 + $0x6a0] sm:$0xff]
  %v253 = vld [vmem:[%s1 + $0x6a8] sm:$0xff]
  %v254 = vld [vmem:[%s1 + $0x6b0] sm:$0xff]
  %v255 = vld [vmem:[%s1 + $0x6b8] sm:$0xff]
  %v256 = vld [vmem:[%s1 + $0x6c0] sm:$0xff]
  %v257 = vld [vmem:[%s1 + $0x6c8] sm:$0xff]
  %v258 = vld [vmem:[%s1 + $0x6d0] sm:$0xff]
  %v259 = vld [vmem:[%s1 + $0x6d8] sm:$0xff]
  %v260 = vld [vmem:[%s1 + $0x6e0] sm:$0xff]
  %v261 = vld [vmem:[%s1 + $0x6e8] sm:$0xff]
  %v262 = vld [vmem:[%s1 + $0x6f0] sm:$0xff]
  %v263 = vld [vmem:[%s1 + $0x6f8] sm:$0xff]
  %v264 = vld [vmem:[%s1 + $0x700] sm:$0xff]
  %v265 = vld [vmem:[%s1 + $0x708] sm:$0xff]
  %v266 = vld [vmem:[%s1 + $0x710] sm:$0xff]
  %v267 = vld [vmem:[%s1 + $0x718] sm:$0xff]
  %v268 = vld [vmem:[%s1 + $0x720] sm:$0xff]
  %v269 = vld [vmem:[%s1 + $0x728] sm:$0xff]
  %v270 = vld [vmem:[%s1 + $0x730] sm:$0xff]
  %v271 = vld [vmem:[%s1 + $0x738] sm:$0xff]
  %v272 = vld [vmem:[%s1 + $0x740] sm:$0xff]
  %v273 = vld [vmem:[%s1 + $0x748] sm:$0xff]
  %v274 = vld [vmem:[%s1 + $0x750] sm:$0xff]
  %v275 = vld [vmem:[%s1 + $0x758] sm:$0xff]
  %v276 = vld [vmem:[%s1 + $0x760] sm:$0xff]
  %v277 = vld [vmem:[%s1 + $0x768] sm:$0xff]
  %v278 = vld [vmem:[%s1 + $0x770] sm:$0xff]
  %v279 = vld [vmem:[%s1 + $0x778] sm:$0xff]
  %v280 = vld [vmem:[%s1 + $0x780] sm:$0xff]
  %v281 = vld [vmem:[%s1 + $0x788] sm:$0xff]
  %v282 = vld [vmem:[%s1 + $0x790] sm:$0xff]
  %v283 = vld [vmem:[%s1 + $0x798] sm:$0xff]
  %v284 = vld [vmem:[%s1 + $0x7a0] sm:$0xff]
  %v285 = vld [vmem:[%s1 + $0x7a8] sm:$0xff]
  %v286 = vld [vmem:[%s1 + $0x7b0] sm:$0xff]
  %v287 = vld [vmem:[%s1 + $0x7b8] sm:$0xff]
  %v288 = vld [vmem:[%s1 + $0x7c0] sm:$0xff]
  %v289 = vld [vmem:[%s1 + $0x7c8] sm:$0xff]
  %v290 = vld [vmem:[%s1 + $0x7d0] sm:$0xff]
  %v291 = vld [vmem:[%s1 + $0x7d8] sm:$0xff]
  %v292 = vld [vmem:[%s1 + $0x7e0] sm:$0xff]
  %v293 = vld [vmem:[%s1 + $0x7e8] sm:$0xff]
  %v294 = vld [vmem:[%s1 + $0x7f0] sm:$0xff]
  %v295 = vld [vmem:[%s1 + $0x7f8] sm:$0xff]
  %v296 = vld [vmem:[%s2] sm:$0xff]
  %v298 = vlaneseq
  %v299 = vshrl.u32 %v298, 7
  %v300 = vsub.s32 0, %v299
  %v301 = vrot.slane %v296, %v300
  %v302 = vlaneseq
  %v303 = vshrl.u32 %v302, 7
  %v304 = vsub.s32 1, %v303
  %v305 = vrot.slane %v296, %v304
  %v306 = vlaneseq
  %v307 = vshrl.u32 %v306, 7
  %v308 = vsub.s32 2, %v307
  %v309 = vrot.slane %v296, %v308
  %v310 = vlaneseq
  %v311 = vshrl.u32 %v310, 7
  %v312 = vsub.s32 3, %v311
  %v313 = vrot.slane %v296, %v312
  %v314 = vlaneseq
  %v315 = vshrl.u32 %v314, 7
  %v316 = vsub.s32 4, %v315
  %v317 = vrot.slane %v296, %v316
  %v318 = vlaneseq
  %v319 = vshrl.u32 %v318, 7
  %v320 = vsub.s32 5, %v319
  %v321 = vrot.slane %v296, %v320
  %v322 = vlaneseq
  %v323 = vshrl.u32 %v322, 7
  %v324 = vsub.s32 6, %v323
  %v325 = vrot.slane %v296, %v324
  %v326 = vlaneseq
  %v327 = vshrl.u32 %v326, 7
  %v328 = vsub.s32 7, %v327
  %v329 = vrot.slane %v296, %v328
  %338 = vmatprep.subr.mxu0 %v161
  %339 = vmatpush1.msra.mxu0 %v160
  %340 = vmatprep.subr.mxu0 %v153
  %341 = vmatpush1.msra.mxu0 %v152
  %342 = vmatprep.subr.mxu0 %v145
  %343 = vmatpush1.msra.mxu0 %v144
  %344 = vmatprep.subr.mxu0 %v137
  %345 = vmatpush1.msra.mxu0 %v136
  %346 = vmatprep.subr.mxu0 %v129
  %347 = vmatpush1.msra.mxu0 %v128
  %348 = vmatprep.subr.mxu0 %v121
  %349 = vmatpush1.msra.mxu0 %v120
  %350 = vmatprep.subr.mxu0 %v113
  %351 = vmatpush1.msra.mxu0 %v112
  %352 = vmatprep.subr.mxu0 %v105
  %353 = vmatpush1.msra.mxu0 %v104
  %354 = vmatprep.subr.mxu0 %v97
  %355 = vmatpush1.msra.mxu0 %v96
  %356 = vmatprep.subr.mxu0 %v89
  %357 = vmatpush1.msra.mxu0 %v88
  %358 = vmatprep.subr.mxu0 %v81
  %359 = vmatpush1.msra.mxu0 %v80
  %360 = vmatprep.subr.mxu0 %v73
  %361 = vmatpush1.msra.mxu0 %v72
  %362 = vmatprep.subr.mxu0 %v65
  %363 = vmatpush1.msra.mxu0 %v64
  %364 = vmatprep.subr.mxu0 %v57
  %365 = vmatpush1.msra.mxu0 %v56
  %366 = vmatprep.subr.mxu0 %v49
  %367 = vmatpush1.msra.mxu0 %v48
  %368 = vmatprep.subr.mxu0 %v41
  %369 = vmatpush1.msra.mxu0 %v40
  %370 = vmatprep.subr.mxu0 %v289
  %371 = vmatpush2.msra.mxu0 %v288
  %372 = vmatprep.subr.mxu0 %v281
  %373 = vmatpush2.msra.mxu0 %v280
  %374 = vmatprep.subr.mxu0 %v273
  %375 = vmatpush2.msra.mxu0 %v272
  %376 = vmatprep.subr.mxu0 %v265
  %377 = vmatpush2.msra.mxu0 %v264
  %378 = vmatprep.subr.mxu0 %v257
  %379 = vmatpush2.msra.mxu0 %v256
  %380 = vmatprep.subr.mxu0 %v249
  %381 = vmatpush2.msra.mxu0 %v248
  %382 = vmatprep.subr.mxu0 %v241
  %383 = vmatpush2.msra.mxu0 %v240
  %384 = vmatprep.subr.mxu0 %v233
  %385 = vmatpush2.msra.mxu0 %v232
  %386 = vmatprep.subr.mxu0 %v225
  %387 = vmatpush2.msra.mxu0 %v224
  %388 = vmatprep.subr.mxu0 %v217
  %389 = vmatpush2.msra.mxu0 %v216
  %390 = vmatprep.subr.mxu0 %v209
  %391 = vmatpush2.msra.mxu0 %v208
  %392 = vmatprep.subr.mxu0 %v201
  %393 = vmatpush2.msra.mxu0 %v200
  %394 = vmatprep.subr.mxu0 %v193
  %395 = vmatpush2.msra.mxu0 %v192
  %396 = vmatprep.subr.mxu0 %v185
  %397 = vmatpush2.msra.mxu0 %v184
  %398 = vmatprep.subr.mxu0 %v177
  %399 = vmatpush2.msra.mxu0 %v176
  %400 = vmatprep.subr.mxu0 %v169
  %401 = vmatpush2.msra.mxu0 %v168
  %402 = vmatprep.mubr.f32.mxu0 %v39
  %403 = vmatmul.mubr.f32.gmra.mxu0 %v38
  %v404 = vpop.f32.mrf.mxu0
  %v405 = vadd.f32 %v301, %v404
  %v406 = vpop.f32.mrf.mxu0
  %v407 = vadd.f32 %v305, %v406
  %408 = vdwg.mxu0
  %409 = vmatprep.subr.mxu0 %v163
  %410 = vmatpush1.msra.mxu0 %v162
  %411 = vmatprep.subr.mxu0 %v155
  %412 = vmatpush1.msra.mxu0 %v154
  %413 = vmatprep.subr.mxu0 %v147
  %414 = vmatpush1.msra.mxu0 %v146
  %415 = vmatprep.subr.mxu0 %v139
  %416 = vmatpush1.msra.mxu0 %v138
  %417 = vmatprep.subr.mxu0 %v131
  %418 = vmatpush1.msra.mxu0 %v130
  %419 = vmatprep.subr.mxu0 %v123
  %420 = vmatpush1.msra.mxu0 %v122
  %421 = vmatprep.subr.mxu0 %v115
  %422 = vmatpush1.msra.mxu0 %v114
  %423 = vmatprep.subr.mxu0 %v107
  %424 = vmatpush1.msra.mxu0 %v106
  %425 = vmatprep.subr.mxu0 %v99
  %426 = vmatpush1.msra.mxu0 %v98
  %427 = vmatprep.subr.mxu0 %v91
  %428 = vmatpush1.msra.mxu0 %v90
  %429 = vmatprep.subr.mxu0 %v83
  %430 = vmatpush1.msra.mxu0 %v82
  %431 = vmatprep.subr.mxu0 %v75
  %432 = vmatpush1.msra.mxu0 %v74
  %433 = vmatprep.subr.mxu0 %v67
  %434 = vmatpush1.msra.mxu0 %v66
  %435 = vmatprep.subr.mxu0 %v59
  %436 = vmatpush1.msra.mxu0 %v58
  %437 = vmatprep.subr.mxu0 %v51
  %438 = vmatpush1.msra.mxu0 %v50
  %439 = vmatprep.subr.mxu0 %v43
  %440 = vmatpush1.msra.mxu0 %v42
  %441 = vmatprep.subr.mxu0 %v291
  %442 = vmatpush2.msra.mxu0 %v290
  %443 = vmatprep.subr.mxu0 %v283
  %444 = vmatpush2.msra.mxu0 %v282
  %445 = vmatprep.subr.mxu0 %v275
  %446 = vmatpush2.msra.mxu0 %v274
  %447 = vmatprep.subr.mxu0 %v267
  %448 = vmatpush2.msra.mxu0 %v266
  %449 = vmatprep.subr.mxu0 %v259
  %450 = vmatpush2.msra.mxu0 %v258
  %451 = vmatprep.subr.mxu0 %v251
  %452 = vmatpush2.msra.mxu0 %v250
  %453 = vmatprep.subr.mxu0 %v243
  %454 = vmatpush2.msra.mxu0 %v242
  %455 = vmatprep.subr.mxu0 %v235
  %456 = vmatpush2.msra.mxu0 %v234
  %457 = vmatprep.subr.mxu0 %v227
  %458 = vmatpush2.msra.mxu0 %v226
  %459 = vmatprep.subr.mxu0 %v219
  %460 = vmatpush2.msra.mxu0 %v218
  %461 = vmatprep.subr.mxu0 %v211
  %462 = vmatpush2.msra.mxu0 %v210
  %463 = vmatprep.subr.mxu0 %v203
  %464 = vmatpush2.msra.mxu0 %v202
  %465 = vmatprep.subr.mxu0 %v195
  %466 = vmatpush2.msra.mxu0 %v194
  %467 = vmatprep.subr.mxu0 %v187
  %468 = vmatpush2.msra.mxu0 %v186
  %469 = vmatprep.subr.mxu0 %v179
  %470 = vmatpush2.msra.mxu0 %v178
  %471 = vmatprep.subr.mxu0 %v171
  %472 = vmatpush2.msra.mxu0 %v170
  %473 = vmatprep.mubr.f32.mxu0 %v39
  %474 = vmatmul.mubr.f32.gmra.mxu0 %v38
  %v475 = vpop.f32.mrf.mxu0
  %v476 = vadd.f32 %v309, %v475
  %v477 = vpop.f32.mrf.mxu0
  %v478 = vadd.f32 %v313, %v477
  %479 = vdwg.mxu0
  %480 = vmatprep.subr.mxu0 %v165
  %481 = vmatpush1.msra.mxu0 %v164
  %482 = vmatprep.subr.mxu0 %v157
  %483 = vmatpush1.msra.mxu0 %v156
  %484 = vmatprep.subr.mxu0 %v149
  %485 = vmatpush1.msra.mxu0 %v148
  %486 = vmatprep.subr.mxu0 %v141
  %487 = vmatpush1.msra.mxu0 %v140
  %488 = vmatprep.subr.mxu0 %v133
  %489 = vmatpush1.msra.mxu0 %v132
  %490 = vmatprep.subr.mxu0 %v125
  %491 = vmatpush1.msra.mxu0 %v124
  %492 = vmatprep.subr.mxu0 %v117
  %493 = vmatpush1.msra.mxu0 %v116
  %494 = vmatprep.subr.mxu0 %v109
  %495 = vmatpush1.msra.mxu0 %v108
  %496 = vmatprep.subr.mxu0 %v101
  %497 = vmatpush1.msra.mxu0 %v100
  %498 = vmatprep.subr.mxu0 %v93
  %499 = vmatpush1.msra.mxu0 %v92
  %500 = vmatprep.subr.mxu0 %v85
  %501 = vmatpush1.msra.mxu0 %v84
  %502 = vmatprep.subr.mxu0 %v77
  %503 = vmatpush1.msra.mxu0 %v76
  %504 = vmatprep.subr.mxu0 %v69
  %505 = vmatpush1.msra.mxu0 %v68
  %506 = vmatprep.subr.mxu0 %v61
  %507 = vmatpush1.msra.mxu0 %v60
  %508 = vmatprep.subr.mxu0 %v53
  %509 = vmatpush1.msra.mxu0 %v52
  %510 = vmatprep.subr.mxu0 %v45
  %511 = vmatpush1.msra.mxu0 %v44
  %512 = vmatprep.subr.mxu0 %v293
  %513 = vmatpush2.msra.mxu0 %v292
  %514 = vmatprep.subr.mxu0 %v285
  %515 = vmatpush2.msra.mxu0 %v284
  %516 = vmatprep.subr.mxu0 %v277
  %517 = vmatpush2.msra.mxu0 %v276
  %518 = vmatprep.subr.mxu0 %v269
  %519 = vmatpush2.msra.mxu0 %v268
  %520 = vmatprep.subr.mxu0 %v261
  %521 = vmatpush2.msra.mxu0 %v260
  %522 = vmatprep.subr.mxu0 %v253
  %523 = vmatpush2.msra.mxu0 %v252
  %524 = vmatprep.subr.mxu0 %v245
  %525 = vmatpush2.msra.mxu0 %v244
  %526 = vmatprep.subr.mxu0 %v237
  %527 = vmatpush2.msra.mxu0 %v236
  %528 = vmatprep.subr.mxu0 %v229
  %529 = vmatpush2.msra.mxu0 %v228
  %530 = vmatprep.subr.mxu0 %v221
  %531 = vmatpush2.msra.mxu0 %v220
  %532 = vmatprep.subr.mxu0 %v213
  %533 = vmatpush2.msra.mxu0 %v212
  %534 = vmatprep.subr.mxu0 %v205
  %535 = vmatpush2.msra.mxu0 %v204
  %536 = vmatprep.subr.mxu0 %v197
  %537 = vmatpush2.msra.mxu0 %v196
  %538 = vmatprep.subr.mxu0 %v189
  %539 = vmatpush2.msra.mxu0 %v188
  %540 = vmatprep.subr.mxu0 %v181
  %541 = vmatpush2.msra.mxu0 %v180
  %542 = vmatprep.subr.mxu0 %v173
  %543 = vmatpush2.msra.mxu0 %v172
  %544 = vmatprep.mubr.f32.mxu0 %v39
  %545 = vmatmul.mubr.f32.gmra.mxu0 %v38
  %v546 = vpop.f32.mrf.mxu0
  %v547 = vadd.f32 %v317, %v546
  %v548 = vpop.f32.mrf.mxu0
  %v549 = vadd.f32 %v321, %v548
  %550 = vdwg.mxu0
  %551 = vmatprep.subr.mxu0 %v167
  %552 = vmatpush1.msra.mxu0 %v166
  %553 = vmatprep.subr.mxu0 %v159
  %554 = vmatpush1.msra.mxu0 %v158
  %555 = vmatprep.subr.mxu0 %v151
  %556 = vmatpush1.msra.mxu0 %v150
  %557 = vmatprep.subr.mxu0 %v143
  %558 = vmatpush1.msra.mxu0 %v142
  %559 = vmatprep.subr.mxu0 %v135
  %560 = vmatpush1.msra.mxu0 %v134
  %561 = vmatprep.subr.mxu0 %v127
  %562 = vmatpush1.msra.mxu0 %v126
  %563 = vmatprep.subr.mxu0 %v119
  %564 = vmatpush1.msra.mxu0 %v118
  %565 = vmatprep.subr.mxu0 %v111
  %566 = vmatpush1.msra.mxu0 %v110
  %567 = vmatprep.subr.mxu0 %v103
  %568 = vmatpush1.msra.mxu0 %v102
  %569 = vmatprep.subr.mxu0 %v95
  %570 = vmatpush1.msra.mxu0 %v94
  %571 = vmatprep.subr.mxu0 %v87
  %572 = vmatpush1.msra.mxu0 %v86
  %573 = vmatprep.subr.mxu0 %v79
  %574 = vmatpush1.msra.mxu0 %v78
  %575 = vmatprep.subr.mxu0 %v71
  %576 = vmatpush1.msra.mxu0 %v70
  %577 = vmatprep.subr.mxu0 %v63
  %578 = vmatpush1.msra.mxu0 %v62
  %579 = vmatprep.subr.mxu0 %v55
  %580 = vmatpush1.msra.mxu0 %v54
  %581 = vmatprep.subr.mxu0 %v47
  %582 = vmatpush1.msra.mxu0 %v46
  %583 = vmatprep.subr.mxu0 %v295
  %584 = vmatpush2.msra.mxu0 %v294
  %585 = vmatprep.subr.mxu0 %v287
  %586 = vmatpush2.msra.mxu0 %v286
  %587 = vmatprep.subr.mxu0 %v279
  %588 = vmatpush2.msra.mxu0 %v278
  %589 = vmatprep.subr.mxu0 %v271
  %590 = vmatpush2.msra.mxu0 %v270
  %591 = vmatprep.subr.mxu0 %v263
  %592 = vmatpush2.msra.mxu0 %v262
  %593 = vmatprep.subr.mxu0 %v255
  %594 = vmatpush2.msra.mxu0 %v254
  %595 = vmatprep.subr.mxu0 %v247
  %596 = vmatpush2.msra.mxu0 %v246
  %597 = vmatprep.subr.mxu0 %v239
  %598 = vmatpush2.msra.mxu0 %v238
  %599 = vmatprep.subr.mxu0 %v231
  %600 = vmatpush2.msra.mxu0 %v230
  %601 = vmatprep.subr.mxu0 %v223
  %602 = vmatpush2.msra.mxu0 %v222
  %603 = vmatprep.subr.mxu0 %v215
  %604 = vmatpush2.msra.mxu0 %v214
  %605 = vmatprep.subr.mxu0 %v207
  %606 = vmatpush2.msra.mxu0 %v206
  %607 = vmatprep.subr.mxu0 %v199
  %608 = vmatpush2.msra.mxu0 %v198
  %609 = vmatprep.subr.mxu0 %v191
  %610 = vmatpush2.msra.mxu0 %v190
  %611 = vmatprep.subr.mxu0 %v183
  %612 = vmatpush2.msra.mxu0 %v182
  %613 = vmatprep.subr.mxu0 %v175
  %614 = vmatpush2.msra.mxu0 %v174
  %615 = vmatprep.mubr.f32.mxu0 %v39
  %616 = vmatmul.mubr.f32.gmra.mxu0 %v38
  %v617 = vpop.f32.mrf.mxu0
  %v618 = vadd.f32 %v325, %v617
  %v619 = vpop.f32.mrf.mxu0
  %v620 = vadd.f32 %v329, %v619
  %621 = vdwg.mxu0
  %v622 = vmax.f32 %v405, 0.0
  %v623 = vmax.f32 %v407, 0.0
  %v624 = vmax.f32 %v476, 0.0
  %v625 = vmax.f32 %v478, 0.0
  %v626 = vmax.f32 %v547, 0.0
  %v627 = vmax.f32 %v549, 0.0
  %v628 = vmax.f32 %v618, 0.0
  %v629 = vmax.f32 %v620, 0.0
  %v630 = vld [vmem:[%s3] sm:$0xff]
  %v631 = vld [vmem:[%s3 + $0x8] sm:$0xff]
  %v632 = vld [vmem:[%s3 + $0x10] sm:$0xff]
  %v633 = vld [vmem:[%s3 + $0x18] sm:$0xff]
  %v634 = vld [vmem:[%s3 + $0x20] sm:$0xff]
  %v635 = vld [vmem:[%s3 + $0x28] sm:$0xff]
  %v636 = vld [vmem:[%s3 + $0x30] sm:$0xff]
  %v637 = vld [vmem:[%s3 + $0x38] sm:$0xff]
  %v638 = vld [vmem:[%s3 + $0x40] sm:$0xff]
  %v639 = vld [vmem:[%s3 + $0x48] sm:$0xff]
  %v640 = vld [vmem:[%s3 + $0x50] sm:$0xff]
  %v641 = vld [vmem:[%s3 + $0x58] sm:$0xff]
  %v642 = vld [vmem:[%s3 + $0x60] sm:$0xff]
  %v643 = vld [vmem:[%s3 + $0x68] sm:$0xff]
  %v644 = vld [vmem:[%s3 + $0x70] sm:$0xff]
  %v645 = vld [vmem:[%s3 + $0x78] sm:$0xff]
  %v646 = vld [vmem:[%s3 + $0x80] sm:$0xff]
  %v647 = vld [vmem:[%s3 + $0x88] sm:$0xff]
  %v648 = vld [vmem:[%s3 + $0x90] sm:$0xff]
  %v649 = vld [vmem:[%s3 + $0x98] sm:$0xff]
  %v650 = vld [vmem:[%s3 + $0xa0] sm:$0xff]
  %v651 = vld [vmem:[%s3 + $0xa8] sm:$0xff]
  %v652 = vld [vmem:[%s3 + $0xb0] sm:$0xff]
  %v653 = vld [vmem:[%s3 + $0xb8] sm:$0xff]
  %v654 = vld [vmem:[%s3 + $0xc0] sm:$0xff]
  %v655 = vld [vmem:[%s3 + $0xc8] sm:$0xff]
  %v656 = vld [vmem:[%s3 + $0xd0] sm:$0xff]
  %v657 = vld [vmem:[%s3 + $0xd8] sm:$0xff]
  %v658 = vld [vmem:[%s3 + $0xe0] sm:$0xff]
  %v659 = vld [vmem:[%s3 + $0xe8] sm:$0xff]
  %v660 = vld [vmem:[%s3 + $0xf0] sm:$0xff]
  %v661 = vld [vmem:[%s3 + $0xf8] sm:$0xff]
  %v662 = vld [vmem:[%s3 + $0x100] sm:$0xff]
  %v663 = vld [vmem:[%s3 + $0x108] sm:$0xff]
  %v664 = vld [vmem:[%s3 + $0x110] sm:$0xff]
  %v665 = vld [vmem:[%s3 + $0x118] sm:$0xff]
  %v666 = vld [vmem:[%s3 + $0x120] sm:$0xff]
  %v667 = vld [vmem:[%s3 + $0x128] sm:$0xff]
  %v668 = vld [vmem:[%s3 + $0x130] sm:$0xff]
  %v669 = vld [vmem:[%s3 + $0x138] sm:$0xff]
  %v670 = vld [vmem:[%s3 + $0x140] sm:$0xff]
  %v671 = vld [vmem:[%s3 + $0x148] sm:$0xff]
  %v672 = vld [vmem:[%s3 + $0x150] sm:$0xff]
  %v673 = vld [vmem:[%s3 + $0x158] sm:$0xff]
  %v674 = vld [vmem:[%s3 + $0x160] sm:$0xff]
  %v675 = vld [vmem:[%s3 + $0x168] sm:$0xff]
  %v676 = vld [vmem:[%s3 + $0x170] sm:$0xff]
  %v677 = vld [vmem:[%s3 + $0x178] sm:$0xff]
  %v678 = vld [vmem:[%s3 + $0x180] sm:$0xff]
  %v679 = vld [vmem:[%s3 + $0x188] sm:$0xff]
  %v680 = vld [vmem:[%s3 + $0x190] sm:$0xff]
  %v681 = vld [vmem:[%s3 + $0x198] sm:$0xff]
  %v682 = vld [vmem:[%s3 + $0x1a0] sm:$0xff]
  %v683 = vld [vmem:[%s3 + $0x1a8] sm:$0xff]
  %v684 = vld [vmem:[%s3 + $0x1b0] sm:$0xff]
  %v685 = vld [vmem:[%s3 + $0x1b8] sm:$0xff]
  %v686 = vld [vmem:[%s3 + $0x1c0] sm:$0xff]
  %v687 = vld [vmem:[%s3 + $0x1c8] sm:$0xff]
  %v688 = vld [vmem:[%s3 + $0x1d0] sm:$0xff]
  %v689 = vld [vmem:[%s3 + $0x1d8] sm:$0xff]
  %v690 = vld [vmem:[%s3 + $0x1e0] sm:$0xff]
  %v691 = vld [vmem:[%s3 + $0x1e8] sm:$0xff]
  %v692 = vld [vmem:[%s3 + $0x1f0] sm:$0xff]
  %v693 = vld [vmem:[%s3 + $0x1f8] sm:$0xff]
  %v694 = vld [vmem:[%s3 + $0x200] sm:$0xff]
  %v695 = vld [vmem:[%s3 + $0x208] sm:$0xff]
  %v696 = vld [vmem:[%s3 + $0x210] sm:$0xff]
  %v697 = vld [vmem:[%s3 + $0x218] sm:$0xff]
  %v698 = vld [vmem:[%s3 + $0x220] sm:$0xff]
  %v699 = vld [vmem:[%s3 + $0x228] sm:$0xff]
  %v700 = vld [vmem:[%s3 + $0x230] sm:$0xff]
  %v701 = vld [vmem:[%s3 + $0x238] sm:$0xff]
  %v702 = vld [vmem:[%s3 + $0x240] sm:$0xff]
  %v703 = vld [vmem:[%s3 + $0x248] sm:$0xff]
  %v704 = vld [vmem:[%s3 + $0x250] sm:$0xff]
  %v705 = vld [vmem:[%s3 + $0x258] sm:$0xff]
  %v706 = vld [vmem:[%s3 + $0x260] sm:$0xff]
  %v707 = vld [vmem:[%s3 + $0x268] sm:$0xff]
  %v708 = vld [vmem:[%s3 + $0x270] sm:$0xff]
  %v709 = vld [vmem:[%s3 + $0x278] sm:$0xff]
  %v710 = vld [vmem:[%s3 + $0x280] sm:$0xff]
  %v711 = vld [vmem:[%s3 + $0x288] sm:$0xff]
  %v712 = vld [vmem:[%s3 + $0x290] sm:$0xff]
  %v713 = vld [vmem:[%s3 + $0x298] sm:$0xff]
  %v714 = vld [vmem:[%s3 + $0x2a0] sm:$0xff]
  %v715 = vld [vmem:[%s3 + $0x2a8] sm:$0xff]
  %v716 = vld [vmem:[%s3 + $0x2b0] sm:$0xff]
  %v717 = vld [vmem:[%s3 + $0x2b8] sm:$0xff]
  %v718 = vld [vmem:[%s3 + $0x2c0] sm:$0xff]
  %v719 = vld [vmem:[%s3 + $0x2c8] sm:$0xff]
  %v720 = vld [vmem:[%s3 + $0x2d0] sm:$0xff]
  %v721 = vld [vmem:[%s3 + $0x2d8] sm:$0xff]
  %v722 = vld [vmem:[%s3 + $0x2e0] sm:$0xff]
  %v723 = vld [vmem:[%s3 + $0x2e8] sm:$0xff]
  %v724 = vld [vmem:[%s3 + $0x2f0] sm:$0xff]
  %v725 = vld [vmem:[%s3 + $0x2f8] sm:$0xff]
  %v726 = vld [vmem:[%s3 + $0x300] sm:$0xff]
  %v727 = vld [vmem:[%s3 + $0x308] sm:$0xff]
  %v728 = vld [vmem:[%s3 + $0x310] sm:$0xff]
  %v729 = vld [vmem:[%s3 + $0x318] sm:$0xff]
  %v730 = vld [vmem:[%s3 + $0x320] sm:$0xff]
  %v731 = vld [vmem:[%s3 + $0x328] sm:$0xff]
  %v732 = vld [vmem:[%s3 + $0x330] sm:$0xff]
  %v733 = vld [vmem:[%s3 + $0x338] sm:$0xff]
  %v734 = vld [vmem:[%s3 + $0x340] sm:$0xff]
  %v735 = vld [vmem:[%s3 + $0x348] sm:$0xff]
  %v736 = vld [vmem:[%s3 + $0x350] sm:$0xff]
  %v737 = vld [vmem:[%s3 + $0x358] sm:$0xff]
  %v738 = vld [vmem:[%s3 + $0x360] sm:$0xff]
  %v739 = vld [vmem:[%s3 + $0x368] sm:$0xff]
  %v740 = vld [vmem:[%s3 + $0x370] sm:$0xff]
  %v741 = vld [vmem:[%s3 + $0x378] sm:$0xff]
  %v742 = vld [vmem:[%s3 + $0x380] sm:$0xff]
  %v743 = vld [vmem:[%s3 + $0x388] sm:$0xff]
  %v744 = vld [vmem:[%s3 + $0x390] sm:$0xff]
  %v745 = vld [vmem:[%s3 + $0x398] sm:$0xff]
  %v746 = vld [vmem:[%s3 + $0x3a0] sm:$0xff]
  %v747 = vld [vmem:[%s3 + $0x3a8] sm:$0xff]
  %v748 = vld [vmem:[%s3 + $0x3b0] sm:$0xff]
  %v749 = vld [vmem:[%s3 + $0x3b8] sm:$0xff]
  %v750 = vld [vmem:[%s3 + $0x3c0] sm:$0xff]
  %v751 = vld [vmem:[%s3 + $0x3c8] sm:$0xff]
  %v752 = vld [vmem:[%s3 + $0x3d0] sm:$0xff]
  %v753 = vld [vmem:[%s3 + $0x3d8] sm:$0xff]
  %v754 = vld [vmem:[%s3 + $0x3e0] sm:$0xff]
  %v755 = vld [vmem:[%s3 + $0x3e8] sm:$0xff]
  %v756 = vld [vmem:[%s3 + $0x3f0] sm:$0xff]
  %v757 = vld [vmem:[%s3 + $0x3f8] sm:$0xff]
  %v758 = vld [vmem:[%s3 + $0x400] sm:$0xff]
  %v759 = vld [vmem:[%s3 + $0x408] sm:$0xff]
  %v760 = vld [vmem:[%s3 + $0x410] sm:$0xff]
  %v761 = vld [vmem:[%s3 + $0x418] sm:$0xff]
  %v762 = vld [vmem:[%s3 + $0x420] sm:$0xff]
  %v763 = vld [vmem:[%s3 + $0x428] sm:$0xff]
  %v764 = vld [vmem:[%s3 + $0x430] sm:$0xff]
  %v765 = vld [vmem:[%s3 + $0x438] sm:$0xff]
  %v766 = vld [vmem:[%s3 + $0x440] sm:$0xff]
  %v767 = vld [vmem:[%s3 + $0x448] sm:$0xff]
  %v768 = vld [vmem:[%s3 + $0x450] sm:$0xff]
  %v769 = vld [vmem:[%s3 + $0x458] sm:$0xff]
  %v770 = vld [vmem:[%s3 + $0x460] sm:$0xff]
  %v771 = vld [vmem:[%s3 + $0x468] sm:$0xff]
  %v772 = vld [vmem:[%s3 + $0x470] sm:$0xff]
  %v773 = vld [vmem:[%s3 + $0x478] sm:$0xff]
  %v774 = vld [vmem:[%s3 + $0x480] sm:$0xff]
  %v775 = vld [vmem:[%s3 + $0x488] sm:$0xff]
  %v776 = vld [vmem:[%s3 + $0x490] sm:$0xff]
  %v777 = vld [vmem:[%s3 + $0x498] sm:$0xff]
  %v778 = vld [vmem:[%s3 + $0x4a0] sm:$0xff]
  %v779 = vld [vmem:[%s3 + $0x4a8] sm:$0xff]
  %v780 = vld [vmem:[%s3 + $0x4b0] sm:$0xff]
  %v781 = vld [vmem:[%s3 + $0x4b8] sm:$0xff]
  %v782 = vld [vmem:[%s3 + $0x4c0] sm:$0xff]
  %v783 = vld [vmem:[%s3 + $0x4c8] sm:$0xff]
  %v784 = vld [vmem:[%s3 + $0x4d0] sm:$0xff]
  %v785 = vld [vmem:[%s3 + $0x4d8] sm:$0xff]
  %v786 = vld [vmem:[%s3 + $0x4e0] sm:$0xff]
  %v787 = vld [vmem:[%s3 + $0x4e8] sm:$0xff]
  %v788 = vld [vmem:[%s3 + $0x4f0] sm:$0xff]
  %v789 = vld [vmem:[%s3 + $0x4f8] sm:$0xff]
  %v790 = vld [vmem:[%s3 + $0x500] sm:$0xff]
  %v791 = vld [vmem:[%s3 + $0x508] sm:$0xff]
  %v792 = vld [vmem:[%s3 + $0x510] sm:$0xff]
  %v793 = vld [vmem:[%s3 + $0x518] sm:$0xff]
  %v794 = vld [vmem:[%s3 + $0x520] sm:$0xff]
  %v795 = vld [vmem:[%s3 + $0x528] sm:$0xff]
  %v796 = vld [vmem:[%s3 + $0x530] sm:$0xff]
  %v797 = vld [vmem:[%s3 + $0x538] sm:$0xff]
  %v798 = vld [vmem:[%s3 + $0x540] sm:$0xff]
  %v799 = vld [vmem:[%s3 + $0x548] sm:$0xff]
  %v800 = vld [vmem:[%s3 + $0x550] sm:$0xff]
  %v801 = vld [vmem:[%s3 + $0x558] sm:$0xff]
  %v802 = vld [vmem:[%s3 + $0x560] sm:$0xff]
  %v803 = vld [vmem:[%s3 + $0x568] sm:$0xff]
  %v804 = vld [vmem:[%s3 + $0x570] sm:$0xff]
  %v805 = vld [vmem:[%s3 + $0x578] sm:$0xff]
  %v806 = vld [vmem:[%s3 + $0x580] sm:$0xff]
  %v807 = vld [vmem:[%s3 + $0x588] sm:$0xff]
  %v808 = vld [vmem:[%s3 + $0x590] sm:$0xff]
  %v809 = vld [vmem:[%s3 + $0x598] sm:$0xff]
  %v810 = vld [vmem:[%s3 + $0x5a0] sm:$0xff]
  %v811 = vld [vmem:[%s3 + $0x5a8] sm:$0xff]
  %v812 = vld [vmem:[%s3 + $0x5b0] sm:$0xff]
  %v813 = vld [vmem:[%s3 + $0x5b8] sm:$0xff]
  %v814 = vld [vmem:[%s3 + $0x5c0] sm:$0xff]
  %v815 = vld [vmem:[%s3 + $0x5c8] sm:$0xff]
  %v816 = vld [vmem:[%s3 + $0x5d0] sm:$0xff]
  %v817 = vld [vmem:[%s3 + $0x5d8] sm:$0xff]
  %v818 = vld [vmem:[%s3 + $0x5e0] sm:$0xff]
  %v819 = vld [vmem:[%s3 + $0x5e8] sm:$0xff]
  %v820 = vld [vmem:[%s3 + $0x5f0] sm:$0xff]
  %v821 = vld [vmem:[%s3 + $0x5f8] sm:$0xff]
  %v822 = vld [vmem:[%s3 + $0x600] sm:$0xff]
  %v823 = vld [vmem:[%s3 + $0x608] sm:$0xff]
  %v824 = vld [vmem:[%s3 + $0x610] sm:$0xff]
  %v825 = vld [vmem:[%s3 + $0x618] sm:$0xff]
  %v826 = vld [vmem:[%s3 + $0x620] sm:$0xff]
  %v827 = vld [vmem:[%s3 + $0x628] sm:$0xff]
  %v828 = vld [vmem:[%s3 + $0x630] sm:$0xff]
  %v829 = vld [vmem:[%s3 + $0x638] sm:$0xff]
  %v830 = vld [vmem:[%s3 + $0x640] sm:$0xff]
  %v831 = vld [vmem:[%s3 + $0x648] sm:$0xff]
  %v832 = vld [vmem:[%s3 + $0x650] sm:$0xff]
  %v833 = vld [vmem:[%s3 + $0x658] sm:$0xff]
  %v834 = vld [vmem:[%s3 + $0x660] sm:$0xff]
  %v835 = vld [vmem:[%s3 + $0x668] sm:$0xff]
  %v836 = vld [vmem:[%s3 + $0x670] sm:$0xff]
  %v837 = vld [vmem:[%s3 + $0x678] sm:$0xff]
  %v838 = vld [vmem:[%s3 + $0x680] sm:$0xff]
  %v839 = vld [vmem:[%s3 + $0x688] sm:$0xff]
  %v840 = vld [vmem:[%s3 + $0x690] sm:$0xff]
  %v841 = vld [vmem:[%s3 + $0x698] sm:$0xff]
  %v842 = vld [vmem:[%s3 + $0x6a0] sm:$0xff]
  %v843 = vld [vmem:[%s3 + $0x6a8] sm:$0xff]
  %v844 = vld [vmem:[%s3 + $0x6b0] sm:$0xff]
  %v845 = vld [vmem:[%s3 + $0x6b8] sm:$0xff]
  %v846 = vld [vmem:[%s3 + $0x6c0] sm:$0xff]
  %v847 = vld [vmem:[%s3 + $0x6c8] sm:$0xff]
  %v848 = vld [vmem:[%s3 + $0x6d0] sm:$0xff]
  %v849 = vld [vmem:[%s3 + $0x6d8] sm:$0xff]
  %v850 = vld [vmem:[%s3 + $0x6e0] sm:$0xff]
  %v851 = vld [vmem:[%s3 + $0x6e8] sm:$0xff]
  %v852 = vld [vmem:[%s3 + $0x6f0] sm:$0xff]
  %v853 = vld [vmem:[%s3 + $0x6f8] sm:$0xff]
  %v854 = vld [vmem:[%s3 + $0x700] sm:$0xff]
  %v855 = vld [vmem:[%s3 + $0x708] sm:$0xff]
  %v856 = vld [vmem:[%s3 + $0x710] sm:$0xff]
  %v857 = vld [vmem:[%s3 + $0x718] sm:$0xff]
  %v858 = vld [vmem:[%s3 + $0x720] sm:$0xff]
  %v859 = vld [vmem:[%s3 + $0x728] sm:$0xff]
  %v860 = vld [vmem:[%s3 + $0x730] sm:$0xff]
  %v861 = vld [vmem:[%s3 + $0x738] sm:$0xff]
  %v862 = vld [vmem:[%s3 + $0x740] sm:$0xff]
  %v863 = vld [vmem:[%s3 + $0x748] sm:$0xff]
  %v864 = vld [vmem:[%s3 + $0x750] sm:$0xff]
  %v865 = vld [vmem:[%s3 + $0x758] sm:$0xff]
  %v866 = vld [vmem:[%s3 + $0x760] sm:$0xff]
  %v867 = vld [vmem:[%s3 + $0x768] sm:$0xff]
  %v868 = vld [vmem:[%s3 + $0x770] sm:$0xff]
  %v869 = vld [vmem:[%s3 + $0x778] sm:$0xff]
  %v870 = vld [vmem:[%s3 + $0x780] sm:$0xff]
  %v871 = vld [vmem:[%s3 + $0x788] sm:$0xff]
  %v872 = vld [vmem:[%s3 + $0x790] sm:$0xff]
  %v873 = vld [vmem:[%s3 + $0x798] sm:$0xff]
  %v874 = vld [vmem:[%s3 + $0x7a0] sm:$0xf]
  %v875 = vld [vmem:[%s3 + $0x7a8] sm:$0xf]
  %vm876 = vcmask 687104
  %v878 = vsel %vm876, %v629, 0
  %vm880 = vcmask 1043456
  %v882 = vsel %vm880, %v874, 0
  %v885 = vsel %vm880, %v875, 0
  %887 = vmatprep.subr.mxu0 %v661
  %888 = vmatpush1.msra.mxu0 %v660
  %889 = vmatprep.subr.mxu0 %v659
  %890 = vmatpush1.msra.mxu0 %v658
  %891 = vmatprep.subr.mxu0 %v657
  %892 = vmatpush1.msra.mxu0 %v656
  %893 = vmatprep.subr.mxu0 %v655
  %894 = vmatpush1.msra.mxu0 %v654
  %895 = vmatprep.subr.mxu0 %v653
  %896 = vmatpush1.msra.mxu0 %v652
  %897 = vmatprep.subr.mxu0 %v651
  %898 = vmatpush1.msra.mxu0 %v650
  %899 = vmatprep.subr.mxu0 %v649
  %900 = vmatpush1.msra.mxu0 %v648
  %901 = vmatprep.subr.mxu0 %v647
  %902 = vmatpush1.msra.mxu0 %v646
  %903 = vmatprep.subr.mxu0 %v645
  %904 = vmatpush1.msra.mxu0 %v644
  %905 = vmatprep.subr.mxu0 %v643
  %906 = vmatpush1.msra.mxu0 %v642
  %907 = vmatprep.subr.mxu0 %v641
  %908 = vmatpush1.msra.mxu0 %v640
  %909 = vmatprep.subr.mxu0 %v639
  %910 = vmatpush1.msra.mxu0 %v638
  %911 = vmatprep.subr.mxu0 %v637
  %912 = vmatpush1.msra.mxu0 %v636
  %913 = vmatprep.subr.mxu0 %v635
  %914 = vmatpush1.msra.mxu0 %v634
  %915 = vmatprep.subr.mxu0 %v633
  %916 = vmatpush1.msra.mxu0 %v632
  %917 = vmatprep.subr.mxu0 %v631
  %918 = vmatpush1.msra.mxu0 %v630
  %919 = vmatprep.subr.mxu0 %v693
  %920 = vmatpush2.msra.mxu0 %v692
  %921 = vmatprep.subr.mxu0 %v691
  %922 = vmatpush2.msra.mxu0 %v690
  %923 = vmatprep.subr.mxu0 %v689
  %924 = vmatpush2.msra.mxu0 %v688
  %925 = vmatprep.subr.mxu0 %v687
  %926 = vmatpush2.msra.mxu0 %v686
  %927 = vmatprep.subr.mxu0 %v685
  %928 = vmatpush2.msra.mxu0 %v684
  %929 = vmatprep.subr.mxu0 %v683
  %930 = vmatpush2.msra.mxu0 %v682
  %931 = vmatprep.subr.mxu0 %v681
  %932 = vmatpush2.msra.mxu0 %v680
  %933 = vmatprep.subr.mxu0 %v679
  %934 = vmatpush2.msra.mxu0 %v678
  %935 = vmatprep.subr.mxu0 %v677
  %936 = vmatpush2.msra.mxu0 %v676
  %937 = vmatprep.subr.mxu0 %v675
  %938 = vmatpush2.msra.mxu0 %v674
  %939 = vmatprep.subr.mxu0 %v673
  %940 = vmatpush2.msra.mxu0 %v672
  %941 = vmatprep.subr.mxu0 %v671
  %942 = vmatpush2.msra.mxu0 %v670
  %943 = vmatprep.subr.mxu0 %v669
  %944 = vmatpush2.msra.mxu0 %v668
  %945 = vmatprep.subr.mxu0 %v667
  %946 = vmatpush2.msra.mxu0 %v666
  %947 = vmatprep.subr.mxu0 %v665
  %948 = vmatpush2.msra.mxu0 %v664
  %949 = vmatprep.subr.mxu0 %v663
  %950 = vmatpush2.msra.mxu0 %v662
  %951 = vmatprep.mubr.f32.mxu0 %v623
  %952 = vmatmul.mubr.f32.gmra.mxu0 %v622
  %v953 = vpop.f32.mrf.mxu0
  %v954 = vadd.f32 0.0, %v953
  %v955 = vpop.f32.mrf.mxu0
  %v956 = vadd.f32 0.0, %v955
  %957 = vdwg.mxu0
  %958 = vmatprep.subr.mxu0 %v725
  %959 = vmatpush1.msra.mxu0 %v724
  %960 = vmatprep.subr.mxu0 %v723
  %961 = vmatpush1.msra.mxu0 %v722
  %962 = vmatprep.subr.mxu0 %v721
  %963 = vmatpush1.msra.mxu0 %v720
  %964 = vmatprep.subr.mxu0 %v719
  %965 = vmatpush1.msra.mxu0 %v718
  %966 = vmatprep.subr.mxu0 %v717
  %967 = vmatpush1.msra.mxu0 %v716
  %968 = vmatprep.subr.mxu0 %v715
  %969 = vmatpush1.msra.mxu0 %v714
  %970 = vmatprep.subr.mxu0 %v713
  %971 = vmatpush1.msra.mxu0 %v712
  %972 = vmatprep.subr.mxu0 %v711
  %973 = vmatpush1.msra.mxu0 %v710
  %974 = vmatprep.subr.mxu0 %v709
  %975 = vmatpush1.msra.mxu0 %v708
  %976 = vmatprep.subr.mxu0 %v707
  %977 = vmatpush1.msra.mxu0 %v706
  %978 = vmatprep.subr.mxu0 %v705
  %979 = vmatpush1.msra.mxu0 %v704
  %980 = vmatprep.subr.mxu0 %v703
  %981 = vmatpush1.msra.mxu0 %v702
  %982 = vmatprep.subr.mxu0 %v701
  %983 = vmatpush1.msra.mxu0 %v700
  %984 = vmatprep.subr.mxu0 %v699
  %985 = vmatpush1.msra.mxu0 %v698
  %986 = vmatprep.subr.mxu0 %v697
  %987 = vmatpush1.msra.mxu0 %v696
  %988 = vmatprep.subr.mxu0 %v695
  %989 = vmatpush1.msra.mxu0 %v694
  %990 = vmatprep.subr.mxu0 %v757
  %991 = vmatpush2.msra.mxu0 %v756
  %992 = vmatprep.subr.mxu0 %v755
  %993 = vmatpush2.msra.mxu0 %v754
  %994 = vmatprep.subr.mxu0 %v753
  %995 = vmatpush2.msra.mxu0 %v752
  %996 = vmatprep.subr.mxu0 %v751
  %997 = vmatpush2.msra.mxu0 %v750
  %998 = vmatprep.subr.mxu0 %v749
  %999 = vmatpush2.msra.mxu0 %v748
  %1000 = vmatprep.subr.mxu0 %v747
  %1001 = vmatpush2.msra.mxu0 %v746
  %1002 = vmatprep.subr.mxu0 %v745
  %1003 = vmatpush2.msra.mxu0 %v744
  %1004 = vmatprep.subr.mxu0 %v743
  %1005 = vmatpush2.msra.mxu0 %v742
  %1006 = vmatprep.subr.mxu0 %v741
  %1007 = vmatpush2.msra.mxu0 %v740
  %1008 = vmatprep.subr.mxu0 %v739
  %1009 = vmatpush2.msra.mxu0 %v738
  %1010 = vmatprep.subr.mxu0 %v737
  %1011 = vmatpush2.msra.mxu0 %v736
  %1012 = vmatprep.subr.mxu0 %v735
  %1013 = vmatpush2.msra.mxu0 %v734
  %1014 = vmatprep.subr.mxu0 %v733
  %1015 = vmatpush2.msra.mxu0 %v732
  %1016 = vmatprep.subr.mxu0 %v731
  %1017 = vmatpush2.msra.mxu0 %v730
  %1018 = vmatprep.subr.mxu0 %v729
  %1019 = vmatpush2.msra.mxu0 %v728
  %1020 = vmatprep.subr.mxu0 %v727
  %1021 = vmatpush2.msra.mxu0 %v726
  %1022 = vmatprep.mubr.f32.mxu0 %v625
  %1023 = vmatmul.mubr.f32.gmra.mxu0 %v624
  %v1024 = vpop.f32.mrf.mxu0
  %v1025 = vadd.f32 %v954, %v1024
  %v1026 = vpop.f32.mrf.mxu0
  %v1027 = vadd.f32 %v956, %v1026
  %1028 = vdwg.mxu0
  %1029 = vmatprep.subr.mxu0 %v789
  %1030 = vmatpush1.msra.mxu0 %v788
  %1031 = vmatprep.subr.mxu0 %v787
  %1032 = vmatpush1.msra.mxu0 %v786
  %1033 = vmatprep.subr.mxu0 %v785
  %1034 = vmatpush1.msra.mxu0 %v784
  %1035 = vmatprep.subr.mxu0 %v783
  %1036 = vmatpush1.msra.mxu0 %v782
  %1037 = vmatprep.subr.mxu0 %v781
  %1038 = vmatpush1.msra.mxu0 %v780
  %1039 = vmatprep.subr.mxu0 %v779
  %1040 = vmatpush1.msra.mxu0 %v778
  %1041 = vmatprep.subr.mxu0 %v777
  %1042 = vmatpush1.msra.mxu0 %v776
  %1043 = vmatprep.subr.mxu0 %v775
  %1044 = vmatpush1.msra.mxu0 %v774
  %1045 = vmatprep.subr.mxu0 %v773
  %1046 = vmatpush1.msra.mxu0 %v772
  %1047 = vmatprep.subr.mxu0 %v771
  %1048 = vmatpush1.msra.mxu0 %v770
  %1049 = vmatprep.subr.mxu0 %v769
  %1050 = vmatpush1.msra.mxu0 %v768
  %1051 = vmatprep.subr.mxu0 %v767
  %1052 = vmatpush1.msra.mxu0 %v766
  %1053 = vmatprep.subr.mxu0 %v765
  %1054 = vmatpush1.msra.mxu0 %v764
  %1055 = vmatprep.subr.mxu0 %v763
  %1056 = vmatpush1.msra.mxu0 %v762
  %1057 = vmatprep.subr.mxu0 %v761
  %1058 = vmatpush1.msra.mxu0 %v760
  %1059 = vmatprep.subr.mxu0 %v759
  %1060 = vmatpush1.msra.mxu0 %v758
  %1061 = vmatprep.subr.mxu0 %v821
  %1062 = vmatpush2.msra.mxu0 %v820
  %1063 = vmatprep.subr.mxu0 %v819
  %1064 = vmatpush2.msra.mxu0 %v818
  %1065 = vmatprep.subr.mxu0 %v817
  %1066 = vmatpush2.msra.mxu0 %v816
  %1067 = vmatprep.subr.mxu0 %v815
  %1068 = vmatpush2.msra.mxu0 %v814
  %1069 = vmatprep.subr.mxu0 %v813
  %1070 = vmatpush2.msra.mxu0 %v812
  %1071 = vmatprep.subr.mxu0 %v811
  %1072 = vmatpush2.msra.mxu0 %v810
  %1073 = vmatprep.subr.mxu0 %v809
  %1074 = vmatpush2.msra.mxu0 %v808
  %1075 = vmatprep.subr.mxu0 %v807
  %1076 = vmatpush2.msra.mxu0 %v806
  %1077 = vmatprep.subr.mxu0 %v805
  %1078 = vmatpush2.msra.mxu0 %v804
  %1079 = vmatprep.subr.mxu0 %v803
  %1080 = vmatpush2.msra.mxu0 %v802
  %1081 = vmatprep.subr.mxu0 %v801
  %1082 = vmatpush2.msra.mxu0 %v800
  %1083 = vmatprep.subr.mxu0 %v799
  %1084 = vmatpush2.msra.mxu0 %v798
  %1085 = vmatprep.subr.mxu0 %v797
  %1086 = vmatpush2.msra.mxu0 %v796
  %1087 = vmatprep.subr.mxu0 %v795
  %1088 = vmatpush2.msra.mxu0 %v794
  %1089 = vmatprep.subr.mxu0 %v793
  %1090 = vmatpush2.msra.mxu0 %v792
  %1091 = vmatprep.subr.mxu0 %v791
  %1092 = vmatpush2.msra.mxu0 %v790
  %1093 = vmatprep.mubr.f32.mxu0 %v627
  %1094 = vmatmul.mubr.f32.gmra.mxu0 %v626
  %v1095 = vpop.f32.mrf.mxu0
  %v1096 = vadd.f32 %v1025, %v1095
  %v1097 = vpop.f32.mrf.mxu0
  %v1098 = vadd.f32 %v1027, %v1097
  %1099 = vdwg.mxu0
  %1100 = vmatprep.subr.mxu0 %v853
  %1101 = vmatpush1.msra.mxu0 %v852
  %1102 = vmatprep.subr.mxu0 %v851
  %1103 = vmatpush1.msra.mxu0 %v850
  %1104 = vmatprep.subr.mxu0 %v849
  %1105 = vmatpush1.msra.mxu0 %v848
  %1106 = vmatprep.subr.mxu0 %v847
  %1107 = vmatpush1.msra.mxu0 %v846
  %1108 = vmatprep.subr.mxu0 %v845
  %1109 = vmatpush1.msra.mxu0 %v844
  %1110 = vmatprep.subr.mxu0 %v843
  %1111 = vmatpush1.msra.mxu0 %v842
  %1112 = vmatprep.subr.mxu0 %v841
  %1113 = vmatpush1.msra.mxu0 %v840
  %1114 = vmatprep.subr.mxu0 %v839
  %1115 = vmatpush1.msra.mxu0 %v838
  %1116 = vmatprep.subr.mxu0 %v837
  %1117 = vmatpush1.msra.mxu0 %v836
  %1118 = vmatprep.subr.mxu0 %v835
  %1119 = vmatpush1.msra.mxu0 %v834
  %1120 = vmatprep.subr.mxu0 %v833
  %1121 = vmatpush1.msra.mxu0 %v832
  %1122 = vmatprep.subr.mxu0 %v831
  %1123 = vmatpush1.msra.mxu0 %v830
  %1124 = vmatprep.subr.mxu0 %v829
  %1125 = vmatpush1.msra.mxu0 %v828
  %1126 = vmatprep.subr.mxu0 %v827
  %1127 = vmatpush1.msra.mxu0 %v826
  %1128 = vmatprep.subr.mxu0 %v825
  %1129 = vmatpush1.msra.mxu0 %v824
  %1130 = vmatprep.subr.mxu0 %v823
  %1131 = vmatpush1.msra.mxu0 %v822
  %1132 = vmatprep.subr.mxu0 0.0
  %1133 = vmatpush2.msra.mxu0 0.0
  %1134 = vmatprep.subr.mxu0 0.0
  %1135 = vmatpush2.msra.mxu0 0.0
  %1136 = vmatprep.subr.mxu0 0.0
  %1137 = vmatpush2.msra.mxu0 0.0
  %1138 = vmatprep.subr.mxu0 0.0
  %1139 = vmatpush2.msra.mxu0 0.0
  %1140 = vmatprep.subr.mxu0 0.0
  %1141 = vmatpush2.msra.mxu0 0.0
  %1142 = vmatprep.subr.mxu0 %v885
  %1143 = vmatpush2.msra.mxu0 %v882
  %1144 = vmatprep.subr.mxu0 %v873
  %1145 = vmatpush2.msra.mxu0 %v872
  %1146 = vmatprep.subr.mxu0 %v871
  %1147 = vmatpush2.msra.mxu0 %v870
  %1148 = vmatprep.subr.mxu0 %v869
  %1149 = vmatpush2.msra.mxu0 %v868
  %1150 = vmatprep.subr.mxu0 %v867
  %1151 = vmatpush2.msra.mxu0 %v866
  %1152 = vmatprep.subr.mxu0 %v865
  %1153 = vmatpush2.msra.mxu0 %v864
  %1154 = vmatprep.subr.mxu0 %v863
  %1155 = vmatpush2.msra.mxu0 %v862
  %1156 = vmatprep.subr.mxu0 %v861
  %1157 = vmatpush2.msra.mxu0 %v860
  %1158 = vmatprep.subr.mxu0 %v859
  %1159 = vmatpush2.msra.mxu0 %v858
  %1160 = vmatprep.subr.mxu0 %v857
  %1161 = vmatpush2.msra.mxu0 %v856
  %1162 = vmatprep.subr.mxu0 %v855
  %1163 = vmatpush2.msra.mxu0 %v854
  %1164 = vmatprep.mubr.f32.mxu0 %v878
  %1165 = vmatmul.mubr.f32.gmra.mxu0 %v628
  %v1166 = vpop.f32.mrf.mxu0
  %v1167 = vadd.f32 %v1096, %v1166
  %v1168 = vpop.f32.mrf.mxu0
  %v1169 = vadd.f32 %v1098, %v1168
  %1170 = vdwg.mxu0
  %s1171 = scalar_lea.vmem %s3, 1968
  %v1172 = vld [vmem:[%s1171] sm:$0xff]
  %v1173 = vld [vmem:[%s1171 + $0x8] sm:$0xff]
  %v1174 = vld [vmem:[%s1171 + $0x10] sm:$0xff]
  %v1175 = vld [vmem:[%s1171 + $0x18] sm:$0xff]
  %v1176 = vld [vmem:[%s1171 + $0x20] sm:$0xff]
  %v1177 = vld [vmem:[%s1171 + $0x28] sm:$0xff]
  %v1178 = vld [vmem:[%s1171 + $0x30] sm:$0xff]
  %v1179 = vld [vmem:[%s1171 + $0x38] sm:$0xff]
  %v1180 = vld [vmem:[%s1171 + $0x40] sm:$0xff]
  %v1181 = vld [vmem:[%s1171 + $0x48] sm:$0xff]
  %v1182 = vld [vmem:[%s1171 + $0x50] sm:$0xff]
  %v1183 = vld [vmem:[%s1171 + $0x58] sm:$0xff]
  %v1184 = vld [vmem:[%s1171 + $0x60] sm:$0xff]
  %v1185 = vld [vmem:[%s1171 + $0x68] sm:$0xff]
  %v1186 = vld [vmem:[%s1171 + $0x70] sm:$0xff]
  %v1187 = vld [vmem:[%s1171 + $0x78] sm:$0xff]
  %v1188 = vld [vmem:[%s1171 + $0x80] sm:$0xff]
  %v1189 = vld [vmem:[%s1171 + $0x88] sm:$0xff]
  %v1190 = vld [vmem:[%s1171 + $0x90] sm:$0xff]
  %v1191 = vld [vmem:[%s1171 + $0x98] sm:$0xff]
  %v1192 = vld [vmem:[%s1171 + $0xa0] sm:$0xff]
  %v1193 = vld [vmem:[%s1171 + $0xa8] sm:$0xff]
  %v1194 = vld [vmem:[%s1171 + $0xb0] sm:$0xff]
  %v1195 = vld [vmem:[%s1171 + $0xb8] sm:$0xff]
  %v1196 = vld [vmem:[%s1171 + $0xc0] sm:$0xff]
  %v1197 = vld [vmem:[%s1171 + $0xc8] sm:$0xff]
  %v1198 = vld [vmem:[%s1171 + $0xd0] sm:$0xff]
  %v1199 = vld [vmem:[%s1171 + $0xd8] sm:$0xff]
  %v1200 = vld [vmem:[%s1171 + $0xe0] sm:$0xff]
  %v1201 = vld [vmem:[%s1171 + $0xe8] sm:$0xff]
  %v1202 = vld [vmem:[%s1171 + $0xf0] sm:$0xff]
  %v1203 = vld [vmem:[%s1171 + $0xf8] sm:$0xff]
  %v1204 = vld [vmem:[%s1171 + $0x100] sm:$0xff]
  %v1205 = vld [vmem:[%s1171 + $0x108] sm:$0xff]
  %v1206 = vld [vmem:[%s1171 + $0x110] sm:$0xff]
  %v1207 = vld [vmem:[%s1171 + $0x118] sm:$0xff]
  %v1208 = vld [vmem:[%s1171 + $0x120] sm:$0xff]
  %v1209 = vld [vmem:[%s1171 + $0x128] sm:$0xff]
  %v1210 = vld [vmem:[%s1171 + $0x130] sm:$0xff]
  %v1211 = vld [vmem:[%s1171 + $0x138] sm:$0xff]
  %v1212 = vld [vmem:[%s1171 + $0x140] sm:$0xff]
  %v1213 = vld [vmem:[%s1171 + $0x148] sm:$0xff]
  %v1214 = vld [vmem:[%s1171 + $0x150] sm:$0xff]
  %v1215 = vld [vmem:[%s1171 + $0x158] sm:$0xff]
  %v1216 = vld [vmem:[%s1171 + $0x160] sm:$0xff]
  %v1217 = vld [vmem:[%s1171 + $0x168] sm:$0xff]
  %v1218 = vld [vmem:[%s1171 + $0x170] sm:$0xff]
  %v1219 = vld [vmem:[%s1171 + $0x178] sm:$0xff]
  %v1220 = vld [vmem:[%s1171 + $0x180] sm:$0xff]
  %v1221 = vld [vmem:[%s1171 + $0x188] sm:$0xff]
  %v1222 = vld [vmem:[%s1171 + $0x190] sm:$0xff]
  %v1223 = vld [vmem:[%s1171 + $0x198] sm:$0xff]
  %v1224 = vld [vmem:[%s1171 + $0x1a0] sm:$0xff]
  %v1225 = vld [vmem:[%s1171 + $0x1a8] sm:$0xff]
  %v1226 = vld [vmem:[%s1171 + $0x1b0] sm:$0xff]
  %v1227 = vld [vmem:[%s1171 + $0x1b8] sm:$0xff]
  %v1228 = vld [vmem:[%s1171 + $0x1c0] sm:$0xff]
  %v1229 = vld [vmem:[%s1171 + $0x1c8] sm:$0xff]
  %v1230 = vld [vmem:[%s1171 + $0x1d0] sm:$0xff]
  %v1231 = vld [vmem:[%s1171 + $0x1d8] sm:$0xff]
  %v1232 = vld [vmem:[%s1171 + $0x1e0] sm:$0xff]
  %v1233 = vld [vmem:[%s1171 + $0x1e8] sm:$0xff]
  %v1234 = vld [vmem:[%s1171 + $0x1f0] sm:$0xff]
  %v1235 = vld [vmem:[%s1171 + $0x1f8] sm:$0xff]
  %v1236 = vld [vmem:[%s1171 + $0x200] sm:$0xff]
  %v1237 = vld [vmem:[%s1171 + $0x208] sm:$0xff]
  %v1238 = vld [vmem:[%s1171 + $0x210] sm:$0xff]
  %v1239 = vld [vmem:[%s1171 + $0x218] sm:$0xff]
  %v1240 = vld [vmem:[%s1171 + $0x220] sm:$0xff]
  %v1241 = vld [vmem:[%s1171 + $0x228] sm:$0xff]
  %v1242 = vld [vmem:[%s1171 + $0x230] sm:$0xff]
  %v1243 = vld [vmem:[%s1171 + $0x238] sm:$0xff]
  %v1244 = vld [vmem:[%s1171 + $0x240] sm:$0xff]
  %v1245 = vld [vmem:[%s1171 + $0x248] sm:$0xff]
  %v1246 = vld [vmem:[%s1171 + $0x250] sm:$0xff]
  %v1247 = vld [vmem:[%s1171 + $0x258] sm:$0xff]
  %v1248 = vld [vmem:[%s1171 + $0x260] sm:$0xff]
  %v1249 = vld [vmem:[%s1171 + $0x268] sm:$0xff]
  %v1250 = vld [vmem:[%s1171 + $0x270] sm:$0xff]
  %v1251 = vld [vmem:[%s1171 + $0x278] sm:$0xff]
  %v1252 = vld [vmem:[%s1171 + $0x280] sm:$0xff]
  %v1253 = vld [vmem:[%s1171 + $0x288] sm:$0xff]
  %v1254 = vld [vmem:[%s1171 + $0x290] sm:$0xff]
  %v1255 = vld [vmem:[%s1171 + $0x298] sm:$0xff]
  %v1256 = vld [vmem:[%s1171 + $0x2a0] sm:$0xff]
  %v1257 = vld [vmem:[%s1171 + $0x2a8] sm:$0xff]
  %v1258 = vld [vmem:[%s1171 + $0x2b0] sm:$0xff]
  %v1259 = vld [vmem:[%s1171 + $0x2b8] sm:$0xff]
  %v1260 = vld [vmem:[%s1171 + $0x2c0] sm:$0xff]
  %v1261 = vld [vmem:[%s1171 + $0x2c8] sm:$0xff]
  %v1262 = vld [vmem:[%s1171 + $0x2d0] sm:$0xff]
  %v1263 = vld [vmem:[%s1171 + $0x2d8] sm:$0xff]
  %v1264 = vld [vmem:[%s1171 + $0x2e0] sm:$0xff]
  %v1265 = vld [vmem:[%s1171 + $0x2e8] sm:$0xff]
  %v1266 = vld [vmem:[%s1171 + $0x2f0] sm:$0xff]
  %v1267 = vld [vmem:[%s1171 + $0x2f8] sm:$0xff]
  %v1268 = vld [vmem:[%s1171 + $0x300] sm:$0xff]
  %v1269 = vld [vmem:[%s1171 + $0x308] sm:$0xff]
  %v1270 = vld [vmem:[%s1171 + $0x310] sm:$0xff]
  %v1271 = vld [vmem:[%s1171 + $0x318] sm:$0xff]
  %v1272 = vld [vmem:[%s1171 + $0x320] sm:$0xff]
  %v1273 = vld [vmem:[%s1171 + $0x328] sm:$0xff]
  %v1274 = vld [vmem:[%s1171 + $0x330] sm:$0xff]
  %v1275 = vld [vmem:[%s1171 + $0x338] sm:$0xff]
  %v1276 = vld [vmem:[%s1171 + $0x340] sm:$0xff]
  %v1277 = vld [vmem:[%s1171 + $0x348] sm:$0xff]
  %v1278 = vld [vmem:[%s1171 + $0x350] sm:$0xff]
  %v1279 = vld [vmem:[%s1171 + $0x358] sm:$0xff]
  %v1280 = vld [vmem:[%s1171 + $0x360] sm:$0xff]
  %v1281 = vld [vmem:[%s1171 + $0x368] sm:$0xff]
  %v1282 = vld [vmem:[%s1171 + $0x370] sm:$0xff]
  %v1283 = vld [vmem:[%s1171 + $0x378] sm:$0xff]
  %v1284 = vld [vmem:[%s1171 + $0x380] sm:$0xff]
  %v1285 = vld [vmem:[%s1171 + $0x388] sm:$0xff]
  %v1286 = vld [vmem:[%s1171 + $0x390] sm:$0xff]
  %v1287 = vld [vmem:[%s1171 + $0x398] sm:$0xff]
  %v1288 = vld [vmem:[%s1171 + $0x3a0] sm:$0xff]
  %v1289 = vld [vmem:[%s1171 + $0x3a8] sm:$0xff]
  %v1290 = vld [vmem:[%s1171 + $0x3b0] sm:$0xff]
  %v1291 = vld [vmem:[%s1171 + $0x3b8] sm:$0xff]
  %v1292 = vld [vmem:[%s1171 + $0x3c0] sm:$0xff]
  %v1293 = vld [vmem:[%s1171 + $0x3c8] sm:$0xff]
  %v1294 = vld [vmem:[%s1171 + $0x3d0] sm:$0xff]
  %v1295 = vld [vmem:[%s1171 + $0x3d8] sm:$0xff]
  %v1296 = vld [vmem:[%s1171 + $0x3e0] sm:$0xff]
  %v1297 = vld [vmem:[%s1171 + $0x3e8] sm:$0xff]
  %v1298 = vld [vmem:[%s1171 + $0x3f0] sm:$0xff]
  %v1299 = vld [vmem:[%s1171 + $0x3f8] sm:$0xff]
  %v1300 = vld [vmem:[%s1171 + $0x400] sm:$0xff]
  %v1301 = vld [vmem:[%s1171 + $0x408] sm:$0xff]
  %v1302 = vld [vmem:[%s1171 + $0x410] sm:$0xff]
  %v1303 = vld [vmem:[%s1171 + $0x418] sm:$0xff]
  %v1304 = vld [vmem:[%s1171 + $0x420] sm:$0xff]
  %v1305 = vld [vmem:[%s1171 + $0x428] sm:$0xff]
  %v1306 = vld [vmem:[%s1171 + $0x430] sm:$0xff]
  %v1307 = vld [vmem:[%s1171 + $0x438] sm:$0xff]
  %v1308 = vld [vmem:[%s1171 + $0x440] sm:$0xff]
  %v1309 = vld [vmem:[%s1171 + $0x448] sm:$0xff]
  %v1310 = vld [vmem:[%s1171 + $0x450] sm:$0xff]
  %v1311 = vld [vmem:[%s1171 + $0x458] sm:$0xff]
  %v1312 = vld [vmem:[%s1171 + $0x460] sm:$0xff]
  %v1313 = vld [vmem:[%s1171 + $0x468] sm:$0xff]
  %v1314 = vld [vmem:[%s1171 + $0x470] sm:$0xff]
  %v1315 = vld [vmem:[%s1171 + $0x478] sm:$0xff]
  %v1316 = vld [vmem:[%s1171 + $0x480] sm:$0xff]
  %v1317 = vld [vmem:[%s1171 + $0x488] sm:$0xff]
  %v1318 = vld [vmem:[%s1171 + $0x490] sm:$0xff]
  %v1319 = vld [vmem:[%s1171 + $0x498] sm:$0xff]
  %v1320 = vld [vmem:[%s1171 + $0x4a0] sm:$0xff]
  %v1321 = vld [vmem:[%s1171 + $0x4a8] sm:$0xff]
  %v1322 = vld [vmem:[%s1171 + $0x4b0] sm:$0xff]
  %v1323 = vld [vmem:[%s1171 + $0x4b8] sm:$0xff]
  %v1324 = vld [vmem:[%s1171 + $0x4c0] sm:$0xff]
  %v1325 = vld [vmem:[%s1171 + $0x4c8] sm:$0xff]
  %v1326 = vld [vmem:[%s1171 + $0x4d0] sm:$0xff]
  %v1327 = vld [vmem:[%s1171 + $0x4d8] sm:$0xff]
  %v1328 = vld [vmem:[%s1171 + $0x4e0] sm:$0xff]
  %v1329 = vld [vmem:[%s1171 + $0x4e8] sm:$0xff]
  %v1330 = vld [vmem:[%s1171 + $0x4f0] sm:$0xff]
  %v1331 = vld [vmem:[%s1171 + $0x4f8] sm:$0xff]
  %v1332 = vld [vmem:[%s1171 + $0x500] sm:$0xff]
  %v1333 = vld [vmem:[%s1171 + $0x508] sm:$0xff]
  %v1334 = vld [vmem:[%s1171 + $0x510] sm:$0xff]
  %v1335 = vld [vmem:[%s1171 + $0x518] sm:$0xff]
  %v1336 = vld [vmem:[%s1171 + $0x520] sm:$0xff]
  %v1337 = vld [vmem:[%s1171 + $0x528] sm:$0xff]
  %v1338 = vld [vmem:[%s1171 + $0x530] sm:$0xff]
  %v1339 = vld [vmem:[%s1171 + $0x538] sm:$0xff]
  %v1340 = vld [vmem:[%s1171 + $0x540] sm:$0xff]
  %v1341 = vld [vmem:[%s1171 + $0x548] sm:$0xff]
  %v1342 = vld [vmem:[%s1171 + $0x550] sm:$0xff]
  %v1343 = vld [vmem:[%s1171 + $0x558] sm:$0xff]
  %v1344 = vld [vmem:[%s1171 + $0x560] sm:$0xff]
  %v1345 = vld [vmem:[%s1171 + $0x568] sm:$0xff]
  %v1346 = vld [vmem:[%s1171 + $0x570] sm:$0xff]
  %v1347 = vld [vmem:[%s1171 + $0x578] sm:$0xff]
  %v1348 = vld [vmem:[%s1171 + $0x580] sm:$0xff]
  %v1349 = vld [vmem:[%s1171 + $0x588] sm:$0xff]
  %v1350 = vld [vmem:[%s1171 + $0x590] sm:$0xff]
  %v1351 = vld [vmem:[%s1171 + $0x598] sm:$0xff]
  %v1352 = vld [vmem:[%s1171 + $0x5a0] sm:$0xff]
  %v1353 = vld [vmem:[%s1171 + $0x5a8] sm:$0xff]
  %v1354 = vld [vmem:[%s1171 + $0x5b0] sm:$0xff]
  %v1355 = vld [vmem:[%s1171 + $0x5b8] sm:$0xff]
  %v1356 = vld [vmem:[%s1171 + $0x5c0] sm:$0xff]
  %v1357 = vld [vmem:[%s1171 + $0x5c8] sm:$0xff]
  %v1358 = vld [vmem:[%s1171 + $0x5d0] sm:$0xff]
  %v1359 = vld [vmem:[%s1171 + $0x5d8] sm:$0xff]
  %v1360 = vld [vmem:[%s1171 + $0x5e0] sm:$0xff]
  %v1361 = vld [vmem:[%s1171 + $0x5e8] sm:$0xff]
  %v1362 = vld [vmem:[%s1171 + $0x5f0] sm:$0xff]
  %v1363 = vld [vmem:[%s1171 + $0x5f8] sm:$0xff]
  %v1364 = vld [vmem:[%s1171 + $0x600] sm:$0xff]
  %v1365 = vld [vmem:[%s1171 + $0x608] sm:$0xff]
  %v1366 = vld [vmem:[%s1171 + $0x610] sm:$0xff]
  %v1367 = vld [vmem:[%s1171 + $0x618] sm:$0xff]
  %v1368 = vld [vmem:[%s1171 + $0x620] sm:$0xff]
  %v1369 = vld [vmem:[%s1171 + $0x628] sm:$0xff]
  %v1370 = vld [vmem:[%s1171 + $0x630] sm:$0xff]
  %v1371 = vld [vmem:[%s1171 + $0x638] sm:$0xff]
  %v1372 = vld [vmem:[%s1171 + $0x640] sm:$0xff]
  %v1373 = vld [vmem:[%s1171 + $0x648] sm:$0xff]
  %v1374 = vld [vmem:[%s1171 + $0x650] sm:$0xff]
  %v1375 = vld [vmem:[%s1171 + $0x658] sm:$0xff]
  %v1376 = vld [vmem:[%s1171 + $0x660] sm:$0xff]
  %v1377 = vld [vmem:[%s1171 + $0x668] sm:$0xff]
  %v1378 = vld [vmem:[%s1171 + $0x670] sm:$0xff]
  %v1379 = vld [vmem:[%s1171 + $0x678] sm:$0xff]
  %v1380 = vld [vmem:[%s1171 + $0x680] sm:$0xff]
  %v1381 = vld [vmem:[%s1171 + $0x688] sm:$0xff]
  %v1382 = vld [vmem:[%s1171 + $0x690] sm:$0xff]
  %v1383 = vld [vmem:[%s1171 + $0x698] sm:$0xff]
  %v1384 = vld [vmem:[%s1171 + $0x6a0] sm:$0xff]
  %v1385 = vld [vmem:[%s1171 + $0x6a8] sm:$0xff]
  %v1386 = vld [vmem:[%s1171 + $0x6b0] sm:$0xff]
  %v1387 = vld [vmem:[%s1171 + $0x6b8] sm:$0xff]
  %v1388 = vld [vmem:[%s1171 + $0x6c0] sm:$0xff]
  %v1389 = vld [vmem:[%s1171 + $0x6c8] sm:$0xff]
  %v1390 = vld [vmem:[%s1171 + $0x6d0] sm:$0xff]
  %v1391 = vld [vmem:[%s1171 + $0x6d8] sm:$0xff]
  %v1392 = vld [vmem:[%s1171 + $0x6e0] sm:$0xff]
  %v1393 = vld [vmem:[%s1171 + $0x6e8] sm:$0xff]
  %v1394 = vld [vmem:[%s1171 + $0x6f0] sm:$0xff]
  %v1395 = vld [vmem:[%s1171 + $0x6f8] sm:$0xff]
  %v1396 = vld [vmem:[%s1171 + $0x700] sm:$0xff]
  %v1397 = vld [vmem:[%s1171 + $0x708] sm:$0xff]
  %v1398 = vld [vmem:[%s1171 + $0x710] sm:$0xff]
  %v1399 = vld [vmem:[%s1171 + $0x718] sm:$0xff]
  %v1400 = vld [vmem:[%s1171 + $0x720] sm:$0xff]
  %v1401 = vld [vmem:[%s1171 + $0x728] sm:$0xff]
  %v1402 = vld [vmem:[%s1171 + $0x730] sm:$0xff]
  %v1403 = vld [vmem:[%s1171 + $0x738] sm:$0xff]
  %v1404 = vld [vmem:[%s1171 + $0x740] sm:$0xff]
  %v1405 = vld [vmem:[%s1171 + $0x748] sm:$0xff]
  %v1406 = vld [vmem:[%s1171 + $0x750] sm:$0xff]
  %v1407 = vld [vmem:[%s1171 + $0x758] sm:$0xff]
  %v1408 = vld [vmem:[%s1171 + $0x760] sm:$0xff]
  %v1409 = vld [vmem:[%s1171 + $0x768] sm:$0xff]
  %v1410 = vld [vmem:[%s1171 + $0x770] sm:$0xff]
  %v1411 = vld [vmem:[%s1171 + $0x778] sm:$0xff]
  %v1412 = vld [vmem:[%s1171 + $0x780] sm:$0xff]
  %v1413 = vld [vmem:[%s1171 + $0x788] sm:$0xff]
  %v1414 = vld [vmem:[%s1171 + $0x790] sm:$0xff]
  %v1415 = vld [vmem:[%s1171 + $0x798] sm:$0xff]
  %v1416 = vld [vmem:[%s1171 + $0x7a0] sm:$0xf]
  %v1417 = vld [vmem:[%s1171 + $0x7a8] sm:$0xf]
  %v1419 = vsel %vm880, %v1416, 0
  %v1422 = vsel %vm880, %v1417, 0
  %1424 = vmatprep.subr.mxu0 %v1203
  %1425 = vmatpush1.msra.mxu0 %v1202
  %1426 = vmatprep.subr.mxu0 %v1201
  %1427 = vmatpush1.msra.mxu0 %v1200
  %1428 = vmatprep.subr.mxu0 %v1199
  %1429 = vmatpush1.msra.mxu0 %v1198
  %1430 = vmatprep.subr.mxu0 %v1197
  %1431 = vmatpush1.msra.mxu0 %v1196
  %1432 = vmatprep.subr.mxu0 %v1195
  %1433 = vmatpush1.msra.mxu0 %v1194
  %1434 = vmatprep.subr.mxu0 %v1193
  %1435 = vmatpush1.msra.mxu0 %v1192
  %1436 = vmatprep.subr.mxu0 %v1191
  %1437 = vmatpush1.msra.mxu0 %v1190
  %1438 = vmatprep.subr.mxu0 %v1189
  %1439 = vmatpush1.msra.mxu0 %v1188
  %1440 = vmatprep.subr.mxu0 %v1187
  %1441 = vmatpush1.msra.mxu0 %v1186
  %1442 = vmatprep.subr.mxu0 %v1185
  %1443 = vmatpush1.msra.mxu0 %v1184
  %1444 = vmatprep.subr.mxu0 %v1183
  %1445 = vmatpush1.msra.mxu0 %v1182
  %1446 = vmatprep.subr.mxu0 %v1181
  %1447 = vmatpush1.msra.mxu0 %v1180
  %1448 = vmatprep.subr.mxu0 %v1179
  %1449 = vmatpush1.msra.mxu0 %v1178
  %1450 = vmatprep.subr.mxu0 %v1177
  %1451 = vmatpush1.msra.mxu0 %v1176
  %1452 = vmatprep.subr.mxu0 %v1175
  %1453 = vmatpush1.msra.mxu0 %v1174
  %1454 = vmatprep.subr.mxu0 %v1173
  %1455 = vmatpush1.msra.mxu0 %v1172
  %1456 = vmatprep.subr.mxu0 %v1235
  %1457 = vmatpush2.msra.mxu0 %v1234
  %1458 = vmatprep.subr.mxu0 %v1233
  %1459 = vmatpush2.msra.mxu0 %v1232
  %1460 = vmatprep.subr.mxu0 %v1231
  %1461 = vmatpush2.msra.mxu0 %v1230
  %1462 = vmatprep.subr.mxu0 %v1229
  %1463 = vmatpush2.msra.mxu0 %v1228
  %1464 = vmatprep.subr.mxu0 %v1227
  %1465 = vmatpush2.msra.mxu0 %v1226
  %1466 = vmatprep.subr.mxu0 %v1225
  %1467 = vmatpush2.msra.mxu0 %v1224
  %1468 = vmatprep.subr.mxu0 %v1223
  %1469 = vmatpush2.msra.mxu0 %v1222
  %1470 = vmatprep.subr.mxu0 %v1221
  %1471 = vmatpush2.msra.mxu0 %v1220
  %1472 = vmatprep.subr.mxu0 %v1219
  %1473 = vmatpush2.msra.mxu0 %v1218
  %1474 = vmatprep.subr.mxu0 %v1217
  %1475 = vmatpush2.msra.mxu0 %v1216
  %1476 = vmatprep.subr.mxu0 %v1215
  %1477 = vmatpush2.msra.mxu0 %v1214
  %1478 = vmatprep.subr.mxu0 %v1213
  %1479 = vmatpush2.msra.mxu0 %v1212
  %1480 = vmatprep.subr.mxu0 %v1211
  %1481 = vmatpush2.msra.mxu0 %v1210
  %1482 = vmatprep.subr.mxu0 %v1209
  %1483 = vmatpush2.msra.mxu0 %v1208
  %1484 = vmatprep.subr.mxu0 %v1207
  %1485 = vmatpush2.msra.mxu0 %v1206
  %1486 = vmatprep.subr.mxu0 %v1205
  %1487 = vmatpush2.msra.mxu0 %v1204
  %1488 = vmatprep.mubr.f32.mxu0 %v623
  %1489 = vmatmul.mubr.f32.gmra.mxu0 %v622
  %v1490 = vpop.f32.mrf.mxu0
  %v1491 = vadd.f32 0.0, %v1490
  %v1492 = vpop.f32.mrf.mxu0
  %v1493 = vadd.f32 0.0, %v1492
  %1494 = vdwg.mxu0
  %1495 = vmatprep.subr.mxu0 %v1267
  %1496 = vmatpush1.msra.mxu0 %v1266
  %1497 = vmatprep.subr.mxu0 %v1265
  %1498 = vmatpush1.msra.mxu0 %v1264
  %1499 = vmatprep.subr.mxu0 %v1263
  %1500 = vmatpush1.msra.mxu0 %v1262
  %1501 = vmatprep.subr.mxu0 %v1261
  %1502 = vmatpush1.msra.mxu0 %v1260
  %1503 = vmatprep.subr.mxu0 %v1259
  %1504 = vmatpush1.msra.mxu0 %v1258
  %1505 = vmatprep.subr.mxu0 %v1257
  %1506 = vmatpush1.msra.mxu0 %v1256
  %1507 = vmatprep.subr.mxu0 %v1255
  %1508 = vmatpush1.msra.mxu0 %v1254
  %1509 = vmatprep.subr.mxu0 %v1253
  %1510 = vmatpush1.msra.mxu0 %v1252
  %1511 = vmatprep.subr.mxu0 %v1251
  %1512 = vmatpush1.msra.mxu0 %v1250
  %1513 = vmatprep.subr.mxu0 %v1249
  %1514 = vmatpush1.msra.mxu0 %v1248
  %1515 = vmatprep.subr.mxu0 %v1247
  %1516 = vmatpush1.msra.mxu0 %v1246
  %1517 = vmatprep.subr.mxu0 %v1245
  %1518 = vmatpush1.msra.mxu0 %v1244
  %1519 = vmatprep.subr.mxu0 %v1243
  %1520 = vmatpush1.msra.mxu0 %v1242
  %1521 = vmatprep.subr.mxu0 %v1241
  %1522 = vmatpush1.msra.mxu0 %v1240
  %1523 = vmatprep.subr.mxu0 %v1239
  %1524 = vmatpush1.msra.mxu0 %v1238
  %1525 = vmatprep.subr.mxu0 %v1237
  %1526 = vmatpush1.msra.mxu0 %v1236
  %1527 = vmatprep.subr.mxu0 %v1299
  %1528 = vmatpush2.msra.mxu0 %v1298
  %1529 = vmatprep.subr.mxu0 %v1297
  %1530 = vmatpush2.msra.mxu0 %v1296
  %1531 = vmatprep.subr.mxu0 %v1295
  %1532 = vmatpush2.msra.mxu0 %v1294
  %1533 = vmatprep.subr.mxu0 %v1293
  %1534 = vmatpush2.msra.mxu0 %v1292
  %1535 = vmatprep.subr.mxu0 %v1291
  %1536 = vmatpush2.msra.mxu0 %v1290
  %1537 = vmatprep.subr.mxu0 %v1289
  %1538 = vmatpush2.msra.mxu0 %v1288
  %1539 = vmatprep.subr.mxu0 %v1287
  %1540 = vmatpush2.msra.mxu0 %v1286
  %1541 = vmatprep.subr.mxu0 %v1285
  %1542 = vmatpush2.msra.mxu0 %v1284
  %1543 = vmatprep.subr.mxu0 %v1283
  %1544 = vmatpush2.msra.mxu0 %v1282
  %1545 = vmatprep.subr.mxu0 %v1281
  %1546 = vmatpush2.msra.mxu0 %v1280
  %1547 = vmatprep.subr.mxu0 %v1279
  %1548 = vmatpush2.msra.mxu0 %v1278
  %1549 = vmatprep.subr.mxu0 %v1277
  %1550 = vmatpush2.msra.mxu0 %v1276
  %1551 = vmatprep.subr.mxu0 %v1275
  %1552 = vmatpush2.msra.mxu0 %v1274
  %1553 = vmatprep.subr.mxu0 %v1273
  %1554 = vmatpush2.msra.mxu0 %v1272
  %1555 = vmatprep.subr.mxu0 %v1271
  %1556 = vmatpush2.msra.mxu0 %v1270
  %1557 = vmatprep.subr.mxu0 %v1269
  %1558 = vmatpush2.msra.mxu0 %v1268
  %1559 = vmatprep.mubr.f32.mxu0 %v625
  %1560 = vmatmul.mubr.f32.gmra.mxu0 %v624
  %v1561 = vpop.f32.mrf.mxu0
  %v1562 = vadd.f32 %v1491, %v1561
  %v1563 = vpop.f32.mrf.mxu0
  %v1564 = vadd.f32 %v1493, %v1563
  %1565 = vdwg.mxu0
  %1566 = vmatprep.subr.mxu0 %v1331
  %1567 = vmatpush1.msra.mxu0 %v1330
  %1568 = vmatprep.subr.mxu0 %v1329
  %1569 = vmatpush1.msra.mxu0 %v1328
  %1570 = vmatprep.subr.mxu0 %v1327
  %1571 = vmatpush1.msra.mxu0 %v1326
  %1572 = vmatprep.subr.mxu0 %v1325
  %1573 = vmatpush1.msra.mxu0 %v1324
  %1574 = vmatprep.subr.mxu0 %v1323
  %1575 = vmatpush1.msra.mxu0 %v1322
  %1576 = vmatprep.subr.mxu0 %v1321
  %1577 = vmatpush1.msra.mxu0 %v1320
  %1578 = vmatprep.subr.mxu0 %v1319
  %1579 = vmatpush1.msra.mxu0 %v1318
  %1580 = vmatprep.subr.mxu0 %v1317
  %1581 = vmatpush1.msra.mxu0 %v1316
  %1582 = vmatprep.subr.mxu0 %v1315
  %1583 = vmatpush1.msra.mxu0 %v1314
  %1584 = vmatprep.subr.mxu0 %v1313
  %1585 = vmatpush1.msra.mxu0 %v1312
  %1586 = vmatprep.subr.mxu0 %v1311
  %1587 = vmatpush1.msra.mxu0 %v1310
  %1588 = vmatprep.subr.mxu0 %v1309
  %1589 = vmatpush1.msra.mxu0 %v1308
  %1590 = vmatprep.subr.mxu0 %v1307
  %1591 = vmatpush1.msra.mxu0 %v1306
  %1592 = vmatprep.subr.mxu0 %v1305
  %1593 = vmatpush1.msra.mxu0 %v1304
  %1594 = vmatprep.subr.mxu0 %v1303
  %1595 = vmatpush1.msra.mxu0 %v1302
  %1596 = vmatprep.subr.mxu0 %v1301
  %1597 = vmatpush1.msra.mxu0 %v1300
  %1598 = vmatprep.subr.mxu0 %v1363
  %1599 = vmatpush2.msra.mxu0 %v1362
  %1600 = vmatprep.subr.mxu0 %v1361
  %1601 = vmatpush2.msra.mxu0 %v1360
  %1602 = vmatprep.subr.mxu0 %v1359
  %1603 = vmatpush2.msra.mxu0 %v1358
  %1604 = vmatprep.subr.mxu0 %v1357
  %1605 = vmatpush2.msra.mxu0 %v1356
  %1606 = vmatprep.subr.mxu0 %v1355
  %1607 = vmatpush2.msra.mxu0 %v1354
  %1608 = vmatprep.subr.mxu0 %v1353
  %1609 = vmatpush2.msra.mxu0 %v1352
  %1610 = vmatprep.subr.mxu0 %v1351
  %1611 = vmatpush2.msra.mxu0 %v1350
  %1612 = vmatprep.subr.mxu0 %v1349
  %1613 = vmatpush2.msra.mxu0 %v1348
  %1614 = vmatprep.subr.mxu0 %v1347
  %1615 = vmatpush2.msra.mxu0 %v1346
  %1616 = vmatprep.subr.mxu0 %v1345
  %1617 = vmatpush2.msra.mxu0 %v1344
  %1618 = vmatprep.subr.mxu0 %v1343
  %1619 = vmatpush2.msra.mxu0 %v1342
  %1620 = vmatprep.subr.mxu0 %v1341
  %1621 = vmatpush2.msra.mxu0 %v1340
  %1622 = vmatprep.subr.mxu0 %v1339
  %1623 = vmatpush2.msra.mxu0 %v1338
  %1624 = vmatprep.subr.mxu0 %v1337
  %1625 = vmatpush2.msra.mxu0 %v1336
  %1626 = vmatprep.subr.mxu0 %v1335
  %1627 = vmatpush2.msra.mxu0 %v1334
  %1628 = vmatprep.subr.mxu0 %v1333
  %1629 = vmatpush2.msra.mxu0 %v1332
  %1630 = vmatprep.mubr.f32.mxu0 %v627
  %1631 = vmatmul.mubr.f32.gmra.mxu0 %v626
  %v1632 = vpop.f32.mrf.mxu0
  %v1633 = vadd.f32 %v1562, %v1632
  %v1634 = vpop.f32.mrf.mxu0
  %v1635 = vadd.f32 %v1564, %v1634
  %1636 = vdwg.mxu0
  %1637 = vmatprep.subr.mxu0 %v1395
  %1638 = vmatpush1.msra.mxu0 %v1394
  %1639 = vmatprep.subr.mxu0 %v1393
  %1640 = vmatpush1.msra.mxu0 %v1392
  %1641 = vmatprep.subr.mxu0 %v1391
  %1642 = vmatpush1.msra.mxu0 %v1390
  %1643 = vmatprep.subr.mxu0 %v1389
  %1644 = vmatpush1.msra.mxu0 %v1388
  %1645 = vmatprep.subr.mxu0 %v1387
  %1646 = vmatpush1.msra.mxu0 %v1386
  %1647 = vmatprep.subr.mxu0 %v1385
  %1648 = vmatpush1.msra.mxu0 %v1384
  %1649 = vmatprep.subr.mxu0 %v1383
  %1650 = vmatpush1.msra.mxu0 %v1382
  %1651 = vmatprep.subr.mxu0 %v1381
  %1652 = vmatpush1.msra.mxu0 %v1380
  %1653 = vmatprep.subr.mxu0 %v1379
  %1654 = vmatpush1.msra.mxu0 %v1378
  %1655 = vmatprep.subr.mxu0 %v1377
  %1656 = vmatpush1.msra.mxu0 %v1376
  %1657 = vmatprep.subr.mxu0 %v1375
  %1658 = vmatpush1.msra.mxu0 %v1374
  %1659 = vmatprep.subr.mxu0 %v1373
  %1660 = vmatpush1.msra.mxu0 %v1372
  %1661 = vmatprep.subr.mxu0 %v1371
  %1662 = vmatpush1.msra.mxu0 %v1370
  %1663 = vmatprep.subr.mxu0 %v1369
  %1664 = vmatpush1.msra.mxu0 %v1368
  %1665 = vmatprep.subr.mxu0 %v1367
  %1666 = vmatpush1.msra.mxu0 %v1366
  %1667 = vmatprep.subr.mxu0 %v1365
  %1668 = vmatpush1.msra.mxu0 %v1364
  %1669 = vmatprep.subr.mxu0 0.0
  %1670 = vmatpush2.msra.mxu0 0.0
  %1671 = vmatprep.subr.mxu0 0.0
  %1672 = vmatpush2.msra.mxu0 0.0
  %1673 = vmatprep.subr.mxu0 0.0
  %1674 = vmatpush2.msra.mxu0 0.0
  %1675 = vmatprep.subr.mxu0 0.0
  %1676 = vmatpush2.msra.mxu0 0.0
  %1677 = vmatprep.subr.mxu0 0.0
  %1678 = vmatpush2.msra.mxu0 0.0
  %1679 = vmatprep.subr.mxu0 %v1422
  %1680 = vmatpush2.msra.mxu0 %v1419
  %1681 = vmatprep.subr.mxu0 %v1415
  %1682 = vmatpush2.msra.mxu0 %v1414
  %1683 = vmatprep.subr.mxu0 %v1413
  %1684 = vmatpush2.msra.mxu0 %v1412
  %1685 = vmatprep.subr.mxu0 %v1411
  %1686 = vmatpush2.msra.mxu0 %v1410
  %1687 = vmatprep.subr.mxu0 %v1409
  %1688 = vmatpush2.msra.mxu0 %v1408
  %1689 = vmatprep.subr.mxu0 %v1407
  %1690 = vmatpush2.msra.mxu0 %v1406
  %1691 = vmatprep.subr.mxu0 %v1405
  %1692 = vmatpush2.msra.mxu0 %v1404
  %1693 = vmatprep.subr.mxu0 %v1403
  %1694 = vmatpush2.msra.mxu0 %v1402
  %1695 = vmatprep.subr.mxu0 %v1401
  %1696 = vmatpush2.msra.mxu0 %v1400
  %1697 = vmatprep.subr.mxu0 %v1399
  %1698 = vmatpush2.msra.mxu0 %v1398
  %1699 = vmatprep.subr.mxu0 %v1397
  %1700 = vmatpush2.msra.mxu0 %v1396
  %1701 = vmatprep.mubr.f32.mxu0 %v878
  %1702 = vmatmul.mubr.f32.gmra.mxu0 %v628
  %v1703 = vpop.f32.mrf.mxu0
  %v1704 = vadd.f32 %v1633, %v1703
  %v1705 = vpop.f32.mrf.mxu0
  %v1706 = vadd.f32 %v1635, %v1705
  %1707 = vdwg.mxu0
  %v1708 = vmax.f32 %v1167, %v1704
  %v1709 = vmax.f32 %v1169, %v1706
  %s1710 = scalar_lea.vmem %s3, 3936
  %v1711 = vld [vmem:[%s1710] sm:$0xff]
  %v1712 = vld [vmem:[%s1710 + $0x8] sm:$0xff]
  %v1713 = vld [vmem:[%s1710 + $0x10] sm:$0xff]
  %v1714 = vld [vmem:[%s1710 + $0x18] sm:$0xff]
  %v1715 = vld [vmem:[%s1710 + $0x20] sm:$0xff]
  %v1716 = vld [vmem:[%s1710 + $0x28] sm:$0xff]
  %v1717 = vld [vmem:[%s1710 + $0x30] sm:$0xff]
  %v1718 = vld [vmem:[%s1710 + $0x38] sm:$0xff]
  %v1719 = vld [vmem:[%s1710 + $0x40] sm:$0xff]
  %v1720 = vld [vmem:[%s1710 + $0x48] sm:$0xff]
  %v1721 = vld [vmem:[%s1710 + $0x50] sm:$0xff]
  %v1722 = vld [vmem:[%s1710 + $0x58] sm:$0xff]
  %v1723 = vld [vmem:[%s1710 + $0x60] sm:$0xff]
  %v1724 = vld [vmem:[%s1710 + $0x68] sm:$0xff]
  %v1725 = vld [vmem:[%s1710 + $0x70] sm:$0xff]
  %v1726 = vld [vmem:[%s1710 + $0x78] sm:$0xff]
  %v1727 = vld [vmem:[%s1710 + $0x80] sm:$0xff]
  %v1728 = vld [vmem:[%s1710 + $0x88] sm:$0xff]
  %v1729 = vld [vmem:[%s1710 + $0x90] sm:$0xff]
  %v1730 = vld [vmem:[%s1710 + $0x98] sm:$0xff]
  %v1731 = vld [vmem:[%s1710 + $0xa0] sm:$0xff]
  %v1732 = vld [vmem:[%s1710 + $0xa8] sm:$0xff]
  %v1733 = vld [vmem:[%s1710 + $0xb0] sm:$0xff]
  %v1734 = vld [vmem:[%s1710 + $0xb8] sm:$0xff]
  %v1735 = vld [vmem:[%s1710 + $0xc0] sm:$0xff]
  %v1736 = vld [vmem:[%s1710 + $0xc8] sm:$0xff]
  %v1737 = vld [vmem:[%s1710 + $0xd0] sm:$0xff]
  %v1738 = vld [vmem:[%s1710 + $0xd8] sm:$0xff]
  %v1739 = vld [vmem:[%s1710 + $0xe0] sm:$0xff]
  %v1740 = vld [vmem:[%s1710 + $0xe8] sm:$0xff]
  %v1741 = vld [vmem:[%s1710 + $0xf0] sm:$0xff]
  %v1742 = vld [vmem:[%s1710 + $0xf8] sm:$0xff]
  %v1743 = vld [vmem:[%s1710 + $0x100] sm:$0xff]
  %v1744 = vld [vmem:[%s1710 + $0x108] sm:$0xff]
  %v1745 = vld [vmem:[%s1710 + $0x110] sm:$0xff]
  %v1746 = vld [vmem:[%s1710 + $0x118] sm:$0xff]
  %v1747 = vld [vmem:[%s1710 + $0x120] sm:$0xff]
  %v1748 = vld [vmem:[%s1710 + $0x128] sm:$0xff]
  %v1749 = vld [vmem:[%s1710 + $0x130] sm:$0xff]
  %v1750 = vld [vmem:[%s1710 + $0x138] sm:$0xff]
  %v1751 = vld [vmem:[%s1710 + $0x140] sm:$0xff]
  %v1752 = vld [vmem:[%s1710 + $0x148] sm:$0xff]
  %v1753 = vld [vmem:[%s1710 + $0x150] sm:$0xff]
  %v1754 = vld [vmem:[%s1710 + $0x158] sm:$0xff]
  %v1755 = vld [vmem:[%s1710 + $0x160] sm:$0xff]
  %v1756 = vld [vmem:[%s1710 + $0x168] sm:$0xff]
  %v1757 = vld [vmem:[%s1710 + $0x170] sm:$0xff]
  %v1758 = vld [vmem:[%s1710 + $0x178] sm:$0xff]
  %v1759 = vld [vmem:[%s1710 + $0x180] sm:$0xff]
  %v1760 = vld [vmem:[%s1710 + $0x188] sm:$0xff]
  %v1761 = vld [vmem:[%s1710 + $0x190] sm:$0xff]
  %v1762 = vld [vmem:[%s1710 + $0x198] sm:$0xff]
  %v1763 = vld [vmem:[%s1710 + $0x1a0] sm:$0xff]
  %v1764 = vld [vmem:[%s1710 + $0x1a8] sm:$0xff]
  %v1765 = vld [vmem:[%s1710 + $0x1b0] sm:$0xff]
  %v1766 = vld [vmem:[%s1710 + $0x1b8] sm:$0xff]
  %v1767 = vld [vmem:[%s1710 + $0x1c0] sm:$0xff]
  %v1768 = vld [vmem:[%s1710 + $0x1c8] sm:$0xff]
  %v1769 = vld [vmem:[%s1710 + $0x1d0] sm:$0xff]
  %v1770 = vld [vmem:[%s1710 + $0x1d8] sm:$0xff]
  %v1771 = vld [vmem:[%s1710 + $0x1e0] sm:$0xff]
  %v1772 = vld [vmem:[%s1710 + $0x1e8] sm:$0xff]
  %v1773 = vld [vmem:[%s1710 + $0x1f0] sm:$0xff]
  %v1774 = vld [vmem:[%s1710 + $0x1f8] sm:$0xff]
  %v1775 = vld [vmem:[%s1710 + $0x200] sm:$0xff]
  %v1776 = vld [vmem:[%s1710 + $0x208] sm:$0xff]
  %v1777 = vld [vmem:[%s1710 + $0x210] sm:$0xff]
  %v1778 = vld [vmem:[%s1710 + $0x218] sm:$0xff]
  %v1779 = vld [vmem:[%s1710 + $0x220] sm:$0xff]
  %v1780 = vld [vmem:[%s1710 + $0x228] sm:$0xff]
  %v1781 = vld [vmem:[%s1710 + $0x230] sm:$0xff]
  %v1782 = vld [vmem:[%s1710 + $0x238] sm:$0xff]
  %v1783 = vld [vmem:[%s1710 + $0x240] sm:$0xff]
  %v1784 = vld [vmem:[%s1710 + $0x248] sm:$0xff]
  %v1785 = vld [vmem:[%s1710 + $0x250] sm:$0xff]
  %v1786 = vld [vmem:[%s1710 + $0x258] sm:$0xff]
  %v1787 = vld [vmem:[%s1710 + $0x260] sm:$0xff]
  %v1788 = vld [vmem:[%s1710 + $0x268] sm:$0xff]
  %v1789 = vld [vmem:[%s1710 + $0x270] sm:$0xff]
  %v1790 = vld [vmem:[%s1710 + $0x278] sm:$0xff]
  %v1791 = vld [vmem:[%s1710 + $0x280] sm:$0xff]
  %v1792 = vld [vmem:[%s1710 + $0x288] sm:$0xff]
  %v1793 = vld [vmem:[%s1710 + $0x290] sm:$0xff]
  %v1794 = vld [vmem:[%s1710 + $0x298] sm:$0xff]
  %v1795 = vld [vmem:[%s1710 + $0x2a0] sm:$0xff]
  %v1796 = vld [vmem:[%s1710 + $0x2a8] sm:$0xff]
  %v1797 = vld [vmem:[%s1710 + $0x2b0] sm:$0xff]
  %v1798 = vld [vmem:[%s1710 + $0x2b8] sm:$0xff]
  %v1799 = vld [vmem:[%s1710 + $0x2c0] sm:$0xff]
  %v1800 = vld [vmem:[%s1710 + $0x2c8] sm:$0xff]
  %v1801 = vld [vmem:[%s1710 + $0x2d0] sm:$0xff]
  %v1802 = vld [vmem:[%s1710 + $0x2d8] sm:$0xff]
  %v1803 = vld [vmem:[%s1710 + $0x2e0] sm:$0xff]
  %v1804 = vld [vmem:[%s1710 + $0x2e8] sm:$0xff]
  %v1805 = vld [vmem:[%s1710 + $0x2f0] sm:$0xff]
  %v1806 = vld [vmem:[%s1710 + $0x2f8] sm:$0xff]
  %v1807 = vld [vmem:[%s1710 + $0x300] sm:$0xff]
  %v1808 = vld [vmem:[%s1710 + $0x308] sm:$0xff]
  %v1809 = vld [vmem:[%s1710 + $0x310] sm:$0xff]
  %v1810 = vld [vmem:[%s1710 + $0x318] sm:$0xff]
  %v1811 = vld [vmem:[%s1710 + $0x320] sm:$0xff]
  %v1812 = vld [vmem:[%s1710 + $0x328] sm:$0xff]
  %v1813 = vld [vmem:[%s1710 + $0x330] sm:$0xff]
  %v1814 = vld [vmem:[%s1710 + $0x338] sm:$0xff]
  %v1815 = vld [vmem:[%s1710 + $0x340] sm:$0xff]
  %v1816 = vld [vmem:[%s1710 + $0x348] sm:$0xff]
  %v1817 = vld [vmem:[%s1710 + $0x350] sm:$0xff]
  %v1818 = vld [vmem:[%s1710 + $0x358] sm:$0xff]
  %v1819 = vld [vmem:[%s1710 + $0x360] sm:$0xff]
  %v1820 = vld [vmem:[%s1710 + $0x368] sm:$0xff]
  %v1821 = vld [vmem:[%s1710 + $0x370] sm:$0xff]
  %v1822 = vld [vmem:[%s1710 + $0x378] sm:$0xff]
  %v1823 = vld [vmem:[%s1710 + $0x380] sm:$0xff]
  %v1824 = vld [vmem:[%s1710 + $0x388] sm:$0xff]
  %v1825 = vld [vmem:[%s1710 + $0x390] sm:$0xff]
  %v1826 = vld [vmem:[%s1710 + $0x398] sm:$0xff]
  %v1827 = vld [vmem:[%s1710 + $0x3a0] sm:$0xff]
  %v1828 = vld [vmem:[%s1710 + $0x3a8] sm:$0xff]
  %v1829 = vld [vmem:[%s1710 + $0x3b0] sm:$0xff]
  %v1830 = vld [vmem:[%s1710 + $0x3b8] sm:$0xff]
  %v1831 = vld [vmem:[%s1710 + $0x3c0] sm:$0xff]
  %v1832 = vld [vmem:[%s1710 + $0x3c8] sm:$0xff]
  %v1833 = vld [vmem:[%s1710 + $0x3d0] sm:$0xff]
  %v1834 = vld [vmem:[%s1710 + $0x3d8] sm:$0xff]
  %v1835 = vld [vmem:[%s1710 + $0x3e0] sm:$0xff]
  %v1836 = vld [vmem:[%s1710 + $0x3e8] sm:$0xff]
  %v1837 = vld [vmem:[%s1710 + $0x3f0] sm:$0xff]
  %v1838 = vld [vmem:[%s1710 + $0x3f8] sm:$0xff]
  %v1839 = vld [vmem:[%s1710 + $0x400] sm:$0xff]
  %v1840 = vld [vmem:[%s1710 + $0x408] sm:$0xff]
  %v1841 = vld [vmem:[%s1710 + $0x410] sm:$0xff]
  %v1842 = vld [vmem:[%s1710 + $0x418] sm:$0xff]
  %v1843 = vld [vmem:[%s1710 + $0x420] sm:$0xff]
  %v1844 = vld [vmem:[%s1710 + $0x428] sm:$0xff]
  %v1845 = vld [vmem:[%s1710 + $0x430] sm:$0xff]
  %v1846 = vld [vmem:[%s1710 + $0x438] sm:$0xff]
  %v1847 = vld [vmem:[%s1710 + $0x440] sm:$0xff]
  %v1848 = vld [vmem:[%s1710 + $0x448] sm:$0xff]
  %v1849 = vld [vmem:[%s1710 + $0x450] sm:$0xff]
  %v1850 = vld [vmem:[%s1710 + $0x458] sm:$0xff]
  %v1851 = vld [vmem:[%s1710 + $0x460] sm:$0xff]
  %v1852 = vld [vmem:[%s1710 + $0x468] sm:$0xff]
  %v1853 = vld [vmem:[%s1710 + $0x470] sm:$0xff]
  %v1854 = vld [vmem:[%s1710 + $0x478] sm:$0xff]
  %v1855 = vld [vmem:[%s1710 + $0x480] sm:$0xff]
  %v1856 = vld [vmem:[%s1710 + $0x488] sm:$0xff]
  %v1857 = vld [vmem:[%s1710 + $0x490] sm:$0xff]
  %v1858 = vld [vmem:[%s1710 + $0x498] sm:$0xff]
  %v1859 = vld [vmem:[%s1710 + $0x4a0] sm:$0xff]
  %v1860 = vld [vmem:[%s1710 + $0x4a8] sm:$0xff]
  %v1861 = vld [vmem:[%s1710 + $0x4b0] sm:$0xff]
  %v1862 = vld [vmem:[%s1710 + $0x4b8] sm:$0xff]
  %v1863 = vld [vmem:[%s1710 + $0x4c0] sm:$0xff]
  %v1864 = vld [vmem:[%s1710 + $0x4c8] sm:$0xff]
  %v1865 = vld [vmem:[%s1710 + $0x4d0] sm:$0xff]
  %v1866 = vld [vmem:[%s1710 + $0x4d8] sm:$0xff]
  %v1867 = vld [vmem:[%s1710 + $0x4e0] sm:$0xff]
  %v1868 = vld [vmem:[%s1710 + $0x4e8] sm:$0xff]
  %v1869 = vld [vmem:[%s1710 + $0x4f0] sm:$0xff]
  %v1870 = vld [vmem:[%s1710 + $0x4f8] sm:$0xff]
  %v1871 = vld [vmem:[%s1710 + $0x500] sm:$0xff]
  %v1872 = vld [vmem:[%s1710 + $0x508] sm:$0xff]
  %v1873 = vld [vmem:[%s1710 + $0x510] sm:$0xff]
  %v1874 = vld [vmem:[%s1710 + $0x518] sm:$0xff]
  %v1875 = vld [vmem:[%s1710 + $0x520] sm:$0xff]
  %v1876 = vld [vmem:[%s1710 + $0x528] sm:$0xff]
  %v1877 = vld [vmem:[%s1710 + $0x530] sm:$0xff]
  %v1878 = vld [vmem:[%s1710 + $0x538] sm:$0xff]
  %v1879 = vld [vmem:[%s1710 + $0x540] sm:$0xff]
  %v1880 = vld [vmem:[%s1710 + $0x548] sm:$0xff]
  %v1881 = vld [vmem:[%s1710 + $0x550] sm:$0xff]
  %v1882 = vld [vmem:[%s1710 + $0x558] sm:$0xff]
  %v1883 = vld [vmem:[%s1710 + $0x560] sm:$0xff]
  %v1884 = vld [vmem:[%s1710 + $0x568] sm:$0xff]
  %v1885 = vld [vmem:[%s1710 + $0x570] sm:$0xff]
  %v1886 = vld [vmem:[%s1710 + $0x578] sm:$0xff]
  %v1887 = vld [vmem:[%s1710 + $0x580] sm:$0xff]
  %v1888 = vld [vmem:[%s1710 + $0x588] sm:$0xff]
  %v1889 = vld [vmem:[%s1710 + $0x590] sm:$0xff]
  %v1890 = vld [vmem:[%s1710 + $0x598] sm:$0xff]
  %v1891 = vld [vmem:[%s1710 + $0x5a0] sm:$0xff]
  %v1892 = vld [vmem:[%s1710 + $0x5a8] sm:$0xff]
  %v1893 = vld [vmem:[%s1710 + $0x5b0] sm:$0xff]
  %v1894 = vld [vmem:[%s1710 + $0x5b8] sm:$0xff]
  %v1895 = vld [vmem:[%s1710 + $0x5c0] sm:$0xff]
  %v1896 = vld [vmem:[%s1710 + $0x5c8] sm:$0xff]
  %v1897 = vld [vmem:[%s1710 + $0x5d0] sm:$0xff]
  %v1898 = vld [vmem:[%s1710 + $0x5d8] sm:$0xff]
  %v1899 = vld [vmem:[%s1710 + $0x5e0] sm:$0xff]
  %v1900 = vld [vmem:[%s1710 + $0x5e8] sm:$0xff]
  %v1901 = vld [vmem:[%s1710 + $0x5f0] sm:$0xff]
  %v1902 = vld [vmem:[%s1710 + $0x5f8] sm:$0xff]
  %v1903 = vld [vmem:[%s1710 + $0x600] sm:$0xff]
  %v1904 = vld [vmem:[%s1710 + $0x608] sm:$0xff]
  %v1905 = vld [vmem:[%s1710 + $0x610] sm:$0xff]
  %v1906 = vld [vmem:[%s1710 + $0x618] sm:$0xff]
  %v1907 = vld [vmem:[%s1710 + $0x620] sm:$0xff]
  %v1908 = vld [vmem:[%s1710 + $0x628] sm:$0xff]
  %v1909 = vld [vmem:[%s1710 + $0x630] sm:$0xff]
  %v1910 = vld [vmem:[%s1710 + $0x638] sm:$0xff]
  %v1911 = vld [vmem:[%s1710 + $0x640] sm:$0xff]
  %v1912 = vld [vmem:[%s1710 + $0x648] sm:$0xff]
  %v1913 = vld [vmem:[%s1710 + $0x650] sm:$0xff]
  %v1914 = vld [vmem:[%s1710 + $0x658] sm:$0xff]
  %v1915 = vld [vmem:[%s1710 + $0x660] sm:$0xff]
  %v1916 = vld [vmem:[%s1710 + $0x668] sm:$0xff]
  %v1917 = vld [vmem:[%s1710 + $0x670] sm:$0xff]
  %v1918 = vld [vmem:[%s1710 + $0x678] sm:$0xff]
  %v1919 = vld [vmem:[%s1710 + $0x680] sm:$0xff]
  %v1920 = vld [vmem:[%s1710 + $0x688] sm:$0xff]
  %v1921 = vld [vmem:[%s1710 + $0x690] sm:$0xff]
  %v1922 = vld [vmem:[%s1710 + $0x698] sm:$0xff]
  %v1923 = vld [vmem:[%s1710 + $0x6a0] sm:$0xff]
  %v1924 = vld [vmem:[%s1710 + $0x6a8] sm:$0xff]
  %v1925 = vld [vmem:[%s1710 + $0x6b0] sm:$0xff]
  %v1926 = vld [vmem:[%s1710 + $0x6b8] sm:$0xff]
  %v1927 = vld [vmem:[%s1710 + $0x6c0] sm:$0xff]
  %v1928 = vld [vmem:[%s1710 + $0x6c8] sm:$0xff]
  %v1929 = vld [vmem:[%s1710 + $0x6d0] sm:$0xff]
  %v1930 = vld [vmem:[%s1710 + $0x6d8] sm:$0xff]
  %v1931 = vld [vmem:[%s1710 + $0x6e0] sm:$0xff]
  %v1932 = vld [vmem:[%s1710 + $0x6e8] sm:$0xff]
  %v1933 = vld [vmem:[%s1710 + $0x6f0] sm:$0xff]
  %v1934 = vld [vmem:[%s1710 + $0x6f8] sm:$0xff]
  %v1935 = vld [vmem:[%s1710 + $0x700] sm:$0xff]
  %v1936 = vld [vmem:[%s1710 + $0x708] sm:$0xff]
  %v1937 = vld [vmem:[%s1710 + $0x710] sm:$0xff]
  %v1938 = vld [vmem:[%s1710 + $0x718] sm:$0xff]
  %v1939 = vld [vmem:[%s1710 + $0x720] sm:$0xff]
  %v1940 = vld [vmem:[%s1710 + $0x728] sm:$0xff]
  %v1941 = vld [vmem:[%s1710 + $0x730] sm:$0xff]
  %v1942 = vld [vmem:[%s1710 + $0x738] sm:$0xff]
  %v1943 = vld [vmem:[%s1710 + $0x740] sm:$0xff]
  %v1944 = vld [vmem:[%s1710 + $0x748] sm:$0xff]
  %v1945 = vld [vmem:[%s1710 + $0x750] sm:$0xff]
  %v1946 = vld [vmem:[%s1710 + $0x758] sm:$0xff]
  %v1947 = vld [vmem:[%s1710 + $0x760] sm:$0xff]
  %v1948 = vld [vmem:[%s1710 + $0x768] sm:$0xff]
  %v1949 = vld [vmem:[%s1710 + $0x770] sm:$0xff]
  %v1950 = vld [vmem:[%s1710 + $0x778] sm:$0xff]
  %v1951 = vld [vmem:[%s1710 + $0x780] sm:$0xff]
  %v1952 = vld [vmem:[%s1710 + $0x788] sm:$0xff]
  %v1953 = vld [vmem:[%s1710 + $0x790] sm:$0xff]
  %v1954 = vld [vmem:[%s1710 + $0x798] sm:$0xff]
  %v1955 = vld [vmem:[%s1710 + $0x7a0] sm:$0xf]
  %v1956 = vld [vmem:[%s1710 + $0x7a8] sm:$0xf]
  %v1958 = vsel %vm880, %v1955, 0
  %v1961 = vsel %vm880, %v1956, 0
  %1963 = vmatprep.subr.mxu0 %v1742
  %1964 = vmatpush1.msra.mxu0 %v1741
  %1965 = vmatprep.subr.mxu0 %v1740
  %1966 = vmatpush1.msra.mxu0 %v1739
  %1967 = vmatprep.subr.mxu0 %v1738
  %1968 = vmatpush1.msra.mxu0 %v1737
  %1969 = vmatprep.subr.mxu0 %v1736
  %1970 = vmatpush1.msra.mxu0 %v1735
  %1971 = vmatprep.subr.mxu0 %v1734
  %1972 = vmatpush1.msra.mxu0 %v1733
  %1973 = vmatprep.subr.mxu0 %v1732
  %1974 = vmatpush1.msra.mxu0 %v1731
  %1975 = vmatprep.subr.mxu0 %v1730
  %1976 = vmatpush1.msra.mxu0 %v1729
  %1977 = vmatprep.subr.mxu0 %v1728
  %1978 = vmatpush1.msra.mxu0 %v1727
  %1979 = vmatprep.subr.mxu0 %v1726
  %1980 = vmatpush1.msra.mxu0 %v1725
  %1981 = vmatprep.subr.mxu0 %v1724
  %1982 = vmatpush1.msra.mxu0 %v1723
  %1983 = vmatprep.subr.mxu0 %v1722
  %1984 = vmatpush1.msra.mxu0 %v1721
  %1985 = vmatprep.subr.mxu0 %v1720
  %1986 = vmatpush1.msra.mxu0 %v1719
  %1987 = vmatprep.subr.mxu0 %v1718
  %1988 = vmatpush1.msra.mxu0 %v1717
  %1989 = vmatprep.subr.mxu0 %v1716
  %1990 = vmatpush1.msra.mxu0 %v1715
  %1991 = vmatprep.subr.mxu0 %v1714
  %1992 = vmatpush1.msra.mxu0 %v1713
  %1993 = vmatprep.subr.mxu0 %v1712
  %1994 = vmatpush1.msra.mxu0 %v1711
  %1995 = vmatprep.subr.mxu0 %v1774
  %1996 = vmatpush2.msra.mxu0 %v1773
  %1997 = vmatprep.subr.mxu0 %v1772
  %1998 = vmatpush2.msra.mxu0 %v1771
  %1999 = vmatprep.subr.mxu0 %v1770
  %2000 = vmatpush2.msra.mxu0 %v1769
  %2001 = vmatprep.subr.mxu0 %v1768
  %2002 = vmatpush2.msra.mxu0 %v1767
  %2003 = vmatprep.subr.mxu0 %v1766
  %2004 = vmatpush2.msra.mxu0 %v1765
  %2005 = vmatprep.subr.mxu0 %v1764
  %2006 = vmatpush2.msra.mxu0 %v1763
  %2007 = vmatprep.subr.mxu0 %v1762
  %2008 = vmatpush2.msra.mxu0 %v1761
  %2009 = vmatprep.subr.mxu0 %v1760
  %2010 = vmatpush2.msra.mxu0 %v1759
  %2011 = vmatprep.subr.mxu0 %v1758
  %2012 = vmatpush2.msra.mxu0 %v1757
  %2013 = vmatprep.subr.mxu0 %v1756
  %2014 = vmatpush2.msra.mxu0 %v1755
  %2015 = vmatprep.subr.mxu0 %v1754
  %2016 = vmatpush2.msra.mxu0 %v1753
  %2017 = vmatprep.subr.mxu0 %v1752
  %2018 = vmatpush2.msra.mxu0 %v1751
  %2019 = vmatprep.subr.mxu0 %v1750
  %2020 = vmatpush2.msra.mxu0 %v1749
  %2021 = vmatprep.subr.mxu0 %v1748
  %2022 = vmatpush2.msra.mxu0 %v1747
  %2023 = vmatprep.subr.mxu0 %v1746
  %2024 = vmatpush2.msra.mxu0 %v1745
  %2025 = vmatprep.subr.mxu0 %v1744
  %2026 = vmatpush2.msra.mxu0 %v1743
  %2027 = vmatprep.mubr.f32.mxu0 %v623
  %2028 = vmatmul.mubr.f32.gmra.mxu0 %v622
  %v2029 = vpop.f32.mrf.mxu0
  %v2030 = vadd.f32 0.0, %v2029
  %v2031 = vpop.f32.mrf.mxu0
  %v2032 = vadd.f32 0.0, %v2031
  %2033 = vdwg.mxu0
  %2034 = vmatprep.subr.mxu0 %v1806
  %2035 = vmatpush1.msra.mxu0 %v1805
  %2036 = vmatprep.subr.mxu0 %v1804
  %2037 = vmatpush1.msra.mxu0 %v1803
  %2038 = vmatprep.subr.mxu0 %v1802
  %2039 = vmatpush1.msra.mxu0 %v1801
  %2040 = vmatprep.subr.mxu0 %v1800
  %2041 = vmatpush1.msra.mxu0 %v1799
  %2042 = vmatprep.subr.mxu0 %v1798
  %2043 = vmatpush1.msra.mxu0 %v1797
  %2044 = vmatprep.subr.mxu0 %v1796
  %2045 = vmatpush1.msra.mxu0 %v1795
  %2046 = vmatprep.subr.mxu0 %v1794
  %2047 = vmatpush1.msra.mxu0 %v1793
  %2048 = vmatprep.subr.mxu0 %v1792
  %2049 = vmatpush1.msra.mxu0 %v1791
  %2050 = vmatprep.subr.mxu0 %v1790
  %2051 = vmatpush1.msra.mxu0 %v1789
  %2052 = vmatprep.subr.mxu0 %v1788
  %2053 = vmatpush1.msra.mxu0 %v1787
  %2054 = vmatprep.subr.mxu0 %v1786
  %2055 = vmatpush1.msra.mxu0 %v1785
  %2056 = vmatprep.subr.mxu0 %v1784
  %2057 = vmatpush1.msra.mxu0 %v1783
  %2058 = vmatprep.subr.mxu0 %v1782
  %2059 = vmatpush1.msra.mxu0 %v1781
  %2060 = vmatprep.subr.mxu0 %v1780
  %2061 = vmatpush1.msra.mxu0 %v1779
  %2062 = vmatprep.subr.mxu0 %v1778
  %2063 = vmatpush1.msra.mxu0 %v1777
  %2064 = vmatprep.subr.mxu0 %v1776
  %2065 = vmatpush1.msra.mxu0 %v1775
  %2066 = vmatprep.subr.mxu0 %v1838
  %2067 = vmatpush2.msra.mxu0 %v1837
  %2068 = vmatprep.subr.mxu0 %v1836
  %2069 = vmatpush2.msra.mxu0 %v1835
  %2070 = vmatprep.subr.mxu0 %v1834
  %2071 = vmatpush2.msra.mxu0 %v1833
  %2072 = vmatprep.subr.mxu0 %v1832
  %2073 = vmatpush2.msra.mxu0 %v1831
  %2074 = vmatprep.subr.mxu0 %v1830
  %2075 = vmatpush2.msra.mxu0 %v1829
  %2076 = vmatprep.subr.mxu0 %v1828
  %2077 = vmatpush2.msra.mxu0 %v1827
  %2078 = vmatprep.subr.mxu0 %v1826
  %2079 = vmatpush2.msra.mxu0 %v1825
  %2080 = vmatprep.subr.mxu0 %v1824
  %2081 = vmatpush2.msra.mxu0 %v1823
  %2082 = vmatprep.subr.mxu0 %v1822
  %2083 = vmatpush2.msra.mxu0 %v1821
  %2084 = vmatprep.subr.mxu0 %v1820
  %2085 = vmatpush2.msra.mxu0 %v1819
  %2086 = vmatprep.subr.mxu0 %v1818
  %2087 = vmatpush2.msra.mxu0 %v1817
  %2088 = vmatprep.subr.mxu0 %v1816
  %2089 = vmatpush2.msra.mxu0 %v1815
  %2090 = vmatprep.subr.mxu0 %v1814
  %2091 = vmatpush2.msra.mxu0 %v1813
  %2092 = vmatprep.subr.mxu0 %v1812
  %2093 = vmatpush2.msra.mxu0 %v1811
  %2094 = vmatprep.subr.mxu0 %v1810
  %2095 = vmatpush2.msra.mxu0 %v1809
  %2096 = vmatprep.subr.mxu0 %v1808
  %2097 = vmatpush2.msra.mxu0 %v1807
  %2098 = vmatprep.mubr.f32.mxu0 %v625
  %2099 = vmatmul.mubr.f32.gmra.mxu0 %v624
  %v2100 = vpop.f32.mrf.mxu0
  %v2101 = vadd.f32 %v2030, %v2100
  %v2102 = vpop.f32.mrf.mxu0
  %v2103 = vadd.f32 %v2032, %v2102
  %2104 = vdwg.mxu0
  %2105 = vmatprep.subr.mxu0 %v1870
  %2106 = vmatpush1.msra.mxu0 %v1869
  %2107 = vmatprep.subr.mxu0 %v1868
  %2108 = vmatpush1.msra.mxu0 %v1867
  %2109 = vmatprep.subr.mxu0 %v1866
  %2110 = vmatpush1.msra.mxu0 %v1865
  %2111 = vmatprep.subr.mxu0 %v1864
  %2112 = vmatpush1.msra.mxu0 %v1863
  %2113 = vmatprep.subr.mxu0 %v1862
  %2114 = vmatpush1.msra.mxu0 %v1861
  %2115 = vmatprep.subr.mxu0 %v1860
  %2116 = vmatpush1.msra.mxu0 %v1859
  %2117 = vmatprep.subr.mxu0 %v1858
  %2118 = vmatpush1.msra.mxu0 %v1857
  %2119 = vmatprep.subr.mxu0 %v1856
  %2120 = vmatpush1.msra.mxu0 %v1855
  %2121 = vmatprep.subr.mxu0 %v1854
  %2122 = vmatpush1.msra.mxu0 %v1853
  %2123 = vmatprep.subr.mxu0 %v1852
  %2124 = vmatpush1.msra.mxu0 %v1851
  %2125 = vmatprep.subr.mxu0 %v1850
  %2126 = vmatpush1.msra.mxu0 %v1849
  %2127 = vmatprep.subr.mxu0 %v1848
  %2128 = vmatpush1.msra.mxu0 %v1847
  %2129 = vmatprep.subr.mxu0 %v1846
  %2130 = vmatpush1.msra.mxu0 %v1845
  %2131 = vmatprep.subr.mxu0 %v1844
  %2132 = vmatpush1.msra.mxu0 %v1843
  %2133 = vmatprep.subr.mxu0 %v1842
  %2134 = vmatpush1.msra.mxu0 %v1841
  %2135 = vmatprep.subr.mxu0 %v1840
  %2136 = vmatpush1.msra.mxu0 %v1839
  %2137 = vmatprep.subr.mxu0 %v1902
  %2138 = vmatpush2.msra.mxu0 %v1901
  %2139 = vmatprep.subr.mxu0 %v1900
  %2140 = vmatpush2.msra.mxu0 %v1899
  %2141 = vmatprep.subr.mxu0 %v1898
  %2142 = vmatpush2.msra.mxu0 %v1897
  %2143 = vmatprep.subr.mxu0 %v1896
  %2144 = vmatpush2.msra.mxu0 %v1895
  %2145 = vmatprep.subr.mxu0 %v1894
  %2146 = vmatpush2.msra.mxu0 %v1893
  %2147 = vmatprep.subr.mxu0 %v1892
  %2148 = vmatpush2.msra.mxu0 %v1891
  %2149 = vmatprep.subr.mxu0 %v1890
  %2150 = vmatpush2.msra.mxu0 %v1889
  %2151 = vmatprep.subr.mxu0 %v1888
  %2152 = vmatpush2.msra.mxu0 %v1887
  %2153 = vmatprep.subr.mxu0 %v1886
  %2154 = vmatpush2.msra.mxu0 %v1885
  %2155 = vmatprep.subr.mxu0 %v1884
  %2156 = vmatpush2.msra.mxu0 %v1883
  %2157 = vmatprep.subr.mxu0 %v1882
  %2158 = vmatpush2.msra.mxu0 %v1881
  %2159 = vmatprep.subr.mxu0 %v1880
  %2160 = vmatpush2.msra.mxu0 %v1879
  %2161 = vmatprep.subr.mxu0 %v1878
  %2162 = vmatpush2.msra.mxu0 %v1877
  %2163 = vmatprep.subr.mxu0 %v1876
  %2164 = vmatpush2.msra.mxu0 %v1875
  %2165 = vmatprep.subr.mxu0 %v1874
  %2166 = vmatpush2.msra.mxu0 %v1873
  %2167 = vmatprep.subr.mxu0 %v1872
  %2168 = vmatpush2.msra.mxu0 %v1871
  %2169 = vmatprep.mubr.f32.mxu0 %v627
  %2170 = vmatmul.mubr.f32.gmra.mxu0 %v626
  %v2171 = vpop.f32.mrf.mxu0
  %v2172 = vadd.f32 %v2101, %v2171
  %v2173 = vpop.f32.mrf.mxu0
  %v2174 = vadd.f32 %v2103, %v2173
  %2175 = vdwg.mxu0
  %2176 = vmatprep.subr.mxu0 %v1934
  %2177 = vmatpush1.msra.mxu0 %v1933
  %2178 = vmatprep.subr.mxu0 %v1932
  %2179 = vmatpush1.msra.mxu0 %v1931
  %2180 = vmatprep.subr.mxu0 %v1930
  %2181 = vmatpush1.msra.mxu0 %v1929
  %2182 = vmatprep.subr.mxu0 %v1928
  %2183 = vmatpush1.msra.mxu0 %v1927
  %2184 = vmatprep.subr.mxu0 %v1926
  %2185 = vmatpush1.msra.mxu0 %v1925
  %2186 = vmatprep.subr.mxu0 %v1924
  %2187 = vmatpush1.msra.mxu0 %v1923
  %2188 = vmatprep.subr.mxu0 %v1922
  %2189 = vmatpush1.msra.mxu0 %v1921
  %2190 = vmatprep.subr.mxu0 %v1920
  %2191 = vmatpush1.msra.mxu0 %v1919
  %2192 = vmatprep.subr.mxu0 %v1918
  %2193 = vmatpush1.msra.mxu0 %v1917
  %2194 = vmatprep.subr.mxu0 %v1916
  %2195 = vmatpush1.msra.mxu0 %v1915
  %2196 = vmatprep.subr.mxu0 %v1914
  %2197 = vmatpush1.msra.mxu0 %v1913
  %2198 = vmatprep.subr.mxu0 %v1912
  %2199 = vmatpush1.msra.mxu0 %v1911
  %2200 = vmatprep.subr.mxu0 %v1910
  %2201 = vmatpush1.msra.mxu0 %v1909
  %2202 = vmatprep.subr.mxu0 %v1908
  %2203 = vmatpush1.msra.mxu0 %v1907
  %2204 = vmatprep.subr.mxu0 %v1906
  %2205 = vmatpush1.msra.mxu0 %v1905
  %2206 = vmatprep.subr.mxu0 %v1904
  %2207 = vmatpush1.msra.mxu0 %v1903
  %2208 = vmatprep.subr.mxu0 0.0
  %2209 = vmatpush2.msra.mxu0 0.0
  %2210 = vmatprep.subr.mxu0 0.0
  %2211 = vmatpush2.msra.mxu0 0.0
  %2212 = vmatprep.subr.mxu0 0.0
  %2213 = vmatpush2.msra.mxu0 0.0
  %2214 = vmatprep.subr.mxu0 0.0
  %2215 = vmatpush2.msra.mxu0 0.0
  %2216 = vmatprep.subr.mxu0 0.0
  %2217 = vmatpush2.msra.mxu0 0.0
  %2218 = vmatprep.subr.mxu0 %v1961
  %2219 = vmatpush2.msra.mxu0 %v1958
  %2220 = vmatprep.subr.mxu0 %v1954
  %2221 = vmatpush2.msra.mxu0 %v1953
  %2222 = vmatprep.subr.mxu0 %v1952
  %2223 = vmatpush2.msra.mxu0 %v1951
  %2224 = vmatprep.subr.mxu0 %v1950
  %2225 = vmatpush2.msra.mxu0 %v1949
  %2226 = vmatprep.subr.mxu0 %v1948
  %2227 = vmatpush2.msra.mxu0 %v1947
  %2228 = vmatprep.subr.mxu0 %v1946
  %2229 = vmatpush2.msra.mxu0 %v1945
  %2230 = vmatprep.subr.mxu0 %v1944
  %2231 = vmatpush2.msra.mxu0 %v1943
  %2232 = vmatprep.subr.mxu0 %v1942
  %2233 = vmatpush2.msra.mxu0 %v1941
  %2234 = vmatprep.subr.mxu0 %v1940
  %2235 = vmatpush2.msra.mxu0 %v1939
  %2236 = vmatprep.subr.mxu0 %v1938
  %2237 = vmatpush2.msra.mxu0 %v1937
  %2238 = vmatprep.subr.mxu0 %v1936
  %2239 = vmatpush2.msra.mxu0 %v1935
  %2240 = vmatprep.mubr.f32.mxu0 %v878
  %2241 = vmatmul.mubr.f32.gmra.mxu0 %v628
  %v2242 = vpop.f32.mrf.mxu0
  %v2243 = vadd.f32 %v2172, %v2242
  %v2244 = vpop.f32.mrf.mxu0
  %v2245 = vadd.f32 %v2174, %v2244
  %2246 = vdwg.mxu0
  %v2247 = vmax.f32 %v1708, %v2243
  %v2248 = vmax.f32 %v1709, %v2245
  %s2249 = scalar_lea.vmem %s3, 5904
  %v2250 = vld [vmem:[%s2249] sm:$0xff]
  %v2251 = vld [vmem:[%s2249 + $0x8] sm:$0xff]
  %v2252 = vld [vmem:[%s2249 + $0x10] sm:$0xff]
  %v2253 = vld [vmem:[%s2249 + $0x18] sm:$0xff]
  %v2254 = vld [vmem:[%s2249 + $0x20] sm:$0xff]
  %v2255 = vld [vmem:[%s2249 + $0x28] sm:$0xff]
  %v2256 = vld [vmem:[%s2249 + $0x30] sm:$0xff]
  %v2257 = vld [vmem:[%s2249 + $0x38] sm:$0xff]
  %v2258 = vld [vmem:[%s2249 + $0x40] sm:$0xff]
  %v2259 = vld [vmem:[%s2249 + $0x48] sm:$0xff]
  %v2260 = vld [vmem:[%s2249 + $0x50] sm:$0xff]
  %v2261 = vld [vmem:[%s2249 + $0x58] sm:$0xff]
  %v2262 = vld [vmem:[%s2249 + $0x60] sm:$0xff]
  %v2263 = vld [vmem:[%s2249 + $0x68] sm:$0xff]
  %v2264 = vld [vmem:[%s2249 + $0x70] sm:$0xff]
  %v2265 = vld [vmem:[%s2249 + $0x78] sm:$0xff]
  %v2266 = vld [vmem:[%s2249 + $0x80] sm:$0xff]
  %v2267 = vld [vmem:[%s2249 + $0x88] sm:$0xff]
  %v2268 = vld [vmem:[%s2249 + $0x90] sm:$0xff]
  %v2269 = vld [vmem:[%s2249 + $0x98] sm:$0xff]
  %v2270 = vld [vmem:[%s2249 + $0xa0] sm:$0xff]
  %v2271 = vld [vmem:[%s2249 + $0xa8] sm:$0xff]
  %v2272 = vld [vmem:[%s2249 + $0xb0] sm:$0xff]
  %v2273 = vld [vmem:[%s2249 + $0xb8] sm:$0xff]
  %v2274 = vld [vmem:[%s2249 + $0xc0] sm:$0xff]
  %v2275 = vld [vmem:[%s2249 + $0xc8] sm:$0xff]
  %v2276 = vld [vmem:[%s2249 + $0xd0] sm:$0xff]
  %v2277 = vld [vmem:[%s2249 + $0xd8] sm:$0xff]
  %v2278 = vld [vmem:[%s2249 + $0xe0] sm:$0xff]
  %v2279 = vld [vmem:[%s2249 + $0xe8] sm:$0xff]
  %v2280 = vld [vmem:[%s2249 + $0xf0] sm:$0xff]
  %v2281 = vld [vmem:[%s2249 + $0xf8] sm:$0xff]
  %v2282 = vld [vmem:[%s2249 + $0x100] sm:$0xff]
  %v2283 = vld [vmem:[%s2249 + $0x108] sm:$0xff]
  %v2284 = vld [vmem:[%s2249 + $0x110] sm:$0xff]
  %v2285 = vld [vmem:[%s2249 + $0x118] sm:$0xff]
  %v2286 = vld [vmem:[%s2249 + $0x120] sm:$0xff]
  %v2287 = vld [vmem:[%s2249 + $0x128] sm:$0xff]
  %v2288 = vld [vmem:[%s2249 + $0x130] sm:$0xff]
  %v2289 = vld [vmem:[%s2249 + $0x138] sm:$0xff]
  %v2290 = vld [vmem:[%s2249 + $0x140] sm:$0xff]
  %v2291 = vld [vmem:[%s2249 + $0x148] sm:$0xff]
  %v2292 = vld [vmem:[%s2249 + $0x150] sm:$0xff]
  %v2293 = vld [vmem:[%s2249 + $0x158] sm:$0xff]
  %v2294 = vld [vmem:[%s2249 + $0x160] sm:$0xff]
  %v2295 = vld [vmem:[%s2249 + $0x168] sm:$0xff]
  %v2296 = vld [vmem:[%s2249 + $0x170] sm:$0xff]
  %v2297 = vld [vmem:[%s2249 + $0x178] sm:$0xff]
  %v2298 = vld [vmem:[%s2249 + $0x180] sm:$0xff]
  %v2299 = vld [vmem:[%s2249 + $0x188] sm:$0xff]
  %v2300 = vld [vmem:[%s2249 + $0x190] sm:$0xff]
  %v2301 = vld [vmem:[%s2249 + $0x198] sm:$0xff]
  %v2302 = vld [vmem:[%s2249 + $0x1a0] sm:$0xff]
  %v2303 = vld [vmem:[%s2249 + $0x1a8] sm:$0xff]
  %v2304 = vld [vmem:[%s2249 + $0x1b0] sm:$0xff]
  %v2305 = vld [vmem:[%s2249 + $0x1b8] sm:$0xff]
  %v2306 = vld [vmem:[%s2249 + $0x1c0] sm:$0xff]
  %v2307 = vld [vmem:[%s2249 + $0x1c8] sm:$0xff]
  %v2308 = vld [vmem:[%s2249 + $0x1d0] sm:$0xff]
  %v2309 = vld [vmem:[%s2249 + $0x1d8] sm:$0xff]
  %v2310 = vld [vmem:[%s2249 + $0x1e0] sm:$0xff]
  %v2311 = vld [vmem:[%s2249 + $0x1e8] sm:$0xff]
  %v2312 = vld [vmem:[%s2249 + $0x1f0] sm:$0xff]
  %v2313 = vld [vmem:[%s2249 + $0x1f8] sm:$0xff]
  %v2314 = vld [vmem:[%s2249 + $0x200] sm:$0xff]
  %v2315 = vld [vmem:[%s2249 + $0x208] sm:$0xff]
  %v2316 = vld [vmem:[%s2249 + $0x210] sm:$0xff]
  %v2317 = vld [vmem:[%s2249 + $0x218] sm:$0xff]
  %v2318 = vld [vmem:[%s2249 + $0x220] sm:$0xff]
  %v2319 = vld [vmem:[%s2249 + $0x228] sm:$0xff]
  %v2320 = vld [vmem:[%s2249 + $0x230] sm:$0xff]
  %v2321 = vld [vmem:[%s2249 + $0x238] sm:$0xff]
  %v2322 = vld [vmem:[%s2249 + $0x240] sm:$0xff]
  %v2323 = vld [vmem:[%s2249 + $0x248] sm:$0xff]
  %v2324 = vld [vmem:[%s2249 + $0x250] sm:$0xff]
  %v2325 = vld [vmem:[%s2249 + $0x258] sm:$0xff]
  %v2326 = vld [vmem:[%s2249 + $0x260] sm:$0xff]
  %v2327 = vld [vmem:[%s2249 + $0x268] sm:$0xff]
  %v2328 = vld [vmem:[%s2249 + $0x270] sm:$0xff]
  %v2329 = vld [vmem:[%s2249 + $0x278] sm:$0xff]
  %v2330 = vld [vmem:[%s2249 + $0x280] sm:$0xff]
  %v2331 = vld [vmem:[%s2249 + $0x288] sm:$0xff]
  %v2332 = vld [vmem:[%s2249 + $0x290] sm:$0xff]
  %v2333 = vld [vmem:[%s2249 + $0x298] sm:$0xff]
  %v2334 = vld [vmem:[%s2249 + $0x2a0] sm:$0xff]
  %v2335 = vld [vmem:[%s2249 + $0x2a8] sm:$0xff]
  %v2336 = vld [vmem:[%s2249 + $0x2b0] sm:$0xff]
  %v2337 = vld [vmem:[%s2249 + $0x2b8] sm:$0xff]
  %v2338 = vld [vmem:[%s2249 + $0x2c0] sm:$0xff]
  %v2339 = vld [vmem:[%s2249 + $0x2c8] sm:$0xff]
  %v2340 = vld [vmem:[%s2249 + $0x2d0] sm:$0xff]
  %v2341 = vld [vmem:[%s2249 + $0x2d8] sm:$0xff]
  %v2342 = vld [vmem:[%s2249 + $0x2e0] sm:$0xff]
  %v2343 = vld [vmem:[%s2249 + $0x2e8] sm:$0xff]
  %v2344 = vld [vmem:[%s2249 + $0x2f0] sm:$0xff]
  %v2345 = vld [vmem:[%s2249 + $0x2f8] sm:$0xff]
  %v2346 = vld [vmem:[%s2249 + $0x300] sm:$0xff]
  %v2347 = vld [vmem:[%s2249 + $0x308] sm:$0xff]
  %v2348 = vld [vmem:[%s2249 + $0x310] sm:$0xff]
  %v2349 = vld [vmem:[%s2249 + $0x318] sm:$0xff]
  %v2350 = vld [vmem:[%s2249 + $0x320] sm:$0xff]
  %v2351 = vld [vmem:[%s2249 + $0x328] sm:$0xff]
  %v2352 = vld [vmem:[%s2249 + $0x330] sm:$0xff]
  %v2353 = vld [vmem:[%s2249 + $0x338] sm:$0xff]
  %v2354 = vld [vmem:[%s2249 + $0x340] sm:$0xff]
  %v2355 = vld [vmem:[%s2249 + $0x348] sm:$0xff]
  %v2356 = vld [vmem:[%s2249 + $0x350] sm:$0xff]
  %v2357 = vld [vmem:[%s2249 + $0x358] sm:$0xff]
  %v2358 = vld [vmem:[%s2249 + $0x360] sm:$0xff]
  %v2359 = vld [vmem:[%s2249 + $0x368] sm:$0xff]
  %v2360 = vld [vmem:[%s2249 + $0x370] sm:$0xff]
  %v2361 = vld [vmem:[%s2249 + $0x378] sm:$0xff]
  %v2362 = vld [vmem:[%s2249 + $0x380] sm:$0xff]
  %v2363 = vld [vmem:[%s2249 + $0x388] sm:$0xff]
  %v2364 = vld [vmem:[%s2249 + $0x390] sm:$0xff]
  %v2365 = vld [vmem:[%s2249 + $0x398] sm:$0xff]
  %v2366 = vld [vmem:[%s2249 + $0x3a0] sm:$0xff]
  %v2367 = vld [vmem:[%s2249 + $0x3a8] sm:$0xff]
  %v2368 = vld [vmem:[%s2249 + $0x3b0] sm:$0xff]
  %v2369 = vld [vmem:[%s2249 + $0x3b8] sm:$0xff]
  %v2370 = vld [vmem:[%s2249 + $0x3c0] sm:$0xff]
  %v2371 = vld [vmem:[%s2249 + $0x3c8] sm:$0xff]
  %v2372 = vld [vmem:[%s2249 + $0x3d0] sm:$0xff]
  %v2373 = vld [vmem:[%s2249 + $0x3d8] sm:$0xff]
  %v2374 = vld [vmem:[%s2249 + $0x3e0] sm:$0xff]
  %v2375 = vld [vmem:[%s2249 + $0x3e8] sm:$0xff]
  %v2376 = vld [vmem:[%s2249 + $0x3f0] sm:$0xff]
  %v2377 = vld [vmem:[%s2249 + $0x3f8] sm:$0xff]
  %v2378 = vld [vmem:[%s2249 + $0x400] sm:$0xff]
  %v2379 = vld [vmem:[%s2249 + $0x408] sm:$0xff]
  %v2380 = vld [vmem:[%s2249 + $0x410] sm:$0xff]
  %v2381 = vld [vmem:[%s2249 + $0x418] sm:$0xff]
  %v2382 = vld [vmem:[%s2249 + $0x420] sm:$0xff]
  %v2383 = vld [vmem:[%s2249 + $0x428] sm:$0xff]
  %v2384 = vld [vmem:[%s2249 + $0x430] sm:$0xff]
  %v2385 = vld [vmem:[%s2249 + $0x438] sm:$0xff]
  %v2386 = vld [vmem:[%s2249 + $0x440] sm:$0xff]
  %v2387 = vld [vmem:[%s2249 + $0x448] sm:$0xff]
  %v2388 = vld [vmem:[%s2249 + $0x450] sm:$0xff]
  %v2389 = vld [vmem:[%s2249 + $0x458] sm:$0xff]
  %v2390 = vld [vmem:[%s2249 + $0x460] sm:$0xff]
  %v2391 = vld [vmem:[%s2249 + $0x468] sm:$0xff]
  %v2392 = vld [vmem:[%s2249 + $0x470] sm:$0xff]
  %v2393 = vld [vmem:[%s2249 + $0x478] sm:$0xff]
  %v2394 = vld [vmem:[%s2249 + $0x480] sm:$0xff]
  %v2395 = vld [vmem:[%s2249 + $0x488] sm:$0xff]
  %v2396 = vld [vmem:[%s2249 + $0x490] sm:$0xff]
  %v2397 = vld [vmem:[%s2249 + $0x498] sm:$0xff]
  %v2398 = vld [vmem:[%s2249 + $0x4a0] sm:$0xff]
  %v2399 = vld [vmem:[%s2249 + $0x4a8] sm:$0xff]
  %v2400 = vld [vmem:[%s2249 + $0x4b0] sm:$0xff]
  %v2401 = vld [vmem:[%s2249 + $0x4b8] sm:$0xff]
  %v2402 = vld [vmem:[%s2249 + $0x4c0] sm:$0xff]
  %v2403 = vld [vmem:[%s2249 + $0x4c8] sm:$0xff]
  %v2404 = vld [vmem:[%s2249 + $0x4d0] sm:$0xff]
  %v2405 = vld [vmem:[%s2249 + $0x4d8] sm:$0xff]
  %v2406 = vld [vmem:[%s2249 + $0x4e0] sm:$0xff]
  %v2407 = vld [vmem:[%s2249 + $0x4e8] sm:$0xff]
  %v2408 = vld [vmem:[%s2249 + $0x4f0] sm:$0xff]
  %v2409 = vld [vmem:[%s2249 + $0x4f8] sm:$0xff]
  %v2410 = vld [vmem:[%s2249 + $0x500] sm:$0xff]
  %v2411 = vld [vmem:[%s2249 + $0x508] sm:$0xff]
  %v2412 = vld [vmem:[%s2249 + $0x510] sm:$0xff]
  %v2413 = vld [vmem:[%s2249 + $0x518] sm:$0xff]
  %v2414 = vld [vmem:[%s2249 + $0x520] sm:$0xff]
  %v2415 = vld [vmem:[%s2249 + $0x528] sm:$0xff]
  %v2416 = vld [vmem:[%s2249 + $0x530] sm:$0xff]
  %v2417 = vld [vmem:[%s2249 + $0x538] sm:$0xff]
  %v2418 = vld [vmem:[%s2249 + $0x540] sm:$0xff]
  %v2419 = vld [vmem:[%s2249 + $0x548] sm:$0xff]
  %v2420 = vld [vmem:[%s2249 + $0x550] sm:$0xff]
  %v2421 = vld [vmem:[%s2249 + $0x558] sm:$0xff]
  %v2422 = vld [vmem:[%s2249 + $0x560] sm:$0xff]
  %v2423 = vld [vmem:[%s2249 + $0x568] sm:$0xff]
  %v2424 = vld [vmem:[%s2249 + $0x570] sm:$0xff]
  %v2425 = vld [vmem:[%s2249 + $0x578] sm:$0xff]
  %v2426 = vld [vmem:[%s2249 + $0x580] sm:$0xff]
  %v2427 = vld [vmem:[%s2249 + $0x588] sm:$0xff]
  %v2428 = vld [vmem:[%s2249 + $0x590] sm:$0xff]
  %v2429 = vld [vmem:[%s2249 + $0x598] sm:$0xff]
  %v2430 = vld [vmem:[%s2249 + $0x5a0] sm:$0xff]
  %v2431 = vld [vmem:[%s2249 + $0x5a8] sm:$0xff]
  %v2432 = vld [vmem:[%s2249 + $0x5b0] sm:$0xff]
  %v2433 = vld [vmem:[%s2249 + $0x5b8] sm:$0xff]
  %v2434 = vld [vmem:[%s2249 + $0x5c0] sm:$0xff]
  %v2435 = vld [vmem:[%s2249 + $0x5c8] sm:$0xff]
  %v2436 = vld [vmem:[%s2249 + $0x5d0] sm:$0xff]
  %v2437 = vld [vmem:[%s2249 + $0x5d8] sm:$0xff]
  %v2438 = vld [vmem:[%s2249 + $0x5e0] sm:$0xff]
  %v2439 = vld [vmem:[%s2249 + $0x5e8] sm:$0xff]
  %v2440 = vld [vmem:[%s2249 + $0x5f0] sm:$0xff]
  %v2441 = vld [vmem:[%s2249 + $0x5f8] sm:$0xff]
  %v2442 = vld [vmem:[%s2249 + $0x600] sm:$0xff]
  %v2443 = vld [vmem:[%s2249 + $0x608] sm:$0xff]
  %v2444 = vld [vmem:[%s2249 + $0x610] sm:$0xff]
  %v2445 = vld [vmem:[%s2249 + $0x618] sm:$0xff]
  %v2446 = vld [vmem:[%s2249 + $0x620] sm:$0xff]
  %v2447 = vld [vmem:[%s2249 + $0x628] sm:$0xff]
  %v2448 = vld [vmem:[%s2249 + $0x630] sm:$0xff]
  %v2449 = vld [vmem:[%s2249 + $0x638] sm:$0xff]
  %v2450 = vld [vmem:[%s2249 + $0x640] sm:$0xff]
  %v2451 = vld [vmem:[%s2249 + $0x648] sm:$0xff]
  %v2452 = vld [vmem:[%s2249 + $0x650] sm:$0xff]
  %v2453 = vld [vmem:[%s2249 + $0x658] sm:$0xff]
  %v2454 = vld [vmem:[%s2249 + $0x660] sm:$0xff]
  %v2455 = vld [vmem:[%s2249 + $0x668] sm:$0xff]
  %v2456 = vld [vmem:[%s2249 + $0x670] sm:$0xff]
  %v2457 = vld [vmem:[%s2249 + $0x678] sm:$0xff]
  %v2458 = vld [vmem:[%s2249 + $0x680] sm:$0xff]
  %v2459 = vld [vmem:[%s2249 + $0x688] sm:$0xff]
  %v2460 = vld [vmem:[%s2249 + $0x690] sm:$0xff]
  %v2461 = vld [vmem:[%s2249 + $0x698] sm:$0xff]
  %v2462 = vld [vmem:[%s2249 + $0x6a0] sm:$0xff]
  %v2463 = vld [vmem:[%s2249 + $0x6a8] sm:$0xff]
  %v2464 = vld [vmem:[%s2249 + $0x6b0] sm:$0xff]
  %v2465 = vld [vmem:[%s2249 + $0x6b8] sm:$0xff]
  %v2466 = vld [vmem:[%s2249 + $0x6c0] sm:$0xff]
  %v2467 = vld [vmem:[%s2249 + $0x6c8] sm:$0xff]
  %v2468 = vld [vmem:[%s2249 + $0x6d0] sm:$0xff]
  %v2469 = vld [vmem:[%s2249 + $0x6d8] sm:$0xff]
  %v2470 = vld [vmem:[%s2249 + $0x6e0] sm:$0xff]
  %v2471 = vld [vmem:[%s2249 + $0x6e8] sm:$0xff]
  %v2472 = vld [vmem:[%s2249 + $0x6f0] sm:$0xff]
  %v2473 = vld [vmem:[%s2249 + $0x6f8] sm:$0xff]
  %v2474 = vld [vmem:[%s2249 + $0x700] sm:$0xff]
  %v2475 = vld [vmem:[%s2249 + $0x708] sm:$0xff]
  %v2476 = vld [vmem:[%s2249 + $0x710] sm:$0xff]
  %v2477 = vld [vmem:[%s2249 + $0x718] sm:$0xff]
  %v2478 = vld [vmem:[%s2249 + $0x720] sm:$0xff]
  %v2479 = vld [vmem:[%s2249 + $0x728] sm:$0xff]
  %v2480 = vld [vmem:[%s2249 + $0x730] sm:$0xff]
  %v2481 = vld [vmem:[%s2249 + $0x738] sm:$0xff]
  %v2482 = vld [vmem:[%s2249 + $0x740] sm:$0xff]
  %v2483 = vld [vmem:[%s2249 + $0x748] sm:$0xff]
  %v2484 = vld [vmem:[%s2249 + $0x750] sm:$0xff]
  %v2485 = vld [vmem:[%s2249 + $0x758] sm:$0xff]
  %v2486 = vld [vmem:[%s2249 + $0x760] sm:$0xff]
  %v2487 = vld [vmem:[%s2249 + $0x768] sm:$0xff]
  %v2488 = vld [vmem:[%s2249 + $0x770] sm:$0xff]
  %v2489 = vld [vmem:[%s2249 + $0x778] sm:$0xff]
  %v2490 = vld [vmem:[%s2249 + $0x780] sm:$0xff]
  %v2491 = vld [vmem:[%s2249 + $0x788] sm:$0xff]
  %v2492 = vld [vmem:[%s2249 + $0x790] sm:$0xff]
  %v2493 = vld [vmem:[%s2249 + $0x798] sm:$0xff]
  %v2494 = vld [vmem:[%s2249 + $0x7a0] sm:$0xf]
  %v2495 = vld [vmem:[%s2249 + $0x7a8] sm:$0xf]
  %v2497 = vsel %vm880, %v2494, 0
  %v2500 = vsel %vm880, %v2495, 0
  %2502 = vmatprep.subr.mxu0 %v2281
  %2503 = vmatpush1.msra.mxu0 %v2280
  %2504 = vmatprep.subr.mxu0 %v2279
  %2505 = vmatpush1.msra.mxu0 %v2278
  %2506 = vmatprep.subr.mxu0 %v2277
  %2507 = vmatpush1.msra.mxu0 %v2276
  %2508 = vmatprep.subr.mxu0 %v2275
  %2509 = vmatpush1.msra.mxu0 %v2274
  %2510 = vmatprep.subr.mxu0 %v2273
  %2511 = vmatpush1.msra.mxu0 %v2272
  %2512 = vmatprep.subr.mxu0 %v2271
  %2513 = vmatpush1.msra.mxu0 %v2270
  %2514 = vmatprep.subr.mxu0 %v2269
  %2515 = vmatpush1.msra.mxu0 %v2268
  %2516 = vmatprep.subr.mxu0 %v2267
  %2517 = vmatpush1.msra.mxu0 %v2266
  %2518 = vmatprep.subr.mxu0 %v2265
  %2519 = vmatpush1.msra.mxu0 %v2264
  %2520 = vmatprep.subr.mxu0 %v2263
  %2521 = vmatpush1.msra.mxu0 %v2262
  %2522 = vmatprep.subr.mxu0 %v2261
  %2523 = vmatpush1.msra.mxu0 %v2260
  %2524 = vmatprep.subr.mxu0 %v2259
  %2525 = vmatpush1.msra.mxu0 %v2258
  %2526 = vmatprep.subr.mxu0 %v2257
  %2527 = vmatpush1.msra.mxu0 %v2256
  %2528 = vmatprep.subr.mxu0 %v2255
  %2529 = vmatpush1.msra.mxu0 %v2254
  %2530 = vmatprep.subr.mxu0 %v2253
  %2531 = vmatpush1.msra.mxu0 %v2252
  %2532 = vmatprep.subr.mxu0 %v2251
  %2533 = vmatpush1.msra.mxu0 %v2250
  %2534 = vmatprep.subr.mxu0 %v2313
  %2535 = vmatpush2.msra.mxu0 %v2312
  %2536 = vmatprep.subr.mxu0 %v2311
  %2537 = vmatpush2.msra.mxu0 %v2310
  %2538 = vmatprep.subr.mxu0 %v2309
  %2539 = vmatpush2.msra.mxu0 %v2308
  %2540 = vmatprep.subr.mxu0 %v2307
  %2541 = vmatpush2.msra.mxu0 %v2306
  %2542 = vmatprep.subr.mxu0 %v2305
  %2543 = vmatpush2.msra.mxu0 %v2304
  %2544 = vmatprep.subr.mxu0 %v2303
  %2545 = vmatpush2.msra.mxu0 %v2302
  %2546 = vmatprep.subr.mxu0 %v2301
  %2547 = vmatpush2.msra.mxu0 %v2300
  %2548 = vmatprep.subr.mxu0 %v2299
  %2549 = vmatpush2.msra.mxu0 %v2298
  %2550 = vmatprep.subr.mxu0 %v2297
  %2551 = vmatpush2.msra.mxu0 %v2296
  %2552 = vmatprep.subr.mxu0 %v2295
  %2553 = vmatpush2.msra.mxu0 %v2294
  %2554 = vmatprep.subr.mxu0 %v2293
  %2555 = vmatpush2.msra.mxu0 %v2292
  %2556 = vmatprep.subr.mxu0 %v2291
  %2557 = vmatpush2.msra.mxu0 %v2290
  %2558 = vmatprep.subr.mxu0 %v2289
  %2559 = vmatpush2.msra.mxu0 %v2288
  %2560 = vmatprep.subr.mxu0 %v2287
  %2561 = vmatpush2.msra.mxu0 %v2286
  %2562 = vmatprep.subr.mxu0 %v2285
  %2563 = vmatpush2.msra.mxu0 %v2284
  %2564 = vmatprep.subr.mxu0 %v2283
  %2565 = vmatpush2.msra.mxu0 %v2282
  %2566 = vmatprep.mubr.f32.mxu0 %v623
  %2567 = vmatmul.mubr.f32.gmra.mxu0 %v622
  %v2568 = vpop.f32.mrf.mxu0
  %v2569 = vadd.f32 0.0, %v2568
  %v2570 = vpop.f32.mrf.mxu0
  %v2571 = vadd.f32 0.0, %v2570
  %2572 = vdwg.mxu0
  %2573 = vmatprep.subr.mxu0 %v2345
  %2574 = vmatpush1.msra.mxu0 %v2344
  %2575 = vmatprep.subr.mxu0 %v2343
  %2576 = vmatpush1.msra.mxu0 %v2342
  %2577 = vmatprep.subr.mxu0 %v2341
  %2578 = vmatpush1.msra.mxu0 %v2340
  %2579 = vmatprep.subr.mxu0 %v2339
  %2580 = vmatpush1.msra.mxu0 %v2338
  %2581 = vmatprep.subr.mxu0 %v2337
  %2582 = vmatpush1.msra.mxu0 %v2336
  %2583 = vmatprep.subr.mxu0 %v2335
  %2584 = vmatpush1.msra.mxu0 %v2334
  %2585 = vmatprep.subr.mxu0 %v2333
  %2586 = vmatpush1.msra.mxu0 %v2332
  %2587 = vmatprep.subr.mxu0 %v2331
  %2588 = vmatpush1.msra.mxu0 %v2330
  %2589 = vmatprep.subr.mxu0 %v2329
  %2590 = vmatpush1.msra.mxu0 %v2328
  %2591 = vmatprep.subr.mxu0 %v2327
  %2592 = vmatpush1.msra.mxu0 %v2326
  %2593 = vmatprep.subr.mxu0 %v2325
  %2594 = vmatpush1.msra.mxu0 %v2324
  %2595 = vmatprep.subr.mxu0 %v2323
  %2596 = vmatpush1.msra.mxu0 %v2322
  %2597 = vmatprep.subr.mxu0 %v2321
  %2598 = vmatpush1.msra.mxu0 %v2320
  %2599 = vmatprep.subr.mxu0 %v2319
  %2600 = vmatpush1.msra.mxu0 %v2318
  %2601 = vmatprep.subr.mxu0 %v2317
  %2602 = vmatpush1.msra.mxu0 %v2316
  %2603 = vmatprep.subr.mxu0 %v2315
  %2604 = vmatpush1.msra.mxu0 %v2314
  %2605 = vmatprep.subr.mxu0 %v2377
  %2606 = vmatpush2.msra.mxu0 %v2376
  %2607 = vmatprep.subr.mxu0 %v2375
  %2608 = vmatpush2.msra.mxu0 %v2374
  %2609 = vmatprep.subr.mxu0 %v2373
  %2610 = vmatpush2.msra.mxu0 %v2372
  %2611 = vmatprep.subr.mxu0 %v2371
  %2612 = vmatpush2.msra.mxu0 %v2370
  %2613 = vmatprep.subr.mxu0 %v2369
  %2614 = vmatpush2.msra.mxu0 %v2368
  %2615 = vmatprep.subr.mxu0 %v2367
  %2616 = vmatpush2.msra.mxu0 %v2366
  %2617 = vmatprep.subr.mxu0 %v2365
  %2618 = vmatpush2.msra.mxu0 %v2364
  %2619 = vmatprep.subr.mxu0 %v2363
  %2620 = vmatpush2.msra.mxu0 %v2362
  %2621 = vmatprep.subr.mxu0 %v2361
  %2622 = vmatpush2.msra.mxu0 %v2360
  %2623 = vmatprep.subr.mxu0 %v2359
  %2624 = vmatpush2.msra.mxu0 %v2358
  %2625 = vmatprep.subr.mxu0 %v2357
  %2626 = vmatpush2.msra.mxu0 %v2356
  %2627 = vmatprep.subr.mxu0 %v2355
  %2628 = vmatpush2.msra.mxu0 %v2354
  %2629 = vmatprep.subr.mxu0 %v2353
  %2630 = vmatpush2.msra.mxu0 %v2352
  %2631 = vmatprep.subr.mxu0 %v2351
  %2632 = vmatpush2.msra.mxu0 %v2350
  %2633 = vmatprep.subr.mxu0 %v2349
  %2634 = vmatpush2.msra.mxu0 %v2348
  %2635 = vmatprep.subr.mxu0 %v2347
  %2636 = vmatpush2.msra.mxu0 %v2346
  %2637 = vmatprep.mubr.f32.mxu0 %v625
  %2638 = vmatmul.mubr.f32.gmra.mxu0 %v624
  %v2639 = vpop.f32.mrf.mxu0
  %v2640 = vadd.f32 %v2569, %v2639
  %v2641 = vpop.f32.mrf.mxu0
  %v2642 = vadd.f32 %v2571, %v2641
  %2643 = vdwg.mxu0
  %2644 = vmatprep.subr.mxu0 %v2409
  %2645 = vmatpush1.msra.mxu0 %v2408
  %2646 = vmatprep.subr.mxu0 %v2407
  %2647 = vmatpush1.msra.mxu0 %v2406
  %2648 = vmatprep.subr.mxu0 %v2405
  %2649 = vmatpush1.msra.mxu0 %v2404
  %2650 = vmatprep.subr.mxu0 %v2403
  %2651 = vmatpush1.msra.mxu0 %v2402
  %2652 = vmatprep.subr.mxu0 %v2401
  %2653 = vmatpush1.msra.mxu0 %v2400
  %2654 = vmatprep.subr.mxu0 %v2399
  %2655 = vmatpush1.msra.mxu0 %v2398
  %2656 = vmatprep.subr.mxu0 %v2397
  %2657 = vmatpush1.msra.mxu0 %v2396
  %2658 = vmatprep.subr.mxu0 %v2395
  %2659 = vmatpush1.msra.mxu0 %v2394
  %2660 = vmatprep.subr.mxu0 %v2393
  %2661 = vmatpush1.msra.mxu0 %v2392
  %2662 = vmatprep.subr.mxu0 %v2391
  %2663 = vmatpush1.msra.mxu0 %v2390
  %2664 = vmatprep.subr.mxu0 %v2389
  %2665 = vmatpush1.msra.mxu0 %v2388
  %2666 = vmatprep.subr.mxu0 %v2387
  %2667 = vmatpush1.msra.mxu0 %v2386
  %2668 = vmatprep.subr.mxu0 %v2385
  %2669 = vmatpush1.msra.mxu0 %v2384
  %2670 = vmatprep.subr.mxu0 %v2383
  %2671 = vmatpush1.msra.mxu0 %v2382
  %2672 = vmatprep.subr.mxu0 %v2381
  %2673 = vmatpush1.msra.mxu0 %v2380
  %2674 = vmatprep.subr.mxu0 %v2379
  %2675 = vmatpush1.msra.mxu0 %v2378
  %2676 = vmatprep.subr.mxu0 %v2441
  %2677 = vmatpush2.msra.mxu0 %v2440
  %2678 = vmatprep.subr.mxu0 %v2439
  %2679 = vmatpush2.msra.mxu0 %v2438
  %2680 = vmatprep.subr.mxu0 %v2437
  %2681 = vmatpush2.msra.mxu0 %v2436
  %2682 = vmatprep.subr.mxu0 %v2435
  %2683 = vmatpush2.msra.mxu0 %v2434
  %2684 = vmatprep.subr.mxu0 %v2433
  %2685 = vmatpush2.msra.mxu0 %v2432
  %2686 = vmatprep.subr.mxu0 %v2431
  %2687 = vmatpush2.msra.mxu0 %v2430
  %2688 = vmatprep.subr.mxu0 %v2429
  %2689 = vmatpush2.msra.mxu0 %v2428
  %2690 = vmatprep.subr.mxu0 %v2427
  %2691 = vmatpush2.msra.mxu0 %v2426
  %2692 = vmatprep.subr.mxu0 %v2425
  %2693 = vmatpush2.msra.mxu0 %v2424
  %2694 = vmatprep.subr.mxu0 %v2423
  %2695 = vmatpush2.msra.mxu0 %v2422
  %2696 = vmatprep.subr.mxu0 %v2421
  %2697 = vmatpush2.msra.mxu0 %v2420
  %2698 = vmatprep.subr.mxu0 %v2419
  %2699 = vmatpush2.msra.mxu0 %v2418
  %2700 = vmatprep.subr.mxu0 %v2417
  %2701 = vmatpush2.msra.mxu0 %v2416
  %2702 = vmatprep.subr.mxu0 %v2415
  %2703 = vmatpush2.msra.mxu0 %v2414
  %2704 = vmatprep.subr.mxu0 %v2413
  %2705 = vmatpush2.msra.mxu0 %v2412
  %2706 = vmatprep.subr.mxu0 %v2411
  %2707 = vmatpush2.msra.mxu0 %v2410
  %2708 = vmatprep.mubr.f32.mxu0 %v627
  %2709 = vmatmul.mubr.f32.gmra.mxu0 %v626
  %v2710 = vpop.f32.mrf.mxu0
  %v2711 = vadd.f32 %v2640, %v2710
  %v2712 = vpop.f32.mrf.mxu0
  %v2713 = vadd.f32 %v2642, %v2712
  %2714 = vdwg.mxu0
  %2715 = vmatprep.subr.mxu0 %v2473
  %2716 = vmatpush1.msra.mxu0 %v2472
  %2717 = vmatprep.subr.mxu0 %v2471
  %2718 = vmatpush1.msra.mxu0 %v2470
  %2719 = vmatprep.subr.mxu0 %v2469
  %2720 = vmatpush1.msra.mxu0 %v2468
  %2721 = vmatprep.subr.mxu0 %v2467
  %2722 = vmatpush1.msra.mxu0 %v2466
  %2723 = vmatprep.subr.mxu0 %v2465
  %2724 = vmatpush1.msra.mxu0 %v2464
  %2725 = vmatprep.subr.mxu0 %v2463
  %2726 = vmatpush1.msra.mxu0 %v2462
  %2727 = vmatprep.subr.mxu0 %v2461
  %2728 = vmatpush1.msra.mxu0 %v2460
  %2729 = vmatprep.subr.mxu0 %v2459
  %2730 = vmatpush1.msra.mxu0 %v2458
  %2731 = vmatprep.subr.mxu0 %v2457
  %2732 = vmatpush1.msra.mxu0 %v2456
  %2733 = vmatprep.subr.mxu0 %v2455
  %2734 = vmatpush1.msra.mxu0 %v2454
  %2735 = vmatprep.subr.mxu0 %v2453
  %2736 = vmatpush1.msra.mxu0 %v2452
  %2737 = vmatprep.subr.mxu0 %v2451
  %2738 = vmatpush1.msra.mxu0 %v2450
  %2739 = vmatprep.subr.mxu0 %v2449
  %2740 = vmatpush1.msra.mxu0 %v2448
  %2741 = vmatprep.subr.mxu0 %v2447
  %2742 = vmatpush1.msra.mxu0 %v2446
  %2743 = vmatprep.subr.mxu0 %v2445
  %2744 = vmatpush1.msra.mxu0 %v2444
  %2745 = vmatprep.subr.mxu0 %v2443
  %2746 = vmatpush1.msra.mxu0 %v2442
  %2747 = vmatprep.subr.mxu0 0.0
  %2748 = vmatpush2.msra.mxu0 0.0
  %2749 = vmatprep.subr.mxu0 0.0
  %2750 = vmatpush2.msra.mxu0 0.0
  %2751 = vmatprep.subr.mxu0 0.0
  %2752 = vmatpush2.msra.mxu0 0.0
  %2753 = vmatprep.subr.mxu0 0.0
  %2754 = vmatpush2.msra.mxu0 0.0
  %2755 = vmatprep.subr.mxu0 0.0
  %2756 = vmatpush2.msra.mxu0 0.0
  %2757 = vmatprep.subr.mxu0 %v2500
  %2758 = vmatpush2.msra.mxu0 %v2497
  %2759 = vmatprep.subr.mxu0 %v2493
  %2760 = vmatpush2.msra.mxu0 %v2492
  %2761 = vmatprep.subr.mxu0 %v2491
  %2762 = vmatpush2.msra.mxu0 %v2490
  %2763 = vmatprep.subr.mxu0 %v2489
  %2764 = vmatpush2.msra.mxu0 %v2488
  %2765 = vmatprep.subr.mxu0 %v2487
  %2766 = vmatpush2.msra.mxu0 %v2486
  %2767 = vmatprep.subr.mxu0 %v2485
  %2768 = vmatpush2.msra.mxu0 %v2484
  %2769 = vmatprep.subr.mxu0 %v2483
  %2770 = vmatpush2.msra.mxu0 %v2482
  %2771 = vmatprep.subr.mxu0 %v2481
  %2772 = vmatpush2.msra.mxu0 %v2480
  %2773 = vmatprep.subr.mxu0 %v2479
  %2774 = vmatpush2.msra.mxu0 %v2478
  %2775 = vmatprep.subr.mxu0 %v2477
  %2776 = vmatpush2.msra.mxu0 %v2476
  %2777 = vmatprep.subr.mxu0 %v2475
  %2778 = vmatpush2.msra.mxu0 %v2474
  %2779 = vmatprep.mubr.f32.mxu0 %v878
  %2780 = vmatmul.mubr.f32.gmra.mxu0 %v628
  %v2781 = vpop.f32.mrf.mxu0
  %v2782 = vadd.f32 %v2711, %v2781
  %v2783 = vpop.f32.mrf.mxu0
  %v2784 = vadd.f32 %v2713, %v2783
  %2785 = vdwg.mxu0
  %v2786 = vmax.f32 %v2247, %v2782
  %v2787 = vmax.f32 %v2248, %v2784
  %v2788 = vld [vmem:[%s4] sm:$0xff]
  %v2789 = vld [vmem:[%s4 + $0x8] sm:$0xff]
  %v2790 = vld [vmem:[%s4 + $0x10] sm:$0xff]
  %v2791 = vld [vmem:[%s4 + $0x18] sm:$0xff]
  %v2792 = vld [vmem:[%s4 + $0x20] sm:$0xff]
  %v2793 = vld [vmem:[%s4 + $0x28] sm:$0xff]
  %v2794 = vld [vmem:[%s4 + $0x30] sm:$0xff]
  %v2795 = vld [vmem:[%s4 + $0x38] sm:$0xff]
  %v2796 = vld [vmem:[%s4 + $0x40] sm:$0xff]
  %v2797 = vld [vmem:[%s4 + $0x48] sm:$0xff]
  %v2798 = vld [vmem:[%s4 + $0x50] sm:$0xff]
  %v2799 = vld [vmem:[%s4 + $0x58] sm:$0xff]
  %v2800 = vld [vmem:[%s4 + $0x60] sm:$0xff]
  %v2801 = vld [vmem:[%s4 + $0x68] sm:$0xff]
  %v2802 = vld [vmem:[%s4 + $0x70] sm:$0xff]
  %v2803 = vld [vmem:[%s4 + $0x78] sm:$0xff]
  %v2804 = vld [vmem:[%s4 + $0x80] sm:$0xff]
  %v2805 = vld [vmem:[%s4 + $0x88] sm:$0xff]
  %v2806 = vld [vmem:[%s4 + $0x90] sm:$0xff]
  %v2807 = vld [vmem:[%s4 + $0x98] sm:$0xff]
  %v2808 = vld [vmem:[%s4 + $0xa0] sm:$0xff]
  %v2809 = vld [vmem:[%s4 + $0xa8] sm:$0xff]
  %v2810 = vld [vmem:[%s4 + $0xb0] sm:$0xff]
  %v2811 = vld [vmem:[%s4 + $0xb8] sm:$0xff]
  %v2812 = vld [vmem:[%s4 + $0xc0] sm:$0xff]
  %v2813 = vld [vmem:[%s4 + $0xc8] sm:$0xff]
  %v2814 = vld [vmem:[%s4 + $0xd0] sm:$0xff]
  %v2815 = vld [vmem:[%s4 + $0xd8] sm:$0xff]
  %v2816 = vld [vmem:[%s4 + $0xe0] sm:$0xff]
  %v2817 = vld [vmem:[%s4 + $0xe8] sm:$0xff]
  %v2818 = vld [vmem:[%s4 + $0xf0] sm:$0xff]
  %v2819 = vld [vmem:[%s4 + $0xf8] sm:$0xff]
  %v2820 = vld [vmem:[%s4 + $0x100] sm:$0xff]
  %v2821 = vld [vmem:[%s4 + $0x108] sm:$0xff]
  %v2822 = vld [vmem:[%s4 + $0x110] sm:$0xff]
  %v2823 = vld [vmem:[%s4 + $0x118] sm:$0xff]
  %v2824 = vld [vmem:[%s4 + $0x120] sm:$0xff]
  %v2825 = vld [vmem:[%s4 + $0x128] sm:$0xff]
  %v2826 = vld [vmem:[%s4 + $0x130] sm:$0xff]
  %v2827 = vld [vmem:[%s4 + $0x138] sm:$0xff]
  %v2828 = vld [vmem:[%s4 + $0x140] sm:$0xff]
  %v2829 = vld [vmem:[%s4 + $0x148] sm:$0xff]
  %v2830 = vld [vmem:[%s4 + $0x150] sm:$0xff]
  %v2831 = vld [vmem:[%s4 + $0x158] sm:$0xff]
  %v2832 = vld [vmem:[%s4 + $0x160] sm:$0xff]
  %v2833 = vld [vmem:[%s4 + $0x168] sm:$0xff]
  %v2834 = vld [vmem:[%s4 + $0x170] sm:$0xff]
  %v2835 = vld [vmem:[%s4 + $0x178] sm:$0xff]
  %v2836 = vld [vmem:[%s4 + $0x180] sm:$0xff]
  %v2837 = vld [vmem:[%s4 + $0x188] sm:$0xff]
  %v2838 = vld [vmem:[%s4 + $0x190] sm:$0xff]
  %v2839 = vld [vmem:[%s4 + $0x198] sm:$0xff]
  %v2840 = vld [vmem:[%s4 + $0x1a0] sm:$0xff]
  %v2841 = vld [vmem:[%s4 + $0x1a8] sm:$0xff]
  %v2842 = vld [vmem:[%s4 + $0x1b0] sm:$0xff]
  %v2843 = vld [vmem:[%s4 + $0x1b8] sm:$0xff]
  %v2844 = vld [vmem:[%s4 + $0x1c0] sm:$0xff]
  %v2845 = vld [vmem:[%s4 + $0x1c8] sm:$0xff]
  %v2846 = vld [vmem:[%s4 + $0x1d0] sm:$0xff]
  %v2847 = vld [vmem:[%s4 + $0x1d8] sm:$0xff]
  %v2848 = vld [vmem:[%s4 + $0x1e0] sm:$0x1f]
  %v2849 = vld [vmem:[%s4 + $0x1e8] sm:$0x1f]
  %v2850 = vld [vmem:[%s5] sm:$0x3]
  %v2852 = vlaneseq
  %v2853 = vshrl.u32 %v2852, 7
  %v2854 = vsub.s32 0, %v2853
  %v2855 = vrot.slane %v2850, %v2854
  %v2856 = vlaneseq
  %v2857 = vshrl.u32 %v2856, 7
  %v2858 = vsub.s32 1, %v2857
  %v2859 = vrot.slane %v2850, %v2858
  %vm2862 = vcmask 957440
  %v2864 = vsel %vm2862, %v2787, 0
  %vm2866 = vcmask 1044480
  %v2868 = vsel %vm2866, %v2848, 0
  %v2871 = vsel %vm2866, %v2849, 0
  %2873 = vmatprep.subr.mxu0 %v2819
  %2874 = vmatpush1.msra.mxu0 %v2818
  %2875 = vmatprep.subr.mxu0 %v2817
  %2876 = vmatpush1.msra.mxu0 %v2816
  %2877 = vmatprep.subr.mxu0 %v2815
  %2878 = vmatpush1.msra.mxu0 %v2814
  %2879 = vmatprep.subr.mxu0 %v2813
  %2880 = vmatpush1.msra.mxu0 %v2812
  %2881 = vmatprep.subr.mxu0 %v2811
  %2882 = vmatpush1.msra.mxu0 %v2810
  %2883 = vmatprep.subr.mxu0 %v2809
  %2884 = vmatpush1.msra.mxu0 %v2808
  %2885 = vmatprep.subr.mxu0 %v2807
  %2886 = vmatpush1.msra.mxu0 %v2806
  %2887 = vmatprep.subr.mxu0 %v2805
  %2888 = vmatpush1.msra.mxu0 %v2804
  %2889 = vmatprep.subr.mxu0 %v2803
  %2890 = vmatpush1.msra.mxu0 %v2802
  %2891 = vmatprep.subr.mxu0 %v2801
  %2892 = vmatpush1.msra.mxu0 %v2800
  %2893 = vmatprep.subr.mxu0 %v2799
  %2894 = vmatpush1.msra.mxu0 %v2798
  %2895 = vmatprep.subr.mxu0 %v2797
  %2896 = vmatpush1.msra.mxu0 %v2796
  %2897 = vmatprep.subr.mxu0 %v2795
  %2898 = vmatpush1.msra.mxu0 %v2794
  %2899 = vmatprep.subr.mxu0 %v2793
  %2900 = vmatpush1.msra.mxu0 %v2792
  %2901 = vmatprep.subr.mxu0 %v2791
  %2902 = vmatpush1.msra.mxu0 %v2790
  %2903 = vmatprep.subr.mxu0 %v2789
  %2904 = vmatpush1.msra.mxu0 %v2788
  %2905 = vmatprep.subr.mxu0 0.0
  %2906 = vmatpush2.msra.mxu0 0.0
  %2907 = vmatprep.subr.mxu0 %v2871
  %2908 = vmatpush2.msra.mxu0 %v2868
  %2909 = vmatprep.subr.mxu0 %v2847
  %2910 = vmatpush2.msra.mxu0 %v2846
  %2911 = vmatprep.subr.mxu0 %v2845
  %2912 = vmatpush2.msra.mxu0 %v2844
  %2913 = vmatprep.subr.mxu0 %v2843
  %2914 = vmatpush2.msra.mxu0 %v2842
  %2915 = vmatprep.subr.mxu0 %v2841
  %2916 = vmatpush2.msra.mxu0 %v2840
  %2917 = vmatprep.subr.mxu0 %v2839
  %2918 = vmatpush2.msra.mxu0 %v2838
  %2919 = vmatprep.subr.mxu0 %v2837
  %2920 = vmatpush2.msra.mxu0 %v2836
  %2921 = vmatprep.subr.mxu0 %v2835
  %2922 = vmatpush2.msra.mxu0 %v2834
  %2923 = vmatprep.subr.mxu0 %v2833
  %2924 = vmatpush2.msra.mxu0 %v2832
  %2925 = vmatprep.subr.mxu0 %v2831
  %2926 = vmatpush2.msra.mxu0 %v2830
  %2927 = vmatprep.subr.mxu0 %v2829
  %2928 = vmatpush2.msra.mxu0 %v2828
  %2929 = vmatprep.subr.mxu0 %v2827
  %2930 = vmatpush2.msra.mxu0 %v2826
  %2931 = vmatprep.subr.mxu0 %v2825
  %2932 = vmatpush2.msra.mxu0 %v2824
  %2933 = vmatprep.subr.mxu0 %v2823
  %2934 = vmatpush2.msra.mxu0 %v2822
  %2935 = vmatprep.subr.mxu0 %v2821
  %2936 = vmatpush2.msra.mxu0 %v2820
  %2937 = vmatprep.mubr.f32.mxu0 %v2864
  %2938 = vmatmul.mubr.f32.gmra.mxu0 %v2786
  %v2939 = vpop.f32.mrf.mxu0
  %v2940 = vadd.f32 %v2855, %v2939
  %v2941 = vpop.f32.mrf.mxu0
  %v2942 = vadd.f32 %v2859, %v2941
  %2943 = vdwg.mxu0
  %v2944 = vmax.f32 %v2940, 0.0
  %v2945 = vmax.f32 %v2942, 0.0
  %v2946 = vld [vmem:[%s6] sm:$0xff]
  %v2947 = vld [vmem:[%s6 + $0x8] sm:$0xff]
  %v2948 = vld [vmem:[%s6 + $0x10] sm:$0xff]
  %v2949 = vld [vmem:[%s6 + $0x18] sm:$0xff]
  %v2950 = vld [vmem:[%s6 + $0x20] sm:$0xff]
  %v2951 = vld [vmem:[%s6 + $0x28] sm:$0xff]
  %v2952 = vld [vmem:[%s6 + $0x30] sm:$0xff]
  %v2953 = vld [vmem:[%s6 + $0x38] sm:$0xff]
  %v2954 = vld [vmem:[%s6 + $0x40] sm:$0xff]
  %v2955 = vld [vmem:[%s6 + $0x48] sm:$0xff]
  %v2956 = vld [vmem:[%s6 + $0x50] sm:$0xff]
  %v2957 = vld [vmem:[%s6 + $0x58] sm:$0xff]
  %v2958 = vld [vmem:[%s6 + $0x60] sm:$0xff]
  %v2959 = vld [vmem:[%s6 + $0x68] sm:$0xff]
  %v2960 = vld [vmem:[%s6 + $0x70] sm:$0xff]
  %v2961 = vld [vmem:[%s6 + $0x78] sm:$0xff]
  %v2962 = vld [vmem:[%s6 + $0x80] sm:$0xff]
  %v2963 = vld [vmem:[%s6 + $0x88] sm:$0xff]
  %v2964 = vld [vmem:[%s6 + $0x90] sm:$0xff]
  %v2965 = vld [vmem:[%s6 + $0x98] sm:$0xff]
  %v2966 = vld [vmem:[%s6 + $0xa0] sm:$0xff]
  %v2967 = vld [vmem:[%s6 + $0xa8] sm:$0xff]
  %v2968 = vld [vmem:[%s6 + $0xb0] sm:$0xff]
  %v2969 = vld [vmem:[%s6 + $0xb8] sm:$0xff]
  %v2970 = vld [vmem:[%s6 + $0xc0] sm:$0xff]
  %v2971 = vld [vmem:[%s6 + $0xc8] sm:$0xff]
  %v2972 = vld [vmem:[%s6 + $0xd0] sm:$0xff]
  %v2973 = vld [vmem:[%s6 + $0xd8] sm:$0xff]
  %v2974 = vld [vmem:[%s6 + $0xe0] sm:$0xff]
  %v2975 = vld [vmem:[%s6 + $0xe8] sm:$0xff]
  %v2976 = vld [vmem:[%s6 + $0xf0] sm:$0xff]
  %v2977 = vld [vmem:[%s6 + $0xf8] sm:$0x3]
  %vm2978 = vcmask 998400
  %v2980 = vsel %vm2978, %v2945, 0
  %vm2982 = vcmask 1041408
  %v2984 = vsel %vm2982, %v2977, 0
  %2986 = vmatprep.subr.mxu0 0.0
  %2987 = vmatpush1.msra.mxu0 %v2961
  %2988 = vmatprep.subr.mxu0 0.0
  %2989 = vmatpush1.msra.mxu0 %v2960
  %2990 = vmatprep.subr.mxu0 0.0
  %2991 = vmatpush1.msra.mxu0 %v2959
  %2992 = vmatprep.subr.mxu0 0.0
  %2993 = vmatpush1.msra.mxu0 %v2958
  %2994 = vmatprep.subr.mxu0 0.0
  %2995 = vmatpush1.msra.mxu0 %v2957
  %2996 = vmatprep.subr.mxu0 0.0
  %2997 = vmatpush1.msra.mxu0 %v2956
  %2998 = vmatprep.subr.mxu0 0.0
  %2999 = vmatpush1.msra.mxu0 %v2955
  %3000 = vmatprep.subr.mxu0 0.0
  %3001 = vmatpush1.msra.mxu0 %v2954
  %3002 = vmatprep.subr.mxu0 0.0
  %3003 = vmatpush1.msra.mxu0 %v2953
  %3004 = vmatprep.subr.mxu0 0.0
  %3005 = vmatpush1.msra.mxu0 %v2952
  %3006 = vmatprep.subr.mxu0 0.0
  %3007 = vmatpush1.msra.mxu0 %v2951
  %3008 = vmatprep.subr.mxu0 0.0
  %3009 = vmatpush1.msra.mxu0 %v2950
  %3010 = vmatprep.subr.mxu0 0.0
  %3011 = vmatpush1.msra.mxu0 %v2949
  %3012 = vmatprep.subr.mxu0 0.0
  %3013 = vmatpush1.msra.mxu0 %v2948
  %3014 = vmatprep.subr.mxu0 0.0
  %3015 = vmatpush1.msra.mxu0 %v2947
  %3016 = vmatprep.subr.mxu0 0.0
  %3017 = vmatpush1.msra.mxu0 %v2946
  %3018 = vmatprep.subr.mxu0 0.0
  %3019 = vmatpush2.msra.mxu0 %v2984
  %3020 = vmatprep.subr.mxu0 0.0
  %3021 = vmatpush2.msra.mxu0 %v2976
  %3022 = vmatprep.subr.mxu0 0.0
  %3023 = vmatpush2.msra.mxu0 %v2975
  %3024 = vmatprep.subr.mxu0 0.0
  %3025 = vmatpush2.msra.mxu0 %v2974
  %3026 = vmatprep.subr.mxu0 0.0
  %3027 = vmatpush2.msra.mxu0 %v2973
  %3028 = vmatprep.subr.mxu0 0.0
  %3029 = vmatpush2.msra.mxu0 %v2972
  %3030 = vmatprep.subr.mxu0 0.0
  %3031 = vmatpush2.msra.mxu0 %v2971
  %3032 = vmatprep.subr.mxu0 0.0
  %3033 = vmatpush2.msra.mxu0 %v2970
  %3034 = vmatprep.subr.mxu0 0.0
  %3035 = vmatpush2.msra.mxu0 %v2969
  %3036 = vmatprep.subr.mxu0 0.0
  %3037 = vmatpush2.msra.mxu0 %v2968
  %3038 = vmatprep.subr.mxu0 0.0
  %3039 = vmatpush2.msra.mxu0 %v2967
  %3040 = vmatprep.subr.mxu0 0.0
  %3041 = vmatpush2.msra.mxu0 %v2966
  %3042 = vmatprep.subr.mxu0 0.0
  %3043 = vmatpush2.msra.mxu0 %v2965
  %3044 = vmatprep.subr.mxu0 0.0
  %3045 = vmatpush2.msra.mxu0 %v2964
  %3046 = vmatprep.subr.mxu0 0.0
  %3047 = vmatpush2.msra.mxu0 %v2963
  %3048 = vmatprep.subr.mxu0 0.0
  %3049 = vmatpush2.msra.mxu0 %v2962
  %3050 = vmatprep.mubr.f32.mxu0 %v2980
  %3051 = vmatmul.mubr.f32.gmra.mxu0 %v2944
  %v3052 = vpop.f32.mrf.mxu0
  %v3053 = vadd.f32 0.0, %v3052
  %v3054 = vpop.f32.mrf.mxu0
  %3055 = vdwg.mxu0
  %s3056 = scalar_lea.vmem %s6, 256
  %v3057 = vld [vmem:[%s3056] sm:$0xff]
  %v3058 = vld [vmem:[%s3056 + $0x8] sm:$0xff]
  %v3059 = vld [vmem:[%s3056 + $0x10] sm:$0xff]
  %v3060 = vld [vmem:[%s3056 + $0x18] sm:$0xff]
  %v3061 = vld [vmem:[%s3056 + $0x20] sm:$0xff]
  %v3062 = vld [vmem:[%s3056 + $0x28] sm:$0xff]
  %v3063 = vld [vmem:[%s3056 + $0x30] sm:$0xff]
  %v3064 = vld [vmem:[%s3056 + $0x38] sm:$0xff]
  %v3065 = vld [vmem:[%s3056 + $0x40] sm:$0xff]
  %v3066 = vld [vmem:[%s3056 + $0x48] sm:$0xff]
  %v3067 = vld [vmem:[%s3056 + $0x50] sm:$0xff]
  %v3068 = vld [vmem:[%s3056 + $0x58] sm:$0xff]
  %v3069 = vld [vmem:[%s3056 + $0x60] sm:$0xff]
  %v3070 = vld [vmem:[%s3056 + $0x68] sm:$0xff]
  %v3071 = vld [vmem:[%s3056 + $0x70] sm:$0xff]
  %v3072 = vld [vmem:[%s3056 + $0x78] sm:$0xff]
  %v3073 = vld [vmem:[%s3056 + $0x80] sm:$0xff]
  %v3074 = vld [vmem:[%s3056 + $0x88] sm:$0xff]
  %v3075 = vld [vmem:[%s3056 + $0x90] sm:$0xff]
  %v3076 = vld [vmem:[%s3056 + $0x98] sm:$0xff]
  %v3077 = vld [vmem:[%s3056 + $0xa0] sm:$0xff]
  %v3078 = vld [vmem:[%s3056 + $0xa8] sm:$0xff]
  %v3079 = vld [vmem:[%s3056 + $0xb0] sm:$0xff]
  %v3080 = vld [vmem:[%s3056 + $0xb8] sm:$0xff]
  %v3081 = vld [vmem:[%s3056 + $0xc0] sm:$0xff]
  %v3082 = vld [vmem:[%s3056 + $0xc8] sm:$0xff]
  %v3083 = vld [vmem:[%s3056 + $0xd0] sm:$0xff]
  %v3084 = vld [vmem:[%s3056 + $0xd8] sm:$0xff]
  %v3085 = vld [vmem:[%s3056 + $0xe0] sm:$0xff]
  %v3086 = vld [vmem:[%s3056 + $0xe8] sm:$0xff]
  %v3087 = vld [vmem:[%s3056 + $0xf0] sm:$0xff]
  %v3088 = vld [vmem:[%s3056 + $0xf8] sm:$0x3]
  %v3090 = vsel %vm2982, %v3088, 0
  %3092 = vmatprep.subr.mxu0 0.0
  %3093 = vmatpush1.msra.mxu0 %v3072
  %3094 = vmatprep.subr.mxu0 0.0
  %3095 = vmatpush1.msra.mxu0 %v3071
  %3096 = vmatprep.subr.mxu0 0.0
  %3097 = vmatpush1.msra.mxu0 %v3070
  %3098 = vmatprep.subr.mxu0 0.0
  %3099 = vmatpush1.msra.mxu0 %v3069
  %3100 = vmatprep.subr.mxu0 0.0
  %3101 = vmatpush1.msra.mxu0 %v3068
  %3102 = vmatprep.subr.mxu0 0.0
  %3103 = vmatpush1.msra.mxu0 %v3067
  %3104 = vmatprep.subr.mxu0 0.0
  %3105 = vmatpush1.msra.mxu0 %v3066
  %3106 = vmatprep.subr.mxu0 0.0
  %3107 = vmatpush1.msra.mxu0 %v3065
  %3108 = vmatprep.subr.mxu0 0.0
  %3109 = vmatpush1.msra.mxu0 %v3064
  %3110 = vmatprep.subr.mxu0 0.0
  %3111 = vmatpush1.msra.mxu0 %v3063
  %3112 = vmatprep.subr.mxu0 0.0
  %3113 = vmatpush1.msra.mxu0 %v3062
  %3114 = vmatprep.subr.mxu0 0.0
  %3115 = vmatpush1.msra.mxu0 %v3061
  %3116 = vmatprep.subr.mxu0 0.0
  %3117 = vmatpush1.msra.mxu0 %v3060
  %3118 = vmatprep.subr.mxu0 0.0
  %3119 = vmatpush1.msra.mxu0 %v3059
  %3120 = vmatprep.subr.mxu0 0.0
  %3121 = vmatpush1.msra.mxu0 %v3058
  %3122 = vmatprep.subr.mxu0 0.0
  %3123 = vmatpush1.msra.mxu0 %v3057
  %3124 = vmatprep.subr.mxu0 0.0
  %3125 = vmatpush2.msra.mxu0 %v3090
  %3126 = vmatprep.subr.mxu0 0.0
  %3127 = vmatpush2.msra.mxu0 %v3087
  %3128 = vmatprep.subr.mxu0 0.0
  %3129 = vmatpush2.msra.mxu0 %v3086
  %3130 = vmatprep.subr.mxu0 0.0
  %3131 = vmatpush2.msra.mxu0 %v3085
  %3132 = vmatprep.subr.mxu0 0.0
  %3133 = vmatpush2.msra.mxu0 %v3084
  %3134 = vmatprep.subr.mxu0 0.0
  %3135 = vmatpush2.msra.mxu0 %v3083
  %3136 = vmatprep.subr.mxu0 0.0
  %3137 = vmatpush2.msra.mxu0 %v3082
  %3138 = vmatprep.subr.mxu0 0.0
  %3139 = vmatpush2.msra.mxu0 %v3081
  %3140 = vmatprep.subr.mxu0 0.0
  %3141 = vmatpush2.msra.mxu0 %v3080
  %3142 = vmatprep.subr.mxu0 0.0
  %3143 = vmatpush2.msra.mxu0 %v3079
  %3144 = vmatprep.subr.mxu0 0.0
  %3145 = vmatpush2.msra.mxu0 %v3078
  %3146 = vmatprep.subr.mxu0 0.0
  %3147 = vmatpush2.msra.mxu0 %v3077
  %3148 = vmatprep.subr.mxu0 0.0
  %3149 = vmatpush2.msra.mxu0 %v3076
  %3150 = vmatprep.subr.mxu0 0.0
  %3151 = vmatpush2.msra.mxu0 %v3075
  %3152 = vmatprep.subr.mxu0 0.0
  %3153 = vmatpush2.msra.mxu0 %v3074
  %3154 = vmatprep.subr.mxu0 0.0
  %3155 = vmatpush2.msra.mxu0 %v3073
  %3156 = vmatprep.mubr.f32.mxu0 %v2980
  %3157 = vmatmul.mubr.f32.gmra.mxu0 %v2944
  %v3158 = vpop.f32.mrf.mxu0
  %v3159 = vadd.f32 0.0, %v3158
  %v3160 = vpop.f32.mrf.mxu0
  %3161 = vdwg.mxu0
  %v3162 = vmax.f32 %v3053, %v3159
  %s3163 = scalar_lea.vmem %s6, 512
  %v3164 = vld [vmem:[%s3163] sm:$0xff]
  %v3165 = vld [vmem:[%s3163 + $0x8] sm:$0xff]
  %v3166 = vld [vmem:[%s3163 + $0x10] sm:$0xff]
  %v3167 = vld [vmem:[%s3163 + $0x18] sm:$0xff]
  %v3168 = vld [vmem:[%s3163 + $0x20] sm:$0xff]
  %v3169 = vld [vmem:[%s3163 + $0x28] sm:$0xff]
  %v3170 = vld [vmem:[%s3163 + $0x30] sm:$0xff]
  %v3171 = vld [vmem:[%s3163 + $0x38] sm:$0xff]
  %v3172 = vld [vmem:[%s3163 + $0x40] sm:$0xff]
  %v3173 = vld [vmem:[%s3163 + $0x48] sm:$0xff]
  %v3174 = vld [vmem:[%s3163 + $0x50] sm:$0xff]
  %v3175 = vld [vmem:[%s3163 + $0x58] sm:$0xff]
  %v3176 = vld [vmem:[%s3163 + $0x60] sm:$0xff]
  %v3177 = vld [vmem:[%s3163 + $0x68] sm:$0xff]
  %v3178 = vld [vmem:[%s3163 + $0x70] sm:$0xff]
  %v3179 = vld [vmem:[%s3163 + $0x78] sm:$0xff]
  %v3180 = vld [vmem:[%s3163 + $0x80] sm:$0xff]
  %v3181 = vld [vmem:[%s3163 + $0x88] sm:$0xff]
  %v3182 = vld [vmem:[%s3163 + $0x90] sm:$0xff]
  %v3183 = vld [vmem:[%s3163 + $0x98] sm:$0xff]
  %v3184 = vld [vmem:[%s3163 + $0xa0] sm:$0xff]
  %v3185 = vld [vmem:[%s3163 + $0xa8] sm:$0xff]
  %v3186 = vld [vmem:[%s3163 + $0xb0] sm:$0xff]
  %v3187 = vld [vmem:[%s3163 + $0xb8] sm:$0xff]
  %v3188 = vld [vmem:[%s3163 + $0xc0] sm:$0xff]
  %v3189 = vld [vmem:[%s3163 + $0xc8] sm:$0xff]
  %v3190 = vld [vmem:[%s3163 + $0xd0] sm:$0xff]
  %v3191 = vld [vmem:[%s3163 + $0xd8] sm:$0xff]
  %v3192 = vld [vmem:[%s3163 + $0xe0] sm:$0xff]
  %v3193 = vld [vmem:[%s3163 + $0xe8] sm:$0xff]
  %v3194 = vld [vmem:[%s3163 + $0xf0] sm:$0xff]
  %v3195 = vld [vmem:[%s3163 + $0xf8] sm:$0x3]
  %v3197 = vsel %vm2982, %v3195, 0
  %3199 = vmatprep.subr.mxu0 0.0
  %3200 = vmatpush1.msra.mxu0 %v3179
  %3201 = vmatprep.subr.mxu0 0.0
  %3202 = vmatpush1.msra.mxu0 %v3178
  %3203 = vmatprep.subr.mxu0 0.0
  %3204 = vmatpush1.msra.mxu0 %v3177
  %3205 = vmatprep.subr.mxu0 0.0
  %3206 = vmatpush1.msra.mxu0 %v3176
  %3207 = vmatprep.subr.mxu0 0.0
  %3208 = vmatpush1.msra.mxu0 %v3175
  %3209 = vmatprep.subr.mxu0 0.0
  %3210 = vmatpush1.msra.mxu0 %v3174
  %3211 = vmatprep.subr.mxu0 0.0
  %3212 = vmatpush1.msra.mxu0 %v3173
  %3213 = vmatprep.subr.mxu0 0.0
  %3214 = vmatpush1.msra.mxu0 %v3172
  %3215 = vmatprep.subr.mxu0 0.0
  %3216 = vmatpush1.msra.mxu0 %v3171
  %3217 = vmatprep.subr.mxu0 0.0
  %3218 = vmatpush1.msra.mxu0 %v3170
  %3219 = vmatprep.subr.mxu0 0.0
  %3220 = vmatpush1.msra.mxu0 %v3169
  %3221 = vmatprep.subr.mxu0 0.0
  %3222 = vmatpush1.msra.mxu0 %v3168
  %3223 = vmatprep.subr.mxu0 0.0
  %3224 = vmatpush1.msra.mxu0 %v3167
  %3225 = vmatprep.subr.mxu0 0.0
  %3226 = vmatpush1.msra.mxu0 %v3166
  %3227 = vmatprep.subr.mxu0 0.0
  %3228 = vmatpush1.msra.mxu0 %v3165
  %3229 = vmatprep.subr.mxu0 0.0
  %3230 = vmatpush1.msra.mxu0 %v3164
  %3231 = vmatprep.subr.mxu0 0.0
  %3232 = vmatpush2.msra.mxu0 %v3197
  %3233 = vmatprep.subr.mxu0 0.0
  %3234 = vmatpush2.msra.mxu0 %v3194
  %3235 = vmatprep.subr.mxu0 0.0
  %3236 = vmatpush2.msra.mxu0 %v3193
  %3237 = vmatprep.subr.mxu0 0.0
  %3238 = vmatpush2.msra.mxu0 %v3192
  %3239 = vmatprep.subr.mxu0 0.0
  %3240 = vmatpush2.msra.mxu0 %v3191
  %3241 = vmatprep.subr.mxu0 0.0
  %3242 = vmatpush2.msra.mxu0 %v3190
  %3243 = vmatprep.subr.mxu0 0.0
  %3244 = vmatpush2.msra.mxu0 %v3189
  %3245 = vmatprep.subr.mxu0 0.0
  %3246 = vmatpush2.msra.mxu0 %v3188
  %3247 = vmatprep.subr.mxu0 0.0
  %3248 = vmatpush2.msra.mxu0 %v3187
  %3249 = vmatprep.subr.mxu0 0.0
  %3250 = vmatpush2.msra.mxu0 %v3186
  %3251 = vmatprep.subr.mxu0 0.0
  %3252 = vmatpush2.msra.mxu0 %v3185
  %3253 = vmatprep.subr.mxu0 0.0
  %3254 = vmatpush2.msra.mxu0 %v3184
  %3255 = vmatprep.subr.mxu0 0.0
  %3256 = vmatpush2.msra.mxu0 %v3183
  %3257 = vmatprep.subr.mxu0 0.0
  %3258 = vmatpush2.msra.mxu0 %v3182
  %3259 = vmatprep.subr.mxu0 0.0
  %3260 = vmatpush2.msra.mxu0 %v3181
  %3261 = vmatprep.subr.mxu0 0.0
  %3262 = vmatpush2.msra.mxu0 %v3180
  %3263 = vmatprep.mubr.f32.mxu0 %v2980
  %3264 = vmatmul.mubr.f32.gmra.mxu0 %v2944
  %v3265 = vpop.f32.mrf.mxu0
  %v3266 = vadd.f32 0.0, %v3265
  %v3267 = vpop.f32.mrf.mxu0
  %3268 = vdwg.mxu0
  %v3269 = vmax.f32 %v3162, %v3266
  %s3270 = scalar_lea.vmem %s6, 768
  %v3271 = vld [vmem:[%s3270] sm:$0xff]
  %v3272 = vld [vmem:[%s3270 + $0x8] sm:$0xff]
  %v3273 = vld [vmem:[%s3270 + $0x10] sm:$0xff]
  %v3274 = vld [vmem:[%s3270 + $0x18] sm:$0xff]
  %v3275 = vld [vmem:[%s3270 + $0x20] sm:$0xff]
  %v3276 = vld [vmem:[%s3270 + $0x28] sm:$0xff]
  %v3277 = vld [vmem:[%s3270 + $0x30] sm:$0xff]
  %v3278 = vld [vmem:[%s3270 + $0x38] sm:$0xff]
  %v3279 = vld [vmem:[%s3270 + $0x40] sm:$0xff]
  %v3280 = vld [vmem:[%s3270 + $0x48] sm:$0xff]
  %v3281 = vld [vmem:[%s3270 + $0x50] sm:$0xff]
  %v3282 = vld [vmem:[%s3270 + $0x58] sm:$0xff]
  %v3283 = vld [vmem:[%s3270 + $0x60] sm:$0xff]
  %v3284 = vld [vmem:[%s3270 + $0x68] sm:$0xff]
  %v3285 = vld [vmem:[%s3270 + $0x70] sm:$0xff]
  %v3286 = vld [vmem:[%s3270 + $0x78] sm:$0xff]
  %v3287 = vld [vmem:[%s3270 + $0x80] sm:$0xff]
  %v3288 = vld [vmem:[%s3270 + $0x88] sm:$0xff]
  %v3289 = vld [vmem:[%s3270 + $0x90] sm:$0xff]
  %v3290 = vld [vmem:[%s3270 + $0x98] sm:$0xff]
  %v3291 = vld [vmem:[%s3270 + $0xa0] sm:$0xff]
  %v3292 = vld [vmem:[%s3270 + $0xa8] sm:$0xff]
  %v3293 = vld [vmem:[%s3270 + $0xb0] sm:$0xff]
  %v3294 = vld [vmem:[%s3270 + $0xb8] sm:$0xff]
  %v3295 = vld [vmem:[%s3270 + $0xc0] sm:$0xff]
  %v3296 = vld [vmem:[%s3270 + $0xc8] sm:$0xff]
  %v3297 = vld [vmem:[%s3270 + $0xd0] sm:$0xff]
  %v3298 = vld [vmem:[%s3270 + $0xd8] sm:$0xff]
  %v3299 = vld [vmem:[%s3270 + $0xe0] sm:$0xff]
  %v3300 = vld [vmem:[%s3270 + $0xe8] sm:$0xff]
  %v3301 = vld [vmem:[%s3270 + $0xf0] sm:$0xff]
  %v3302 = vld [vmem:[%s3270 + $0xf8] sm:$0x3]
  %v3304 = vsel %vm2982, %v3302, 0
  %3306 = vmatprep.subr.mxu0 0.0
  %3307 = vmatpush1.msra.mxu0 %v3286
  %3308 = vmatprep.subr.mxu0 0.0
  %3309 = vmatpush1.msra.mxu0 %v3285
  %3310 = vmatprep.subr.mxu0 0.0
  %3311 = vmatpush1.msra.mxu0 %v3284
  %3312 = vmatprep.subr.mxu0 0.0
  %3313 = vmatpush1.msra.mxu0 %v3283
  %3314 = vmatprep.subr.mxu0 0.0
  %3315 = vmatpush1.msra.mxu0 %v3282
  %3316 = vmatprep.subr.mxu0 0.0
  %3317 = vmatpush1.msra.mxu0 %v3281
  %3318 = vmatprep.subr.mxu0 0.0
  %3319 = vmatpush1.msra.mxu0 %v3280
  %3320 = vmatprep.subr.mxu0 0.0
  %3321 = vmatpush1.msra.mxu0 %v3279
  %3322 = vmatprep.subr.mxu0 0.0
  %3323 = vmatpush1.msra.mxu0 %v3278
  %3324 = vmatprep.subr.mxu0 0.0
  %3325 = vmatpush1.msra.mxu0 %v3277
  %3326 = vmatprep.subr.mxu0 0.0
  %3327 = vmatpush1.msra.mxu0 %v3276
  %3328 = vmatprep.subr.mxu0 0.0
  %3329 = vmatpush1.msra.mxu0 %v3275
  %3330 = vmatprep.subr.mxu0 0.0
  %3331 = vmatpush1.msra.mxu0 %v3274
  %3332 = vmatprep.subr.mxu0 0.0
  %3333 = vmatpush1.msra.mxu0 %v3273
  %3334 = vmatprep.subr.mxu0 0.0
  %3335 = vmatpush1.msra.mxu0 %v3272
  %3336 = vmatprep.subr.mxu0 0.0
  %3337 = vmatpush1.msra.mxu0 %v3271
  %3338 = vmatprep.subr.mxu0 0.0
  %3339 = vmatpush2.msra.mxu0 %v3304
  %3340 = vmatprep.subr.mxu0 0.0
  %3341 = vmatpush2.msra.mxu0 %v3301
  %3342 = vmatprep.subr.mxu0 0.0
  %3343 = vmatpush2.msra.mxu0 %v3300
  %3344 = vmatprep.subr.mxu0 0.0
  %3345 = vmatpush2.msra.mxu0 %v3299
  %3346 = vmatprep.subr.mxu0 0.0
  %3347 = vmatpush2.msra.mxu0 %v3298
  %3348 = vmatprep.subr.mxu0 0.0
  %3349 = vmatpush2.msra.mxu0 %v3297
  %3350 = vmatprep.subr.mxu0 0.0
  %3351 = vmatpush2.msra.mxu0 %v3296
  %3352 = vmatprep.subr.mxu0 0.0
  %3353 = vmatpush2.msra.mxu0 %v3295
  %3354 = vmatprep.subr.mxu0 0.0
  %3355 = vmatpush2.msra.mxu0 %v3294
  %3356 = vmatprep.subr.mxu0 0.0
  %3357 = vmatpush2.msra.mxu0 %v3293
  %3358 = vmatprep.subr.mxu0 0.0
  %3359 = vmatpush2.msra.mxu0 %v3292
  %3360 = vmatprep.subr.mxu0 0.0
  %3361 = vmatpush2.msra.mxu0 %v3291
  %3362 = vmatprep.subr.mxu0 0.0
  %3363 = vmatpush2.msra.mxu0 %v3290
  %3364 = vmatprep.subr.mxu0 0.0
  %3365 = vmatpush2.msra.mxu0 %v3289
  %3366 = vmatprep.subr.mxu0 0.0
  %3367 = vmatpush2.msra.mxu0 %v3288
  %3368 = vmatprep.subr.mxu0 0.0
  %3369 = vmatpush2.msra.mxu0 %v3287
  %3370 = vmatprep.mubr.f32.mxu0 %v2980
  %3371 = vmatmul.mubr.f32.gmra.mxu0 %v2944
  %v3372 = vpop.f32.mrf.mxu0
  %v3373 = vadd.f32 0.0, %v3372
  %v3374 = vpop.f32.mrf.mxu0
  %3375 = vdwg.mxu0
  %v3376 = vmax.f32 %v3269, %v3373
  %v3377 = vld [vmem:[%s7] sm:$0xff]
  %v3378 = vld [vmem:[%s7 + $0x8] sm:$0xff]
  %v3379 = vld [vmem:[%s7 + $0x10] sm:$0xff]
  %v3380 = vld [vmem:[%s7 + $0x18] sm:$0xff]
  %v3381 = vld [vmem:[%s7 + $0x20] sm:$0xff]
  %v3382 = vld [vmem:[%s8] sm:$0x1]
  %v3384 = vlaneseq
  %v3385 = vshrl.u32 %v3384, 7
  %v3386 = vsub.s32 0, %v3385
  %v3387 = vrot.slane %v3382, %v3386
  %vm3389 = vcmask 326656
  %v3391 = vsel %vm3389, %v3376, 0
  %3393 = vmatprep.subr.mxu0 0.0
  %3394 = vmatpush1.msra.mxu0 0.0
  %3395 = vmatprep.subr.mxu0 0.0
  %3396 = vmatpush1.msra.mxu0 0.0
  %3397 = vmatprep.subr.mxu0 0.0
  %3398 = vmatpush1.msra.mxu0 0.0
  %3399 = vmatprep.subr.mxu0 0.0
  %3400 = vmatpush1.msra.mxu0 0.0
  %3401 = vmatprep.subr.mxu0 0.0
  %3402 = vmatpush1.msra.mxu0 0.0
  %3403 = vmatprep.subr.mxu0 0.0
  %3404 = vmatpush1.msra.mxu0 0.0
  %3405 = vmatprep.subr.mxu0 0.0
  %3406 = vmatpush1.msra.mxu0 0.0
  %3407 = vmatprep.subr.mxu0 0.0
  %3408 = vmatpush1.msra.mxu0 0.0
  %3409 = vmatprep.subr.mxu0 0.0
  %3410 = vmatpush1.msra.mxu0 0.0
  %3411 = vmatprep.subr.mxu0 0.0
  %3412 = vmatpush1.msra.mxu0 0.0
  %3413 = vmatprep.subr.mxu0 0.0
  %3414 = vmatpush1.msra.mxu0 0.0
  %3415 = vmatprep.subr.mxu0 0.0
  %3416 = vmatpush1.msra.mxu0 %v3381
  %3417 = vmatprep.subr.mxu0 0.0
  %3418 = vmatpush1.msra.mxu0 %v3380
  %3419 = vmatprep.subr.mxu0 0.0
  %3420 = vmatpush1.msra.mxu0 %v3379
  %3421 = vmatprep.subr.mxu0 0.0
  %3422 = vmatpush1.msra.mxu0 %v3378
  %3423 = vmatprep.subr.mxu0 0.0
  %3424 = vmatpush1.msra.mxu0 %v3377
  %3425 = vmatprep.subr.mxu0 0.0
  %3426 = vmatpush2.msra.mxu0 0.0
  %3427 = vmatprep.subr.mxu0 0.0
  %3428 = vmatpush2.msra.mxu0 0.0
  %3429 = vmatprep.subr.mxu0 0.0
  %3430 = vmatpush2.msra.mxu0 0.0
  %3431 = vmatprep.subr.mxu0 0.0
  %3432 = vmatpush2.msra.mxu0 0.0
  %3433 = vmatprep.subr.mxu0 0.0
  %3434 = vmatpush2.msra.mxu0 0.0
  %3435 = vmatprep.subr.mxu0 0.0
  %3436 = vmatpush2.msra.mxu0 0.0
  %3437 = vmatprep.subr.mxu0 0.0
  %3438 = vmatpush2.msra.mxu0 0.0
  %3439 = vmatprep.subr.mxu0 0.0
  %3440 = vmatpush2.msra.mxu0 0.0
  %3441 = vmatprep.subr.mxu0 0.0
  %3442 = vmatpush2.msra.mxu0 0.0
  %3443 = vmatprep.subr.mxu0 0.0
  %3444 = vmatpush2.msra.mxu0 0.0
  %3445 = vmatprep.subr.mxu0 0.0
  %3446 = vmatpush2.msra.mxu0 0.0
  %3447 = vmatprep.subr.mxu0 0.0
  %3448 = vmatpush2.msra.mxu0 0.0
  %3449 = vmatprep.subr.mxu0 0.0
  %3450 = vmatpush2.msra.mxu0 0.0
  %3451 = vmatprep.subr.mxu0 0.0
  %3452 = vmatpush2.msra.mxu0 0.0
  %3453 = vmatprep.subr.mxu0 0.0
  %3454 = vmatpush2.msra.mxu0 0.0
  %3455 = vmatprep.subr.mxu0 0.0
  %3456 = vmatpush2.msra.mxu0 0.0
  %3457 = vmatprep.mubr.f32.mxu0 0.0
  %3458 = vmatmul.mubr.f32.gmra.mxu0 %v3391
  %v3459 = vpop.f32.mrf.mxu0
  %v3460 = vadd.f32 %v3387, %v3459
  %v3461 = vpop.f32.mrf.mxu0
  %3462 = vdwg.mxu0
  %v3463 = vmax.f32 %v3460, 0.0
  %v3464 = vld [vmem:[%s9] sm:$0xff]
  %v3465 = vld [vmem:[%s9 + $0x8] sm:$0xff]
  %v3466 = vld [vmem:[%s9 + $0x10] sm:$0xf]
  %v3467 = vld [vmem:[%s10] sm:$0x1]
  %v3469 = vlaneseq
  %v3470 = vshrl.u32 %v3469, 7
  %v3471 = vsub.s32 0, %v3470
  %v3472 = vrot.slane %v3467, %v3471
  %vm3474 = vcmask 162816
  %v3476 = vsel %vm3474, %v3463, 0
  %v3479 = vsel %vm880, %v3466, 0
  %3481 = vmatprep.subr.mxu0 0.0
  %3482 = vmatpush1.msra.mxu0 0.0
  %3483 = vmatprep.subr.mxu0 0.0
  %3484 = vmatpush1.msra.mxu0 0.0
  %3485 = vmatprep.subr.mxu0 0.0
  %3486 = vmatpush1.msra.mxu0 0.0
  %3487 = vmatprep.subr.mxu0 0.0
  %3488 = vmatpush1.msra.mxu0 0.0
  %3489 = vmatprep.subr.mxu0 0.0
  %3490 = vmatpush1.msra.mxu0 0.0
  %3491 = vmatprep.subr.mxu0 0.0
  %3492 = vmatpush1.msra.mxu0 0.0
  %3493 = vmatprep.subr.mxu0 0.0
  %3494 = vmatpush1.msra.mxu0 0.0
  %3495 = vmatprep.subr.mxu0 0.0
  %3496 = vmatpush1.msra.mxu0 0.0
  %3497 = vmatprep.subr.mxu0 0.0
  %3498 = vmatpush1.msra.mxu0 0.0
  %3499 = vmatprep.subr.mxu0 0.0
  %3500 = vmatpush1.msra.mxu0 0.0
  %3501 = vmatprep.subr.mxu0 0.0
  %3502 = vmatpush1.msra.mxu0 0.0
  %3503 = vmatprep.subr.mxu0 0.0
  %3504 = vmatpush1.msra.mxu0 0.0
  %3505 = vmatprep.subr.mxu0 0.0
  %3506 = vmatpush1.msra.mxu0 0.0
  %3507 = vmatprep.subr.mxu0 0.0
  %3508 = vmatpush1.msra.mxu0 %v3479
  %3509 = vmatprep.subr.mxu0 0.0
  %3510 = vmatpush1.msra.mxu0 %v3465
  %3511 = vmatprep.subr.mxu0 0.0
  %3512 = vmatpush1.msra.mxu0 %v3464
  %3513 = vmatprep.subr.mxu0 0.0
  %3514 = vmatpush2.msra.mxu0 0.0
  %3515 = vmatprep.subr.mxu0 0.0
  %3516 = vmatpush2.msra.mxu0 0.0
  %3517 = vmatprep.subr.mxu0 0.0
  %3518 = vmatpush2.msra.mxu0 0.0
  %3519 = vmatprep.subr.mxu0 0.0
  %3520 = vmatpush2.msra.mxu0 0.0
  %3521 = vmatprep.subr.mxu0 0.0
  %3522 = vmatpush2.msra.mxu0 0.0
  %3523 = vmatprep.subr.mxu0 0.0
  %3524 = vmatpush2.msra.mxu0 0.0
  %3525 = vmatprep.subr.mxu0 0.0
  %3526 = vmatpush2.msra.mxu0 0.0
  %3527 = vmatprep.subr.mxu0 0.0
  %3528 = vmatpush2.msra.mxu0 0.0
  %3529 = vmatprep.subr.mxu0 0.0
  %3530 = vmatpush2.msra.mxu0 0.0
  %3531 = vmatprep.subr.mxu0 0.0
  %3532 = vmatpush2.msra.mxu0 0.0
  %3533 = vmatprep.subr.mxu0 0.0
  %3534 = vmatpush2.msra.mxu0 0.0
  %3535 = vmatprep.subr.mxu0 0.0
  %3536 = vmatpush2.msra.mxu0 0.0
  %3537 = vmatprep.subr.mxu0 0.0
  %3538 = vmatpush2.msra.mxu0 0.0
  %3539 = vmatprep.subr.mxu0 0.0
  %3540 = vmatpush2.msra.mxu0 0.0
  %3541 = vmatprep.subr.mxu0 0.0
  %3542 = vmatpush2.msra.mxu0 0.0
  %3543 = vmatprep.subr.mxu0 0.0
  %3544 = vmatpush2.msra.mxu0 0.0
  %3545 = vmatprep.mubr.f32.mxu0 0.0
  %3546 = vmatmul.mubr.f32.gmra.mxu0 %v3476
  %v3547 = vpop.f32.mrf.mxu0
  %v3548 = vadd.f32 %v3472, %v3547
  %v3549 = vpop.f32.mrf.mxu0
  %3550 = vdwg.mxu0
  %vm3551 = vcmask 64512
  %v3552 = vsel %vm3551, %v3548, -inf
  %3553 = vmax.xlane.f32.xlu0 %v3552
  %v3554 = vpop.xlane.xlu0 %3553
  %v3555 = vsub.f32 %v3548, %v3554
  %v3556 = vmul.f32 %v3555, 1.442695
  %v3557 = vpow.pop %v3556
  %v3558 = vsel %vm3551, %v3557, 0.0
  %3559 = vadd.xlane.f32.xlu0 %v3558
  %v3560 = vpop.xlane.xlu0 %3559
  %v3561 = vrcp.pop %v3560
  %v3562 = vmul.f32 %v3557, %v3561
  %3563 = vst.msk [vmem:[%s11] sm:$0xff] %vm3551, %v3562
  // Predicated region
  $region46: #{net_forward.1} parent=0 // pred_check
    _
  $region47: #{net_forward.1} parent=0 // pred_check_branch
    %3565 = sbr.rel (0) target = $region49
  $region48: #{net_forward.1} parent=0 // pred_region
    _
  $region49: #{net_forward.1} parent=0 // pred_fallthru
    _
  // Predicated region
  $region50: #{net_forward.1} parent=0 // pred_check
    _
  $region51: #{net_forward.1} parent=0 // pred_check_branch
    %3567 = sbr.rel (0) target = $region53
  $region52: #{net_forward.1} parent=0 // pred_region
    _
  $region53: #{net_forward.1} parent=0 // pred_fallthru
    _

</llo_original>
